<compile_context>
chip_gen: v7x
topology: tpu7x:2x2x1
jax: 0.10.0
libtpu: 0.0.40
codegen_flags: <defaults>
</compile_context>

<pallas_src>
import functools

import jax
import jax.numpy as jnp
from jax import lax
from jax.experimental import pallas as pl
from jax.experimental.pallas import tpu as pltpu


# --------------------------------------------------------------------------
# Fused kernel: cv1 (1x1 conv + BN + SiLU) -> cv2 (dw KxK + BN + SiLU) -> cat
# --------------------------------------------------------------------------
def gsconv_fused_kernel(x_ref, w1_ref, s1_ref, b1_ref, w2_ref, s2_ref, b2_ref,
                        o_ref, xp_ref, *, K):
    # x_ref : (1, H, W, C1)   input image tile (NHWC)
    # w1_ref: (C1, C)         1x1 conv weight in matmul layout
    # s1/b1 : (1, C)          folded BatchNorm scale / bias for cv1
    # w2_ref: (K*K, C)        depthwise conv taps
    # s2/b2 : (1, C)          folded BatchNorm scale / bias for cv2
    # o_ref : (1, H, W, 2C)   fused output: [..., :C] = y1, [..., C:] = y2
    # xp_ref: (1, H+K-1, W+K-1, C) f32 VMEM scratch (zero-padded y1 halo)
    _, H, W, C1 = x_ref.shape
    C = w1_ref.shape[1]
    pad = K // 2

    # ---- cv1: 1x1 conv as a channel matmul on the MXU + BN + SiLU ---------
    # (1, H, W, C1) -> (H*W, C1): lane dim unchanged, leading dims collapse.
    x2d = x_ref[...].reshape(H * W, C1)
    acc1 = jnp.dot(x2d, w1_ref[...], preferred_element_type=jnp.float32)
    y1 = acc1 * s1_ref[...] + b1_ref[...]
    y1 = y1 * jax.nn.sigmoid(y1)                       # SiLU (exp on the EUP)
    y1_4d = y1.reshape(1, H, W, C)

    # First half of the fused output is cv1's activation itself (y1 never
    # goes through HBM on its own).
    o_ref[:, :, :, :C] = y1_4d.astype(o_ref.dtype)

    # ---- cv2: depthwise KxK conv + BN + SiLU -------------------------------
    # Build the zero-padded tile entirely in VMEM.
    xp_ref[...] = jnp.zeros_like(xp_ref)
    xp_ref[:, pad:pad + H, pad:pad + W, :] = y1_4d

    w_taps = w2_ref[...]                               # (K*K, C)
    acc2 = jnp.zeros((1, H, W, C), jnp.float32)
    for dy in range(K):                                # static 25-tap unroll
        for dx in range(K):
            tap = xp_ref[:, dy:dy + H, dx:dx + W, :]
            acc2 = acc2 + tap * w_taps[dy * K + dx, :]

    y2 = acc2 * s2_ref[0, :] + b2_ref[0, :]
    y2 = y2 * jax.nn.sigmoid(y2)
    o_ref[:, :, :, C:] = y2.astype(o_ref.dtype)


def gsconv_fused(x_nhwc, w1, s1, b1, w2_taps, s2, b2, *, K=5, out_dtype=None):
    B, H, W, C1 = x_nhwc.shape
    C = w1.shape[1]
    pad = K // 2
    out_dtype = out_dtype if out_dtype is not None else x_nhwc.dtype
    kern = functools.partial(gsconv_fused_kernel, K=K)

    # TODO(synk): add H-row spatial tiling with a (K-1)-row halo (recomputing
    # the cheap 1x1-conv halo rows) for very large feature maps so one image's
    # working set stays within v7x's 64 MiB VMEM.
    return pl.pallas_call(
        kern,
        out_shape=jax.ShapeDtypeStruct((B, H, W, 2 * C), out_dtype),
        grid=(B,),
        in_specs=[
            pl.BlockSpec((1, H, W, C1), lambda b: (b, 0, 0, 0)),
            pl.BlockSpec((C1, C), lambda b: (0, 0)),
            pl.BlockSpec((1, C), lambda b: (0, 0)),
            pl.BlockSpec((1, C), lambda b: (0, 0)),
            pl.BlockSpec((K * K, C), lambda b: (0, 0)),
            pl.BlockSpec((1, C), lambda b: (0, 0)),
            pl.BlockSpec((1, C), lambda b: (0, 0)),
        ],
        out_specs=pl.BlockSpec((1, H, W, 2 * C), lambda b: (b, 0, 0, 0)),
        scratch_shapes=[pltpu.VMEM((1, H + 2 * pad, W + 2 * pad, C), jnp.float32)],
        compiler_params=pltpu.CompilerParams(
            dimension_semantics=("parallel",),
            vmem_limit_bytes=64 * 1024 * 1024,
        ),
    )(x_nhwc, w1, s1.reshape(1, C), b1.reshape(1, C),
      w2_taps, s2.reshape(1, C), b2.reshape(1, C))


# --------------------------------------------------------------------------
# GSConv forward (k=1, s=1, g=1, d=1, act=SiLU — the defaults used in LFCA)
# --------------------------------------------------------------------------
def gsconv_forward(x_nchw, params):
    B, C1, H, W = x_nchw.shape
    c_ = params["w1"].shape[1]
    out_dtype = x_nchw.dtype

    # single NCHW -> NHWC transpose; everything downstream stays NHWC
    x_nhwc = jnp.transpose(x_nchw, (0, 2, 3, 1))

    x2_nhwc = gsconv_fused(
        x_nhwc, params["w1"], params["s1"], params["b1"],
        params["w2"], params["s2"], params["b2"],
        K=5, out_dtype=out_dtype)

    # channel shuffle (x2[:,0::2] ++ x2[:,1::2]) folded into the single
    # NHWC -> NCHW output transpose
    perm = list(range(0, 2 * c_, 2)) + list(range(1, 2 * c_, 2))
    return jnp.transpose(x2_nhwc[..., perm], (0, 3, 1, 2))


# --------------------------------------------------------------------------
# Pure-JAX reference (mirrors the PyTorch semantics, for correctness check)
# --------------------------------------------------------------------------
def ref_forward(x, p):
    c_ = p["w1_oihw"].shape[0]
    y1 = lax.conv_general_dilated(
        x, p["w1_oihw"], (1, 1), "VALID",
        dimension_numbers=("NCHW", "OIHW", "NCHW"))
    y1 = y1 * p["s1"][None, :, None, None] + p["b1"][None, :, None, None]
    y1 = y1 * jax.nn.sigmoid(y1)
    y2 = lax.conv_general_dilated(
        y1, p["w2_oihw"], (1, 1), ((2, 2), (2, 2)),
        feature_group_count=c_,
        dimension_numbers=("NCHW", "OIHW", "NCHW"))
    y2 = y2 * p["s2"][None, :, None, None] + p["b2"][None, :, None, None]
    y2 = y2 * jax.nn.sigmoid(y2)
    x2 = jnp.concatenate([y1, y2], axis=1)
    b, n, h, w = x2.shape
    y = x2.reshape(b * n // 2, 2, h * w).transpose(1, 0, 2).reshape(2, b, n // 2, h, w)
    return jnp.concatenate([y[0], y[1]], axis=1)


if __name__ == "__main__":
    B, C1, H, W = 2, 4, 16, 16
    C2 = 8
    c_ = C2 // 2
    eps = 1e-5  # PyTorch BatchNorm2d default

    key = jax.random.PRNGKey(0)
    ks = jax.random.split(key, 11)
    x = jax.random.normal(ks[0], (B, C1, H, W), jnp.float32)

    # cv1 params: conv weight (c_, C1, 1, 1), BN(gamma, beta, mean, var)
    w1_oihw = 0.5 * jax.random.normal(ks[1], (c_, C1, 1, 1), jnp.float32)
    g1 = 1.0 + 0.1 * jax.random.normal(ks[2], (c_,), jnp.float32)
    be1 = 0.1 * jax.random.normal(ks[3], (c_,), jnp.float32)
    m1 = 0.1 * jax.random.normal(ks[4], (c_,), jnp.float32)
    v1 = jnp.abs(jax.random.normal(ks[5], (c_,), jnp.float32)) + 0.5

    # cv2 params: depthwise conv weight (c_, 1, 5, 5), BN(gamma, beta, mean, var)
    w2_oihw = 0.2 * jax.random.normal(ks[6], (c_, 1, 5, 5), jnp.float32)
    g2 = 1.0 + 0.1 * jax.random.normal(ks[7], (c_,), jnp.float32)
    be2 = 0.1 * jax.random.normal(ks[8], (c_,), jnp.float32)
    m2 = 0.1 * jax.random.normal(ks[9], (c_,), jnp.float32)
    v2 = jnp.abs(jax.random.normal(ks[10], (c_,), jnp.float32)) + 0.5

    # Fold BN (eval semantics) into per-channel scale/bias.
    s1 = g1 / jnp.sqrt(v1 + eps)
    b1 = be1 - m1 * s1
    s2 = g2 / jnp.sqrt(v2 + eps)
    b2 = be2 - m2 * s2

    params = dict(
        w1=jnp.transpose(w1_oihw[:, :, 0, 0], (1, 0)),       # (C1, c_) for matmul
        w2=jnp.transpose(w2_oihw.reshape(c_, 25), (1, 0)),    # (25, c_) taps
        w1_oihw=w1_oihw, w2_oihw=w2_oihw,
        s1=s1, b1=b1, s2=s2, b2=b2,
    )

    out = jax.block_until_ready(gsconv_forward(x, params))
    assert out.shape == (B, C2, H, W), out.shape
    assert out.dtype == x.dtype, out.dtype

    ref = ref_forward(x, params)
    err = float(jnp.max(jnp.abs(out - ref)))
    assert err < 1e-4, f"mismatch vs reference: {err}"

    print("KERNEL_OK")
</pallas_src>

<mosaic_0001>
module attributes {stable_mosaic.version = 11 : i64} {
  func.func @gsconv_fused_kernel(%arg0: i32, %arg1: memref<1x16x16x4xf32, #tpu.memory_space<vmem>>, %arg2: memref<4x4xf32, #tpu.memory_space<vmem>>, %arg3: memref<1x4xf32, #tpu.memory_space<vmem>>, %arg4: memref<1x4xf32, #tpu.memory_space<vmem>>, %arg5: memref<25x4xf32, #tpu.memory_space<vmem>>, %arg6: memref<1x4xf32, #tpu.memory_space<vmem>>, %arg7: memref<1x4xf32, #tpu.memory_space<vmem>>, %arg8: memref<1x16x16x8xf32, #tpu.memory_space<vmem>>, %arg9: memref<1x20x20x4xf32, #tpu.memory_space<vmem>>) attributes {dimension_semantics = [#tpu.dimension_semantics<parallel>], iteration_bounds = array<i64: 2>, scalar_prefetch = 0 : i64, scratch_operands = 1 : i64, tpu.core_type = #tpu.core_type<tc>, window_params = [{transform_indices = @transform_0, window_bounds = array<i64: 1, 16, 16, 4>}, {pipeline_mode = #tpu.pipeline_mode<synchronous>, transform_indices = @transform_1, window_bounds = array<i64: 4, 4>}, {pipeline_mode = #tpu.pipeline_mode<synchronous>, transform_indices = @transform_2, window_bounds = array<i64: 1, 4>}, {pipeline_mode = #tpu.pipeline_mode<synchronous>, transform_indices = @transform_3, window_bounds = array<i64: 1, 4>}, {pipeline_mode = #tpu.pipeline_mode<synchronous>, transform_indices = @transform_4, window_bounds = array<i64: 25, 4>}, {pipeline_mode = #tpu.pipeline_mode<synchronous>, transform_indices = @transform_5, window_bounds = array<i64: 1, 4>}, {pipeline_mode = #tpu.pipeline_mode<synchronous>, transform_indices = @transform_6, window_bounds = array<i64: 1, 4>}, {transform_indices = @transform_7, window_bounds = array<i64: 1, 16, 16, 8>}]} {
    %c0 = arith.constant 0 : index
    %c0_0 = arith.constant 0 : index
    %c0_1 = arith.constant 0 : index
    %c0_2 = arith.constant 0 : index
    %0 = vector.load %arg1[%c0, %c0_0, %c0_1, %c0_2] : memref<1x16x16x4xf32, #tpu.memory_space<vmem>>, vector<1x16x16x4xf32>
    %1 = vector.shape_cast %0 : vector<1x16x16x4xf32> to vector<256x4xf32>
    %c0_3 = arith.constant 0 : index
    %c0_4 = arith.constant 0 : index
    %2 = vector.load %arg2[%c0_3, %c0_4] : memref<4x4xf32, #tpu.memory_space<vmem>>, vector<4x4xf32>
    %cst = arith.constant dense<0.000000e+00> : vector<256x4xf32>
    %3 = tpu.matmul %1, %2, %cst {dimension_numbers = #tpu.dot_dimension_numbers<[1], [0], [0], [1], [0, 0, 1, 1], [], []>} : vector<256x4xf32>, vector<4x4xf32>, vector<256x4xf32> -> vector<256x4xf32>
    %c0_5 = arith.constant 0 : index
    %c0_6 = arith.constant 0 : index
    %4 = vector.load %arg3[%c0_5, %c0_6] : memref<1x4xf32, #tpu.memory_space<vmem>>, vector<1x4xf32>
    %5 = vector.broadcast %4 : vector<1x4xf32> to vector<256x4xf32>
    %6 = arith.mulf %3, %5 : vector<256x4xf32>
    %c0_7 = arith.constant 0 : index
    %c0_8 = arith.constant 0 : index
    %7 = vector.load %arg4[%c0_7, %c0_8] : memref<1x4xf32, #tpu.memory_space<vmem>>, vector<1x4xf32>
    %8 = vector.broadcast %7 : vector<1x4xf32> to vector<256x4xf32>
    %9 = arith.addf %6, %8 : vector<256x4xf32>
    %10 = arith.negf %9 : vector<256x4xf32>
    %11 = math.exp %10 : vector<256x4xf32>
    %cst_9 = arith.constant 1.000000e+00 : f32
    %12 = vector.broadcast %cst_9 : f32 to vector<256x4xf32>
    %13 = arith.addf %12, %11 : vector<256x4xf32>
    %14 = arith.divf %12, %13 : vector<256x4xf32>
    %15 = arith.mulf %9, %14 : vector<256x4xf32>
    %16 = vector.shape_cast %15 : vector<256x4xf32> to vector<1x16x16x4xf32>
    %c0_10 = arith.constant 0 : index
    %c0_11 = arith.constant 0 : index
    %c0_12 = arith.constant 0 : index
    %c0_13 = arith.constant 0 : index
    %17 = vector.load %arg8[%c0_10, %c0_11, %c0_12, %c0_13] : memref<1x16x16x8xf32, #tpu.memory_space<vmem>>, vector<1x16x16x4xf32>
    tpu.vector_store %arg8[%c0_10, %c0_11, %c0_12, %c0_13], %16 {strides = array<i32>} : memref<1x16x16x8xf32, #tpu.memory_space<vmem>>, vector<1x16x16x4xf32>,
    %cst_14 = arith.constant 0.000000e+00 : f32
    %18 = vector.broadcast %cst_14 : f32 to vector<1x20x20x4xf32>
    %c0_15 = arith.constant 0 : index
    %c0_16 = arith.constant 0 : index
    %c0_17 = arith.constant 0 : index
    %c0_18 = arith.constant 0 : index
    %19 = vector.load %arg9[%c0_15, %c0_16, %c0_17, %c0_18] : memref<1x20x20x4xf32, #tpu.memory_space<vmem>>, vector<1x20x20x4xf32>
    tpu.vector_store %arg9[%c0_15, %c0_16, %c0_17, %c0_18], %18 {strides = array<i32>} : memref<1x20x20x4xf32, #tpu.memory_space<vmem>>, vector<1x20x20x4xf32>,
    %c0_19 = arith.constant 0 : index
    %c2 = arith.constant 2 : index
    %c2_20 = arith.constant 2 : index
    %c0_21 = arith.constant 0 : index
    %20 = vector.load %arg9[%c0_19, %c2, %c2_20, %c0_21] : memref<1x20x20x4xf32, #tpu.memory_space<vmem>>, vector<1x16x16x4xf32>
    tpu.vector_store %arg9[%c0_19, %c2, %c2_20, %c0_21], %16 {strides = array<i32>} : memref<1x20x20x4xf32, #tpu.memory_space<vmem>>, vector<1x16x16x4xf32>,
    %c0_22 = arith.constant 0 : index
    %c0_23 = arith.constant 0 : index
    %21 = vector.load %arg5[%c0_22, %c0_23] : memref<25x4xf32, #tpu.memory_space<vmem>>, vector<25x4xf32>
    %cst_24 = arith.constant 0.000000e+00 : f32
    %22 = vector.broadcast %cst_24 : f32 to vector<1x16x16x4xf32>
    %c0_25 = arith.constant 0 : index
    %c0_26 = arith.constant 0 : index
    %c0_27 = arith.constant 0 : index
    %c0_28 = arith.constant 0 : index
    %23 = vector.load %arg9[%c0_25, %c0_26, %c0_27, %c0_28] : memref<1x20x20x4xf32, #tpu.memory_space<vmem>>, vector<1x16x16x4xf32>
    %24 = vector.extract_strided_slice %21 {offsets = [0, 0], sizes = [1, 4], strides = [1, 1]} : vector<25x4xf32> to vector<1x4xf32>
    %25 = vector.shape_cast %24 : vector<1x4xf32> to vector<4xf32>
    %26 = vector.shape_cast %25 : vector<4xf32> to vector<1x1x1x4xf32>
    %27 = vector.broadcast %26 : vector<1x1x1x4xf32> to vector<1x16x16x4xf32>
    %28 = arith.mulf %23, %27 : vector<1x16x16x4xf32>
    %29 = arith.addf %22, %28 : vector<1x16x16x4xf32>
    %c0_29 = arith.constant 0 : index
    %c0_30 = arith.constant 0 : index
    %c1 = arith.constant 1 : index
    %c0_31 = arith.constant 0 : index
    %30 = vector.load %arg9[%c0_29, %c0_30, %c1, %c0_31] : memref<1x20x20x4xf32, #tpu.memory_space<vmem>>, vector<1x16x16x4xf32>
    %31 = vector.extract_strided_slice %21 {offsets = [1, 0], sizes = [1, 4], strides = [1, 1]} : vector<25x4xf32> to vector<1x4xf32>
    %32 = vector.shape_cast %31 : vector<1x4xf32> to vector<4xf32>
    %33 = vector.shape_cast %32 : vector<4xf32> to vector<1x1x1x4xf32>
    %34 = vector.broadcast %33 : vector<1x1x1x4xf32> to vector<1x16x16x4xf32>
    %35 = arith.mulf %30, %34 : vector<1x16x16x4xf32>
    %36 = arith.addf %29, %35 : vector<1x16x16x4xf32>
    %c0_32 = arith.constant 0 : index
    %c0_33 = arith.constant 0 : index
    %c2_34 = arith.constant 2 : index
    %c0_35 = arith.constant 0 : index
    %37 = vector.load %arg9[%c0_32, %c0_33, %c2_34, %c0_35] : memref<1x20x20x4xf32, #tpu.memory_space<vmem>>, vector<1x16x16x4xf32>
    %38 = vector.extract_strided_slice %21 {offsets = [2, 0], sizes = [1, 4], strides = [1, 1]} : vector<25x4xf32> to vector<1x4xf32>
    %39 = vector.shape_cast %38 : vector<1x4xf32> to vector<4xf32>
    %40 = vector.shape_cast %39 : vector<4xf32> to vector<1x1x1x4xf32>
    %41 = vector.broadcast %40 : vector<1x1x1x4xf32> to vector<1x16x16x4xf32>
    %42 = arith.mulf %37, %41 : vector<1x16x16x4xf32>
    %43 = arith.addf %36, %42 : vector<1x16x16x4xf32>
    %c0_36 = arith.constant 0 : index
    %c0_37 = arith.constant 0 : index
    %c3 = arith.constant 3 : index
    %c0_38 = arith.constant 0 : index
    %44 = vector.load %arg9[%c0_36, %c0_37, %c3, %c0_38] : memref<1x20x20x4xf32, #tpu.memory_space<vmem>>, vector<1x16x16x4xf32>
    %45 = vector.extract_strided_slice %21 {offsets = [3, 0], sizes = [1, 4], strides = [1, 1]} : vector<25x4xf32> to vector<1x4xf32>
    %46 = vector.shape_cast %45 : vector<1x4xf32> to vector<4xf32>
    %47 = vector.shape_cast %46 : vector<4xf32> to vector<1x1x1x4xf32>
    %48 = vector.broadcast %47 : vector<1x1x1x4xf32> to vector<1x16x16x4xf32>
    %49 = arith.mulf %44, %48 : vector<1x16x16x4xf32>
    %50 = arith.addf %43, %49 : vector<1x16x16x4xf32>
    %c0_39 = arith.constant 0 : index
    %c0_40 = arith.constant 0 : index
    %c4 = arith.constant 4 : index
    %c0_41 = arith.constant 0 : index
    %51 = vector.load %arg9[%c0_39, %c0_40, %c4, %c0_41] : memref<1x20x20x4xf32, #tpu.memory_space<vmem>>, vector<1x16x16x4xf32>
    %52 = vector.extract_strided_slice %21 {offsets = [4, 0], sizes = [1, 4], strides = [1, 1]} : vector<25x4xf32> to vector<1x4xf32>
    %53 = vector.shape_cast %52 : vector<1x4xf32> to vector<4xf32>
    %54 = vector.shape_cast %53 : vector<4xf32> to vector<1x1x1x4xf32>
    %55 = vector.broadcast %54 : vector<1x1x1x4xf32> to vector<1x16x16x4xf32>
    %56 = arith.mulf %51, %55 : vector<1x16x16x4xf32>
    %57 = arith.addf %50, %56 : vector<1x16x16x4xf32>
    %c0_42 = arith.constant 0 : index
    %c1_43 = arith.constant 1 : index
    %c0_44 = arith.constant 0 : index
    %c0_45 = arith.constant 0 : index
    %58 = vector.load %arg9[%c0_42, %c1_43, %c0_44, %c0_45] : memref<1x20x20x4xf32, #tpu.memory_space<vmem>>, vector<1x16x16x4xf32>
    %59 = vector.extract_strided_slice %21 {offsets = [5, 0], sizes = [1, 4], strides = [1, 1]} : vector<25x4xf32> to vector<1x4xf32>
    %60 = vector.shape_cast %59 : vector<1x4xf32> to vector<4xf32>
    %61 = vector.shape_cast %60 : vector<4xf32> to vector<1x1x1x4xf32>
    %62 = vector.broadcast %61 : vector<1x1x1x4xf32> to vector<1x16x16x4xf32>
    %63 = arith.mulf %58, %62 : vector<1x16x16x4xf32>
    %64 = arith.addf %57, %63 : vector<1x16x16x4xf32>
    %c0_46 = arith.constant 0 : index
    %c1_47 = arith.constant 1 : index
    %c1_48 = arith.constant 1 : index
    %c0_49 = arith.constant 0 : index
    %65 = vector.load %arg9[%c0_46, %c1_47, %c1_48, %c0_49] : memref<1x20x20x4xf32, #tpu.memory_space<vmem>>, vector<1x16x16x4xf32>
    %66 = vector.extract_strided_slice %21 {offsets = [6, 0], sizes = [1, 4], strides = [1, 1]} : vector<25x4xf32> to vector<1x4xf32>
    %67 = vector.shape_cast %66 : vector<1x4xf32> to vector<4xf32>
    %68 = vector.shape_cast %67 : vector<4xf32> to vector<1x1x1x4xf32>
    %69 = vector.broadcast %68 : vector<1x1x1x4xf32> to vector<1x16x16x4xf32>
    %70 = arith.mulf %65, %69 : vector<1x16x16x4xf32>
    %71 = arith.addf %64, %70 : vector<1x16x16x4xf32>
    %c0_50 = arith.constant 0 : index
    %c1_51 = arith.constant 1 : index
    %c2_52 = arith.constant 2 : index
    %c0_53 = arith.constant 0 : index
    %72 = vector.load %arg9[%c0_50, %c1_51, %c2_52, %c0_53] : memref<1x20x20x4xf32, #tpu.memory_space<vmem>>, vector<1x16x16x4xf32>
    %73 = vector.extract_strided_slice %21 {offsets = [7, 0], sizes = [1, 4], strides = [1, 1]} : vector<25x4xf32> to vector<1x4xf32>
    %74 = vector.shape_cast %73 : vector<1x4xf32> to vector<4xf32>
    %75 = vector.shape_cast %74 : vector<4xf32> to vector<1x1x1x4xf32>
    %76 = vector.broadcast %75 : vector<1x1x1x4xf32> to vector<1x16x16x4xf32>
    %77 = arith.mulf %72, %76 : vector<1x16x16x4xf32>
    %78 = arith.addf %71, %77 : vector<1x16x16x4xf32>
    %c0_54 = arith.constant 0 : index
    %c1_55 = arith.constant 1 : index
    %c3_56 = arith.constant 3 : index
    %c0_57 = arith.constant 0 : index
    %79 = vector.load %arg9[%c0_54, %c1_55, %c3_56, %c0_57] : memref<1x20x20x4xf32, #tpu.memory_space<vmem>>, vector<1x16x16x4xf32>
    %80 = vector.extract_strided_slice %21 {offsets = [8, 0], sizes = [1, 4], strides = [1, 1]} : vector<25x4xf32> to vector<1x4xf32>
    %81 = vector.shape_cast %80 : vector<1x4xf32> to vector<4xf32>
    %82 = vector.shape_cast %81 : vector<4xf32> to vector<1x1x1x4xf32>
    %83 = vector.broadcast %82 : vector<1x1x1x4xf32> to vector<1x16x16x4xf32>
    %84 = arith.mulf %79, %83 : vector<1x16x16x4xf32>
    %85 = arith.addf %78, %84 : vector<1x16x16x4xf32>
    %c0_58 = arith.constant 0 : index
    %c1_59 = arith.constant 1 : index
    %c4_60 = arith.constant 4 : index
    %c0_61 = arith.constant 0 : index
    %86 = vector.load %arg9[%c0_58, %c1_59, %c4_60, %c0_61] : memref<1x20x20x4xf32, #tpu.memory_space<vmem>>, vector<1x16x16x4xf32>
    %87 = vector.extract_strided_slice %21 {offsets = [9, 0], sizes = [1, 4], strides = [1, 1]} : vector<25x4xf32> to vector<1x4xf32>
    %88 = vector.shape_cast %87 : vector<1x4xf32> to vector<4xf32>
    %89 = vector.shape_cast %88 : vector<4xf32> to vector<1x1x1x4xf32>
    %90 = vector.broadcast %89 : vector<1x1x1x4xf32> to vector<1x16x16x4xf32>
    %91 = arith.mulf %86, %90 : vector<1x16x16x4xf32>
    %92 = arith.addf %85, %91 : vector<1x16x16x4xf32>
    %c0_62 = arith.constant 0 : index
    %c2_63 = arith.constant 2 : index
    %c0_64 = arith.constant 0 : index
    %c0_65 = arith.constant 0 : index
    %93 = vector.load %arg9[%c0_62, %c2_63, %c0_64, %c0_65] : memref<1x20x20x4xf32, #tpu.memory_space<vmem>>, vector<1x16x16x4xf32>
    %94 = vector.extract_strided_slice %21 {offsets = [10, 0], sizes = [1, 4], strides = [1, 1]} : vector<25x4xf32> to vector<1x4xf32>
    %95 = vector.shape_cast %94 : vector<1x4xf32> to vector<4xf32>
    %96 = vector.shape_cast %95 : vector<4xf32> to vector<1x1x1x4xf32>
    %97 = vector.broadcast %96 : vector<1x1x1x4xf32> to vector<1x16x16x4xf32>
    %98 = arith.mulf %93, %97 : vector<1x16x16x4xf32>
    %99 = arith.addf %92, %98 : vector<1x16x16x4xf32>
    %c0_66 = arith.constant 0 : index
    %c2_67 = arith.constant 2 : index
    %c1_68 = arith.constant 1 : index
    %c0_69 = arith.constant 0 : index
    %100 = vector.load %arg9[%c0_66, %c2_67, %c1_68, %c0_69] : memref<1x20x20x4xf32, #tpu.memory_space<vmem>>, vector<1x16x16x4xf32>
    %101 = vector.extract_strided_slice %21 {offsets = [11, 0], sizes = [1, 4], strides = [1, 1]} : vector<25x4xf32> to vector<1x4xf32>
    %102 = vector.shape_cast %101 : vector<1x4xf32> to vector<4xf32>
    %103 = vector.shape_cast %102 : vector<4xf32> to vector<1x1x1x4xf32>
    %104 = vector.broadcast %103 : vector<1x1x1x4xf32> to vector<1x16x16x4xf32>
    %105 = arith.mulf %100, %104 : vector<1x16x16x4xf32>
    %106 = arith.addf %99, %105 : vector<1x16x16x4xf32>
    %c0_70 = arith.constant 0 : index
    %c2_71 = arith.constant 2 : index
    %c2_72 = arith.constant 2 : index
    %c0_73 = arith.constant 0 : index
    %107 = vector.load %arg9[%c0_70, %c2_71, %c2_72, %c0_73] : memref<1x20x20x4xf32, #tpu.memory_space<vmem>>, vector<1x16x16x4xf32>
    %108 = vector.extract_strided_slice %21 {offsets = [12, 0], sizes = [1, 4], strides = [1, 1]} : vector<25x4xf32> to vector<1x4xf32>
    %109 = vector.shape_cast %108 : vector<1x4xf32> to vector<4xf32>
    %110 = vector.shape_cast %109 : vector<4xf32> to vector<1x1x1x4xf32>
    %111 = vector.broadcast %110 : vector<1x1x1x4xf32> to vector<1x16x16x4xf32>
    %112 = arith.mulf %107, %111 : vector<1x16x16x4xf32>
    %113 = arith.addf %106, %112 : vector<1x16x16x4xf32>
    %c0_74 = arith.constant 0 : index
    %c2_75 = arith.constant 2 : index
    %c3_76 = arith.constant 3 : index
    %c0_77 = arith.constant 0 : index
    %114 = vector.load %arg9[%c0_74, %c2_75, %c3_76, %c0_77] : memref<1x20x20x4xf32, #tpu.memory_space<vmem>>, vector<1x16x16x4xf32>
    %115 = vector.extract_strided_slice %21 {offsets = [13, 0], sizes = [1, 4], strides = [1, 1]} : vector<25x4xf32> to vector<1x4xf32>
    %116 = vector.shape_cast %115 : vector<1x4xf32> to vector<4xf32>
    %117 = vector.shape_cast %116 : vector<4xf32> to vector<1x1x1x4xf32>
    %118 = vector.broadcast %117 : vector<1x1x1x4xf32> to vector<1x16x16x4xf32>
    %119 = arith.mulf %114, %118 : vector<1x16x16x4xf32>
    %120 = arith.addf %113, %119 : vector<1x16x16x4xf32>
    %c0_78 = arith.constant 0 : index
    %c2_79 = arith.constant 2 : index
    %c4_80 = arith.constant 4 : index
    %c0_81 = arith.constant 0 : index
    %121 = vector.load %arg9[%c0_78, %c2_79, %c4_80, %c0_81] : memref<1x20x20x4xf32, #tpu.memory_space<vmem>>, vector<1x16x16x4xf32>
    %122 = vector.extract_strided_slice %21 {offsets = [14, 0], sizes = [1, 4], strides = [1, 1]} : vector<25x4xf32> to vector<1x4xf32>
    %123 = vector.shape_cast %122 : vector<1x4xf32> to vector<4xf32>
    %124 = vector.shape_cast %123 : vector<4xf32> to vector<1x1x1x4xf32>
    %125 = vector.broadcast %124 : vector<1x1x1x4xf32> to vector<1x16x16x4xf32>
    %126 = arith.mulf %121, %125 : vector<1x16x16x4xf32>
    %127 = arith.addf %120, %126 : vector<1x16x16x4xf32>
    %c0_82 = arith.constant 0 : index
    %c3_83 = arith.constant 3 : index
    %c0_84 = arith.constant 0 : index
    %c0_85 = arith.constant 0 : index
    %128 = vector.load %arg9[%c0_82, %c3_83, %c0_84, %c0_85] : memref<1x20x20x4xf32, #tpu.memory_space<vmem>>, vector<1x16x16x4xf32>
    %129 = vector.extract_strided_slice %21 {offsets = [15, 0], sizes = [1, 4], strides = [1, 1]} : vector<25x4xf32> to vector<1x4xf32>
    %130 = vector.shape_cast %129 : vector<1x4xf32> to vector<4xf32>
    %131 = vector.shape_cast %130 : vector<4xf32> to vector<1x1x1x4xf32>
    %132 = vector.broadcast %131 : vector<1x1x1x4xf32> to vector<1x16x16x4xf32>
    %133 = arith.mulf %128, %132 : vector<1x16x16x4xf32>
    %134 = arith.addf %127, %133 : vector<1x16x16x4xf32>
    %c0_86 = arith.constant 0 : index
    %c3_87 = arith.constant 3 : index
    %c1_88 = arith.constant 1 : index
    %c0_89 = arith.constant 0 : index
    %135 = vector.load %arg9[%c0_86, %c3_87, %c1_88, %c0_89] : memref<1x20x20x4xf32, #tpu.memory_space<vmem>>, vector<1x16x16x4xf32>
    %136 = vector.extract_strided_slice %21 {offsets = [16, 0], sizes = [1, 4], strides = [1, 1]} : vector<25x4xf32> to vector<1x4xf32>
    %137 = vector.shape_cast %136 : vector<1x4xf32> to vector<4xf32>
    %138 = vector.shape_cast %137 : vector<4xf32> to vector<1x1x1x4xf32>
    %139 = vector.broadcast %138 : vector<1x1x1x4xf32> to vector<1x16x16x4xf32>
    %140 = arith.mulf %135, %139 : vector<1x16x16x4xf32>
    %141 = arith.addf %134, %140 : vector<1x16x16x4xf32>
    %c0_90 = arith.constant 0 : index
    %c3_91 = arith.constant 3 : index
    %c2_92 = arith.constant 2 : index
    %c0_93 = arith.constant 0 : index
    %142 = vector.load %arg9[%c0_90, %c3_91, %c2_92, %c0_93] : memref<1x20x20x4xf32, #tpu.memory_space<vmem>>, vector<1x16x16x4xf32>
    %143 = vector.extract_strided_slice %21 {offsets = [17, 0], sizes = [1, 4], strides = [1, 1]} : vector<25x4xf32> to vector<1x4xf32>
    %144 = vector.shape_cast %143 : vector<1x4xf32> to vector<4xf32>
    %145 = vector.shape_cast %144 : vector<4xf32> to vector<1x1x1x4xf32>
    %146 = vector.broadcast %145 : vector<1x1x1x4xf32> to vector<1x16x16x4xf32>
    %147 = arith.mulf %142, %146 : vector<1x16x16x4xf32>
    %148 = arith.addf %141, %147 : vector<1x16x16x4xf32>
    %c0_94 = arith.constant 0 : index
    %c3_95 = arith.constant 3 : index
    %c3_96 = arith.constant 3 : index
    %c0_97 = arith.constant 0 : index
    %149 = vector.load %arg9[%c0_94, %c3_95, %c3_96, %c0_97] : memref<1x20x20x4xf32, #tpu.memory_space<vmem>>, vector<1x16x16x4xf32>
    %150 = vector.extract_strided_slice %21 {offsets = [18, 0], sizes = [1, 4], strides = [1, 1]} : vector<25x4xf32> to vector<1x4xf32>
    %151 = vector.shape_cast %150 : vector<1x4xf32> to vector<4xf32>
    %152 = vector.shape_cast %151 : vector<4xf32> to vector<1x1x1x4xf32>
    %153 = vector.broadcast %152 : vector<1x1x1x4xf32> to vector<1x16x16x4xf32>
    %154 = arith.mulf %149, %153 : vector<1x16x16x4xf32>
    %155 = arith.addf %148, %154 : vector<1x16x16x4xf32>
    %c0_98 = arith.constant 0 : index
    %c3_99 = arith.constant 3 : index
    %c4_100 = arith.constant 4 : index
    %c0_101 = arith.constant 0 : index
    %156 = vector.load %arg9[%c0_98, %c3_99, %c4_100, %c0_101] : memref<1x20x20x4xf32, #tpu.memory_space<vmem>>, vector<1x16x16x4xf32>
    %157 = vector.extract_strided_slice %21 {offsets = [19, 0], sizes = [1, 4], strides = [1, 1]} : vector<25x4xf32> to vector<1x4xf32>
    %158 = vector.shape_cast %157 : vector<1x4xf32> to vector<4xf32>
    %159 = vector.shape_cast %158 : vector<4xf32> to vector<1x1x1x4xf32>
    %160 = vector.broadcast %159 : vector<1x1x1x4xf32> to vector<1x16x16x4xf32>
    %161 = arith.mulf %156, %160 : vector<1x16x16x4xf32>
    %162 = arith.addf %155, %161 : vector<1x16x16x4xf32>
    %c0_102 = arith.constant 0 : index
    %c4_103 = arith.constant 4 : index
    %c0_104 = arith.constant 0 : index
    %c0_105 = arith.constant 0 : index
    %163 = vector.load %arg9[%c0_102, %c4_103, %c0_104, %c0_105] : memref<1x20x20x4xf32, #tpu.memory_space<vmem>>, vector<1x16x16x4xf32>
    %164 = vector.extract_strided_slice %21 {offsets = [20, 0], sizes = [1, 4], strides = [1, 1]} : vector<25x4xf32> to vector<1x4xf32>
    %165 = vector.shape_cast %164 : vector<1x4xf32> to vector<4xf32>
    %166 = vector.shape_cast %165 : vector<4xf32> to vector<1x1x1x4xf32>
    %167 = vector.broadcast %166 : vector<1x1x1x4xf32> to vector<1x16x16x4xf32>
    %168 = arith.mulf %163, %167 : vector<1x16x16x4xf32>
    %169 = arith.addf %162, %168 : vector<1x16x16x4xf32>
    %c0_106 = arith.constant 0 : index
    %c4_107 = arith.constant 4 : index
    %c1_108 = arith.constant 1 : index
    %c0_109 = arith.constant 0 : index
    %170 = vector.load %arg9[%c0_106, %c4_107, %c1_108, %c0_109] : memref<1x20x20x4xf32, #tpu.memory_space<vmem>>, vector<1x16x16x4xf32>
    %171 = vector.extract_strided_slice %21 {offsets = [21, 0], sizes = [1, 4], strides = [1, 1]} : vector<25x4xf32> to vector<1x4xf32>
    %172 = vector.shape_cast %171 : vector<1x4xf32> to vector<4xf32>
    %173 = vector.shape_cast %172 : vector<4xf32> to vector<1x1x1x4xf32>
    %174 = vector.broadcast %173 : vector<1x1x1x4xf32> to vector<1x16x16x4xf32>
    %175 = arith.mulf %170, %174 : vector<1x16x16x4xf32>
    %176 = arith.addf %169, %175 : vector<1x16x16x4xf32>
    %c0_110 = arith.constant 0 : index
    %c4_111 = arith.constant 4 : index
    %c2_112 = arith.constant 2 : index
    %c0_113 = arith.constant 0 : index
    %177 = vector.load %arg9[%c0_110, %c4_111, %c2_112, %c0_113] : memref<1x20x20x4xf32, #tpu.memory_space<vmem>>, vector<1x16x16x4xf32>
    %178 = vector.extract_strided_slice %21 {offsets = [22, 0], sizes = [1, 4], strides = [1, 1]} : vector<25x4xf32> to vector<1x4xf32>
    %179 = vector.shape_cast %178 : vector<1x4xf32> to vector<4xf32>
    %180 = vector.shape_cast %179 : vector<4xf32> to vector<1x1x1x4xf32>
    %181 = vector.broadcast %180 : vector<1x1x1x4xf32> to vector<1x16x16x4xf32>
    %182 = arith.mulf %177, %181 : vector<1x16x16x4xf32>
    %183 = arith.addf %176, %182 : vector<1x16x16x4xf32>
    %c0_114 = arith.constant 0 : index
    %c4_115 = arith.constant 4 : index
    %c3_116 = arith.constant 3 : index
    %c0_117 = arith.constant 0 : index
    %184 = vector.load %arg9[%c0_114, %c4_115, %c3_116, %c0_117] : memref<1x20x20x4xf32, #tpu.memory_space<vmem>>, vector<1x16x16x4xf32>
    %185 = vector.extract_strided_slice %21 {offsets = [23, 0], sizes = [1, 4], strides = [1, 1]} : vector<25x4xf32> to vector<1x4xf32>
    %186 = vector.shape_cast %185 : vector<1x4xf32> to vector<4xf32>
    %187 = vector.shape_cast %186 : vector<4xf32> to vector<1x1x1x4xf32>
    %188 = vector.broadcast %187 : vector<1x1x1x4xf32> to vector<1x16x16x4xf32>
    %189 = arith.mulf %184, %188 : vector<1x16x16x4xf32>
    %190 = arith.addf %183, %189 : vector<1x16x16x4xf32>
    %c0_118 = arith.constant 0 : index
    %c4_119 = arith.constant 4 : index
    %c4_120 = arith.constant 4 : index
    %c0_121 = arith.constant 0 : index
    %191 = vector.load %arg9[%c0_118, %c4_119, %c4_120, %c0_121] : memref<1x20x20x4xf32, #tpu.memory_space<vmem>>, vector<1x16x16x4xf32>
    %192 = vector.extract_strided_slice %21 {offsets = [24, 0], sizes = [1, 4], strides = [1, 1]} : vector<25x4xf32> to vector<1x4xf32>
    %193 = vector.shape_cast %192 : vector<1x4xf32> to vector<4xf32>
    %194 = vector.shape_cast %193 : vector<4xf32> to vector<1x1x1x4xf32>
    %195 = vector.broadcast %194 : vector<1x1x1x4xf32> to vector<1x16x16x4xf32>
    %196 = arith.mulf %191, %195 : vector<1x16x16x4xf32>
    %197 = arith.addf %190, %196 : vector<1x16x16x4xf32>
    %c0_122 = arith.constant 0 : index
    %c0_123 = arith.constant 0 : index
    %198 = vector.load %arg6[%c0_122, %c0_123] : memref<1x4xf32, #tpu.memory_space<vmem>>, vector<1x4xf32>
    %199 = vector.shape_cast %198 : vector<1x4xf32> to vector<4xf32>
    %200 = vector.shape_cast %199 : vector<4xf32> to vector<1x1x1x4xf32>
    %201 = vector.broadcast %200 : vector<1x1x1x4xf32> to vector<1x16x16x4xf32>
    %202 = arith.mulf %197, %201 : vector<1x16x16x4xf32>
    %c0_124 = arith.constant 0 : index
    %c0_125 = arith.constant 0 : index
    %203 = vector.load %arg7[%c0_124, %c0_125] : memref<1x4xf32, #tpu.memory_space<vmem>>, vector<1x4xf32>
    %204 = vector.shape_cast %203 : vector<1x4xf32> to vector<4xf32>
    %205 = vector.shape_cast %204 : vector<4xf32> to vector<1x1x1x4xf32>
    %206 = vector.broadcast %205 : vector<1x1x1x4xf32> to vector<1x16x16x4xf32>
    %207 = arith.addf %202, %206 : vector<1x16x16x4xf32>
    %208 = arith.negf %207 : vector<1x16x16x4xf32>
    %209 = math.exp %208 : vector<1x16x16x4xf32>
    %cst_126 = arith.constant 1.000000e+00 : f32
    %210 = vector.broadcast %cst_126 : f32 to vector<1x16x16x4xf32>
    %211 = arith.addf %210, %209 : vector<1x16x16x4xf32>
    %212 = arith.divf %210, %211 : vector<1x16x16x4xf32>
    %213 = arith.mulf %207, %212 : vector<1x16x16x4xf32>
    %c0_127 = arith.constant 0 : index
    %c0_128 = arith.constant 0 : index
    %c0_129 = arith.constant 0 : index
    %c4_130 = arith.constant 4 : index
    %214 = vector.load %arg8[%c0_127, %c0_128, %c0_129, %c4_130] : memref<1x16x16x8xf32, #tpu.memory_space<vmem>>, vector<1x16x16x4xf32>
    tpu.vector_store %arg8[%c0_127, %c0_128, %c0_129, %c4_130], %213 {strides = array<i32>} : memref<1x16x16x8xf32, #tpu.memory_space<vmem>>, vector<1x16x16x4xf32>,
    return
  }
  func.func @transform_0(%arg0: i32) -> (i32, i32, i32, i32) {
    %c0_i32 = arith.constant 0 : i32
    %c0_i32_0 = arith.constant 0 : i32
    %c0_i32_1 = arith.constant 0 : i32
    %c0_i32_2 = arith.constant 0 : i32
    return %arg0, %c0_i32, %c0_i32_0, %c0_i32_1 : i32, i32, i32, i32
  }
  func.func @transform_1(%arg0: i32) -> (i32, i32) {
    %c0_i32 = arith.constant 0 : i32
    %c0_i32_0 = arith.constant 0 : i32
    %c0_i32_1 = arith.constant 0 : i32
    return %c0_i32, %c0_i32_0 : i32, i32
  }
  func.func @transform_2(%arg0: i32) -> (i32, i32) {
    %c0_i32 = arith.constant 0 : i32
    %c0_i32_0 = arith.constant 0 : i32
    %c0_i32_1 = arith.constant 0 : i32
    return %c0_i32, %c0_i32_0 : i32, i32
  }
  func.func @transform_3(%arg0: i32) -> (i32, i32) {
    %c0_i32 = arith.constant 0 : i32
    %c0_i32_0 = arith.constant 0 : i32
    %c0_i32_1 = arith.constant 0 : i32
    return %c0_i32, %c0_i32_0 : i32, i32
  }
  func.func @transform_4(%arg0: i32) -> (i32, i32) {
    %c0_i32 = arith.constant 0 : i32
    %c0_i32_0 = arith.constant 0 : i32
    %c0_i32_1 = arith.constant 0 : i32
    return %c0_i32, %c0_i32_0 : i32, i32
  }
  func.func @transform_5(%arg0: i32) -> (i32, i32) {
    %c0_i32 = arith.constant 0 : i32
    %c0_i32_0 = arith.constant 0 : i32
    %c0_i32_1 = arith.constant 0 : i32
    return %c0_i32, %c0_i32_0 : i32, i32
  }
  func.func @transform_6(%arg0: i32) -> (i32, i32) {
    %c0_i32 = arith.constant 0 : i32
    %c0_i32_0 = arith.constant 0 : i32
    %c0_i32_1 = arith.constant 0 : i32
    return %c0_i32, %c0_i32_0 : i32, i32
  }
  func.func @transform_7(%arg0: i32) -> (i32, i32, i32, i32) {
    %c0_i32 = arith.constant 0 : i32
    %c0_i32_0 = arith.constant 0 : i32
    %c0_i32_1 = arith.constant 0 : i32
    %c0_i32_2 = arith.constant 0 : i32
    return %arg0, %c0_i32, %c0_i32_0, %c0_i32_1 : i32, i32, i32, i32
  }
}

</mosaic_0001>

<llo_original>
// kernel: tpu_custom_call.1
$region0: #{tpu_custom_call.1}
  #allocation0 [shape = 'u32[]', space=smem, size = 0x4, offset = 0x4, fixed_abs, tag = 'smem constant byte address 0x4 - core index']
  #allocation1 [shape = 'u32[144,128]{1,0:T(1,128)}', space=vmem, size = 0x12000, scoped, tag = 'internal scratch']
  #allocation2 [shape = 'f32[1,20,20,4]{3,2,1,0:T(8,128)}', space=vmem, size = 0x3c000, scoped, tag = 'scratch operand']
  %s0 = inlined_call_operand.hbm [shape: f32[2,16,16,4], index: 0, kind: input, shape index: {}]
  %s1 = inlined_call_operand.hbm [shape: f32[4,4], index: 1, kind: input, shape index: {}]
  %s2 = inlined_call_operand.hbm [shape: f32[1,4], index: 2, kind: input, shape index: {}]
  %s3 = inlined_call_operand.hbm [shape: f32[1,4], index: 3, kind: input, shape index: {}]
  %s4 = inlined_call_operand.hbm [shape: f32[25,4], index: 4, kind: input, shape index: {}]
  %s5 = inlined_call_operand.hbm [shape: f32[1,4], index: 5, kind: input, shape index: {}]
  %s6 = inlined_call_operand.hbm [shape: f32[1,4], index: 6, kind: input, shape index: {}]
  %s7 = inlined_call_operand.hbm [shape: f32[2,16,16,8], index: 7, kind: output, shape index: {}]
  %s8 = sld [smem:[#allocation0]]
  $region89: #{tpu_custom_call.1} parent=0
    _
  %s10 = ssub.s32 1, %s8
  %s11 = scalar_select 0, %s10, %s8
  $region1: #{tpu_custom_call.1} parent=0
    #allocation3 [shape = 'u8[262144]{0}', space=vmem, size = 0x40000, scoped, tag = 'input window, operand 0']
    #allocation4 [shape = 's32[2]{0}', space=sflag, size = 0x8, scoped, tag = 'scoped memory for tpu_custom_call.1']
    #allocation5 [shape = 's32[2]{0}', space=sflag, size = 0x8, scoped, tag = 'scoped memory for tpu_custom_call.1']
    #allocation6 [shape = 'u8[2048]{0}', space=vmem, size = 0x800, scoped, tag = 'input window, operand 1, single buffered']
    #allocation7 [shape = 's32[1]{0}', space=sflag, size = 0x4, scoped, tag = 'scoped memory for tpu_custom_call.1']
    #allocation8 [shape = 'u8[512]{0}', space=vmem, size = 0x400, scoped, tag = 'input window, operand 2, single buffered']
    #allocation9 [shape = 'u8[512]{0}', space=vmem, size = 0x400, scoped, tag = 'input window, operand 3, single buffered']
    #allocation10 [shape = 's32[1]{0}', space=sflag, size = 0x4, scoped, tag = 'scoped memory for tpu_custom_call.1']
    #allocation11 [shape = 'u8[16384]{0}', space=vmem, size = 0x4000, scoped, tag = 'input window, operand 4, single buffered']
    #allocation12 [shape = 'u8[512]{0}', space=vmem, size = 0x400, scoped, tag = 'input window, operand 5, single buffered']
    #allocation13 [shape = 's32[1]{0}', space=sflag, size = 0x4, scoped, tag = 'scoped memory for tpu_custom_call.1']
    #allocation14 [shape = 'u8[512]{0}', space=vmem, size = 0x400, scoped, tag = 'input window, operand 6, single buffered']
    #allocation15 [shape = 'u8[262144]{0}', space=vmem, size = 0x40000, scoped, tag = 'output window, operand 0']
    %12 = vsyncpa [#allocation4], 0
    %s13 = scalar_lea.sflag [#allocation4], 1
    %14 = vsyncpa %s13, 0
    %15 = vsyncpa [#allocation7], 0
    %16 = vsyncpa [#allocation10], 0
    %17 = vsyncpa [#allocation13], 0
    %18 = vsyncpa [#allocation5], 0
    %s19 = scalar_lea.sflag [#allocation5], 1
    %20 = vsyncpa %s19, 0
    loop: start=0, step=1, limit=4
    $region2: #{tpu_custom_call.1} parent=1 // loop_pre_header
      _
    $region3: #{tpu_custom_call.1} parent=1 // loop_header
      %s22 = sphi 0, %s26
      %p23 = scmp.ge.s32.totalorder %s22, 4
      %s32 = sphi 0, %s34
      %s35 = sphi 0, %s32
      %s36 = sphi 0, %s35
      %s52 = sphi 0, %s36
      %s56 = sphi 0, %s56
      %s58 = sphi 0, %s56
      %s59 = sphi 0, %s58
      %s73 = sphi 0, %s59
      %s77 = sphi 0, %s77
      %s79 = sphi 0, %s77
      %s80 = sphi 0, %s79
      %s94 = sphi 0, %s80
      %s98 = sphi 0, %s98
      %s100 = sphi 0, %s98
      %s101 = sphi 0, %s100
      %s115 = sphi 0, %s101
      %s119 = sphi 0, %s119
      %s121 = sphi 0, %s119
      %s122 = sphi 0, %s121
      %s136 = sphi 0, %s122
      %s140 = sphi 0, %s140
      %s142 = sphi 0, %s140
      %s143 = sphi 0, %s142
      %s157 = sphi 0, %s143
      %s161 = sphi 0, %s161
      %s163 = sphi 0, %s161
      %s164 = sphi 0, %s163
      %s178 = sphi 0, %s164
      %s184 = sphi 0, %s186
      %s187 = sphi 0, %s184
      %s188 = sphi 0, %s187
      %s204 = sphi 0, %s188
    $region4: #{tpu_custom_call.1} parent=1 // loop_header_branch
      %25 = sbr.rel (%p23) target = $region8
    $region5: #{tpu_custom_call.1} parent=1 // loop_body
      %s27 = ssub.s32 %s22, 1
      %s28 = ssub.s32 %s22, 2
      %s29 = sadd.s32 %s22, 1
      %s30 = ssub.s32 %s22, %s29
      %p31 = scmp.eq.s32.totalorder %s30, 0
      %s33 = sadd.s32 %s32, 1
      %s34 = scalar_select %p31, %s32, %s33
      %p37 = pneg %p31
      %p38 = scmp.eq.s32.totalorder %s22, 1
      %p39 = por %p37, %p38
      %p40 = scmp.ne.s32.totalorder %s32, %s35
      %p41 = scmp.eq.s32.totalorder %s22, 0
      %p42 = por %p40, %p41
      %p43 = scmp.ne.s32.totalorder %s32, %s35
      %p44 = scmp.eq.s32.totalorder %s27, 1
      %p45 = por %p43, %p44
      %p46 = scmp.ne.s32.totalorder %s35, %s36
      %p47 = scmp.eq.s32.totalorder %s27, 0
      %p48 = por %p46, %p47
      %p49 = scmp.ne.s32.totalorder %s35, %s36
      %p50 = scmp.eq.s32.totalorder %s28, 1
      %p51 = por %p49, %p50
      %p53 = scmp.ne.s32.totalorder %s36, %s52
      %p54 = scmp.eq.s32.totalorder %s28, 0
      %p55 = por %p53, %p54
      %s57 = sadd.s32 %s56, 1
      %p60 = scmp.eq.s32.totalorder %s22, 1
      %p61 = scmp.ne.s32.totalorder %s56, %s58
      %p62 = scmp.eq.s32.totalorder %s22, 0
      %p63 = por %p61, %p62
      %p64 = scmp.ne.s32.totalorder %s56, %s58
      %p65 = scmp.eq.s32.totalorder %s27, 1
      %p66 = por %p64, %p65
      %p67 = scmp.ne.s32.totalorder %s58, %s59
      %p68 = scmp.eq.s32.totalorder %s27, 0
      %p69 = por %p67, %p68
      %p70 = scmp.ne.s32.totalorder %s58, %s59
      %p71 = scmp.eq.s32.totalorder %s28, 1
      %p72 = por %p70, %p71
      %p74 = scmp.ne.s32.totalorder %s59, %s73
      %p75 = scmp.eq.s32.totalorder %s28, 0
      %p76 = por %p74, %p75
      %s78 = sadd.s32 %s77, 1
      %p81 = scmp.eq.s32.totalorder %s22, 1
      %p82 = scmp.ne.s32.totalorder %s77, %s79
      %p83 = scmp.eq.s32.totalorder %s22, 0
      %p84 = por %p82, %p83
      %p85 = scmp.ne.s32.totalorder %s77, %s79
      %p86 = scmp.eq.s32.totalorder %s27, 1
      %p87 = por %p85, %p86
      %p88 = scmp.ne.s32.totalorder %s79, %s80
      %p89 = scmp.eq.s32.totalorder %s27, 0
      %p90 = por %p88, %p89
      %p91 = scmp.ne.s32.totalorder %s79, %s80
      %p92 = scmp.eq.s32.totalorder %s28, 1
      %p93 = por %p91, %p92
      %p95 = scmp.ne.s32.totalorder %s80, %s94
      %p96 = scmp.eq.s32.totalorder %s28, 0
      %p97 = por %p95, %p96
      %s99 = sadd.s32 %s98, 1
      %p102 = scmp.eq.s32.totalorder %s22, 1
      %p103 = scmp.ne.s32.totalorder %s98, %s100
      %p104 = scmp.eq.s32.totalorder %s22, 0
      %p105 = por %p103, %p104
      %p106 = scmp.ne.s32.totalorder %s98, %s100
      %p107 = scmp.eq.s32.totalorder %s27, 1
      %p108 = por %p106, %p107
      %p109 = scmp.ne.s32.totalorder %s100, %s101
      %p110 = scmp.eq.s32.totalorder %s27, 0
      %p111 = por %p109, %p110
      %p112 = scmp.ne.s32.totalorder %s100, %s101
      %p113 = scmp.eq.s32.totalorder %s28, 1
      %p114 = por %p112, %p113
      %p116 = scmp.ne.s32.totalorder %s101, %s115
      %p117 = scmp.eq.s32.totalorder %s28, 0
      %p118 = por %p116, %p117
      %s120 = sadd.s32 %s119, 1
      %p123 = scmp.eq.s32.totalorder %s22, 1
      %p124 = scmp.ne.s32.totalorder %s119, %s121
      %p125 = scmp.eq.s32.totalorder %s22, 0
      %p126 = por %p124, %p125
      %p127 = scmp.ne.s32.totalorder %s119, %s121
      %p128 = scmp.eq.s32.totalorder %s27, 1
      %p129 = por %p127, %p128
      %p130 = scmp.ne.s32.totalorder %s121, %s122
      %p131 = scmp.eq.s32.totalorder %s27, 0
      %p132 = por %p130, %p131
      %p133 = scmp.ne.s32.totalorder %s121, %s122
      %p134 = scmp.eq.s32.totalorder %s28, 1
      %p135 = por %p133, %p134
      %p137 = scmp.ne.s32.totalorder %s122, %s136
      %p138 = scmp.eq.s32.totalorder %s28, 0
      %p139 = por %p137, %p138
      %s141 = sadd.s32 %s140, 1
      %p144 = scmp.eq.s32.totalorder %s22, 1
      %p145 = scmp.ne.s32.totalorder %s140, %s142
      %p146 = scmp.eq.s32.totalorder %s22, 0
      %p147 = por %p145, %p146
      %p148 = scmp.ne.s32.totalorder %s140, %s142
      %p149 = scmp.eq.s32.totalorder %s27, 1
      %p150 = por %p148, %p149
      %p151 = scmp.ne.s32.totalorder %s142, %s143
      %p152 = scmp.eq.s32.totalorder %s27, 0
      %p153 = por %p151, %p152
      %p154 = scmp.ne.s32.totalorder %s142, %s143
      %p155 = scmp.eq.s32.totalorder %s28, 1
      %p156 = por %p154, %p155
      %p158 = scmp.ne.s32.totalorder %s143, %s157
      %p159 = scmp.eq.s32.totalorder %s28, 0
      %p160 = por %p158, %p159
      %s162 = sadd.s32 %s161, 1
      %p165 = scmp.eq.s32.totalorder %s22, 1
      %p166 = scmp.ne.s32.totalorder %s161, %s163
      %p167 = scmp.eq.s32.totalorder %s22, 0
      %p168 = por %p166, %p167
      %p169 = scmp.ne.s32.totalorder %s161, %s163
      %p170 = scmp.eq.s32.totalorder %s27, 1
      %p171 = por %p169, %p170
      %p172 = scmp.ne.s32.totalorder %s163, %s164
      %p173 = scmp.eq.s32.totalorder %s27, 0
      %p174 = por %p172, %p173
      %p175 = scmp.ne.s32.totalorder %s163, %s164
      %p176 = scmp.eq.s32.totalorder %s28, 1
      %p177 = por %p175, %p176
      %p179 = scmp.ne.s32.totalorder %s164, %s178
      %p180 = scmp.eq.s32.totalorder %s28, 0
      %p181 = por %p179, %p180
      %s182 = ssub.s32 %s22, %s29
      %p183 = scmp.eq.s32.totalorder %s182, 0
      %s185 = sadd.s32 %s184, 1
      %s186 = scalar_select %p183, %s184, %s185
      %p189 = pneg %p183
      %p190 = scmp.eq.s32.totalorder %s22, 1
      %p191 = por %p189, %p190
      %p192 = scmp.ne.s32.totalorder %s184, %s187
      %p193 = scmp.eq.s32.totalorder %s22, 0
      %p194 = por %p192, %p193
      %p195 = scmp.ne.s32.totalorder %s184, %s187
      %p196 = scmp.eq.s32.totalorder %s27, 1
      %p197 = por %p195, %p196
      %p198 = scmp.ne.s32.totalorder %s187, %s188
      %p199 = scmp.eq.s32.totalorder %s27, 0
      %p200 = por %p198, %p199
      %p201 = scmp.ne.s32.totalorder %s187, %s188
      %p202 = scmp.eq.s32.totalorder %s28, 1
      %p203 = por %p201, %p202
      %p205 = scmp.ne.s32.totalorder %s188, %s204
      %p206 = scmp.eq.s32.totalorder %s28, 0
      %p207 = por %p205, %p206
      %p208 = scmp.le.s32.totalorder 1, %s22
      %p209 = scmp.lt.s32.totalorder %s22, 3
      %p210 = pnand %p208, %p209
      %p211 = pneg %p210
      // Predicated region
      $region9: #{tpu_custom_call.1} parent=5 // pred_check
        _
      $region10: #{tpu_custom_call.1} parent=5 // pred_check_branch
        %213 = sbr.rel (%p210) target = $region12
      $region11: #{tpu_custom_call.1} parent=5 // pred_region
        %s214 = ssub.s32 %s22, 1
        // Predicated region
        $region13: #{tpu_custom_call.1} parent=11 // pred_check
          %p215 = pneg %p69
        $region14: #{tpu_custom_call.1} parent=11 // pred_check_branch
          %217 = sbr.rel (%p215) target = $region16
        $region15: #{tpu_custom_call.1} parent=11 // pred_region
          %s219 = ssub.s32 64, 64
          %220 = vsyncadd [#allocation7], %s219
          %s222 = sshll.u32 [#allocation6], 4
          %s223 = int_to_ptr.vmem [resolvable:$true] %s222
          %225 = dma.hbm_to_vmem [thread:$0]  %s1, 64, %s223, [#allocation7]
        $region16: #{tpu_custom_call.1} parent=11 // pred_fallthru
          _
        // Predicated region
        $region17: #{tpu_custom_call.1} parent=11 // pred_check
          %p226 = pneg %p90
        $region18: #{tpu_custom_call.1} parent=11 // pred_check_branch
          %228 = sbr.rel (%p226) target = $region20
        $region19: #{tpu_custom_call.1} parent=11 // pred_region
          %s230 = ssub.s32 16, 16
          %231 = vsyncadd [#allocation7], %s230
          %s233 = sshll.u32 [#allocation8], 4
          %s234 = int_to_ptr.vmem [resolvable:$true] %s233
          %236 = dma.hbm_to_vmem [thread:$0]  %s2, 16, %s234, [#allocation7]
        $region20: #{tpu_custom_call.1} parent=11 // pred_fallthru
          _
        // Predicated region
        $region21: #{tpu_custom_call.1} parent=11 // pred_check
          %p237 = pneg %p111
        $region22: #{tpu_custom_call.1} parent=11 // pred_check_branch
          %239 = sbr.rel (%p237) target = $region24
        $region23: #{tpu_custom_call.1} parent=11 // pred_region
          %s241 = ssub.s32 16, 16
          %242 = vsyncadd [#allocation10], %s241
          %s244 = sshll.u32 [#allocation9], 4
          %s245 = int_to_ptr.vmem [resolvable:$true] %s244
          %247 = dma.hbm_to_vmem [thread:$0]  %s3, 16, %s245, [#allocation10]
        $region24: #{tpu_custom_call.1} parent=11 // pred_fallthru
          _
        // Predicated region
        $region25: #{tpu_custom_call.1} parent=11 // pred_check
          %p248 = pneg %p132
        $region26: #{tpu_custom_call.1} parent=11 // pred_check_branch
          %250 = sbr.rel (%p248) target = $region28
        $region27: #{tpu_custom_call.1} parent=11 // pred_region
          %s252 = ssub.s32 512, 512
          %253 = vsyncadd [#allocation10], %s252
          %s254 = sshll.u32 [#allocation11], 4
          %s255 = int_to_ptr.vmem [resolvable:$true] %s254
          %260 = dma.hbm_to_vmem [thread:$0]  %s4, 512, %s255, [#allocation10], 128, 128, 8
        $region28: #{tpu_custom_call.1} parent=11 // pred_fallthru
          _
        // Predicated region
        $region29: #{tpu_custom_call.1} parent=11 // pred_check
          %p261 = pneg %p153
        $region30: #{tpu_custom_call.1} parent=11 // pred_check_branch
          %263 = sbr.rel (%p261) target = $region32
        $region31: #{tpu_custom_call.1} parent=11 // pred_region
          %s265 = ssub.s32 16, 16
          %266 = vsyncadd [#allocation13], %s265
          %s268 = sshll.u32 [#allocation12], 4
          %s269 = int_to_ptr.vmem [resolvable:$true] %s268
          %271 = dma.hbm_to_vmem [thread:$0]  %s5, 16, %s269, [#allocation13]
        $region32: #{tpu_custom_call.1} parent=11 // pred_fallthru
          _
        // Predicated region
        $region33: #{tpu_custom_call.1} parent=11 // pred_check
          %p272 = pneg %p174
        $region34: #{tpu_custom_call.1} parent=11 // pred_check_branch
          %274 = sbr.rel (%p272) target = $region36
        $region35: #{tpu_custom_call.1} parent=11 // pred_region
          %s276 = ssub.s32 16, 16
          %277 = vsyncadd [#allocation13], %s276
          %s279 = sshll.u32 [#allocation14], 4
          %s280 = int_to_ptr.vmem [resolvable:$true] %s279
          %282 = dma.hbm_to_vmem [thread:$0]  %s6, 16, %s280, [#allocation13]
        $region36: #{tpu_custom_call.1} parent=11 // pred_fallthru
          _
      $region12: #{tpu_custom_call.1} parent=5 // pred_fallthru
        _
      %p283 = scmp.lt.s32.totalorder %s22, 2
      // Predicated region
      $region37: #{tpu_custom_call.1} parent=5 // pred_check
        %p284 = pneg %p283
      $region38: #{tpu_custom_call.1} parent=5 // pred_check_branch
        %286 = sbr.rel (%p284) target = $region40
      $region39: #{tpu_custom_call.1} parent=5 // pred_region
        // Predicated region
        $region41: #{tpu_custom_call.1} parent=39 // pred_check
          %p287 = pneg %p42
        $region42: #{tpu_custom_call.1} parent=39 // pred_check_branch
          %289 = sbr.rel (%p287) target = $region44
        $region43: #{tpu_custom_call.1} parent=39 // pred_region
          %s290 = sand.u32 %s32, 1
          %s291 = scalar_lea.sflag [#allocation4], %s290
          %s292 = sand.u32 %s32, 1
          %s293 = smul.addr %s292, 256
          %s294 = scalar_lea.vmem [#allocation3], %s293
          %s296 = ssub.s32 4096, 4096
          %297 = vsyncadd %s291, %s296
          %s298 = smul.addr %s22, 32
          %s299 = smul.addr %s298, 128
          %s300 = scalar_lea.hbm %s0, %s299
          %s301 = sshll.u32 %s294, 4
          %s302 = int_to_ptr.vmem [resolvable:$true] %s301
          %307 = dma.hbm_to_vmem [thread:$0]  %s300, 4096, %s302, %s291, 128, 128, 8
        $region44: #{tpu_custom_call.1} parent=39 // pred_fallthru
          _
      $region40: #{tpu_custom_call.1} parent=5 // pred_fallthru
        _
      %p308 = scmp.le.s32.totalorder 1, %s22
      %p309 = scmp.lt.s32.totalorder %s22, 3
      %p310 = pnand %p308, %p309
      %p311 = pneg %p310
      // Predicated region
      $region45: #{tpu_custom_call.1} parent=5 // pred_check
        _
      $region46: #{tpu_custom_call.1} parent=5 // pred_check_branch
        %313 = sbr.rel (%p310) target = $region48
      $region47: #{tpu_custom_call.1} parent=5 // pred_region
        %s314 = ssub.s32 %s22, 1
        %s315 = sand.u32 %s35, 1
        %s316 = scalar_lea.sflag [#allocation4], %s315
        %s317 = sand.u32 %s35, 1
        %s318 = smul.addr %s317, 256
        %s319 = scalar_lea.vmem [#allocation3], %s318
        // Predicated region
        $region49: #{tpu_custom_call.1} parent=47 // pred_check
          %p320 = pneg %p48
        $region50: #{tpu_custom_call.1} parent=47 // pred_check_branch
          %322 = sbr.rel (%p320) target = $region52
        $region51: #{tpu_custom_call.1} parent=47 // pred_region
          %323 = dma.done %s316, 4096
        $region52: #{tpu_custom_call.1} parent=47 // pred_fallthru
          _
        // Predicated region
        $region53: #{tpu_custom_call.1} parent=47 // pred_check
          %p324 = pneg %p69
        $region54: #{tpu_custom_call.1} parent=47 // pred_check_branch
          %326 = sbr.rel (%p324) target = $region56
        $region55: #{tpu_custom_call.1} parent=47 // pred_region
          %327 = dma.done [#allocation7], 64
        $region56: #{tpu_custom_call.1} parent=47 // pred_fallthru
          _
        // Predicated region
        $region57: #{tpu_custom_call.1} parent=47 // pred_check
          %p328 = pneg %p90
        $region58: #{tpu_custom_call.1} parent=47 // pred_check_branch
          %330 = sbr.rel (%p328) target = $region60
        $region59: #{tpu_custom_call.1} parent=47 // pred_region
          %331 = dma.done [#allocation7], 16
        $region60: #{tpu_custom_call.1} parent=47 // pred_fallthru
          _
        // Predicated region
        $region61: #{tpu_custom_call.1} parent=47 // pred_check
          %p332 = pneg %p111
        $region62: #{tpu_custom_call.1} parent=47 // pred_check_branch
          %334 = sbr.rel (%p332) target = $region64
        $region63: #{tpu_custom_call.1} parent=47 // pred_region
          %335 = dma.done [#allocation10], 16
        $region64: #{tpu_custom_call.1} parent=47 // pred_fallthru
          _
        // Predicated region
        $region65: #{tpu_custom_call.1} parent=47 // pred_check
          %p336 = pneg %p132
        $region66: #{tpu_custom_call.1} parent=47 // pred_check_branch
          %338 = sbr.rel (%p336) target = $region68
        $region67: #{tpu_custom_call.1} parent=47 // pred_region
          %339 = dma.done [#allocation10], 512
        $region68: #{tpu_custom_call.1} parent=47 // pred_fallthru
          _
        // Predicated region
        $region69: #{tpu_custom_call.1} parent=47 // pred_check
          %p340 = pneg %p153
        $region70: #{tpu_custom_call.1} parent=47 // pred_check_branch
          %342 = sbr.rel (%p340) target = $region72
        $region71: #{tpu_custom_call.1} parent=47 // pred_region
          %343 = dma.done [#allocation13], 16
        $region72: #{tpu_custom_call.1} parent=47 // pred_fallthru
          _
        // Predicated region
        $region73: #{tpu_custom_call.1} parent=47 // pred_check
          %p344 = pneg %p174
        $region74: #{tpu_custom_call.1} parent=47 // pred_check_branch
          %346 = sbr.rel (%p344) target = $region76
        $region75: #{tpu_custom_call.1} parent=47 // pred_region
          %347 = dma.done [#allocation13], 16
        $region76: #{tpu_custom_call.1} parent=47 // pred_fallthru
          _
        %s348 = sand.u32 %s35, 1
        %s349 = scalar_lea.sflag [#allocation4], %s348
        %s350 = sand.u32 %s35, 1
        %s351 = smul.addr %s350, 256
        %s352 = scalar_lea.vmem [#allocation3], %s351
        %p353 = pneg %p48
        %p354 = pneg %p45
        %p355 = pneg %p69
        %p356 = pneg %p66
        %p357 = pneg %p90
        %p358 = pneg %p87
        %p359 = pneg %p111
        %p360 = pneg %p108
        %p361 = pneg %p132
        %p362 = pneg %p129
        %p363 = pneg %p153
        %p364 = pneg %p150
        %p365 = pneg %p174
        %p366 = pneg %p171
        %p367 = pneg %p200
        %p368 = pneg %p197
        %s369 = sand.u32 %s187, 1
        %s370 = scalar_lea.sflag [#allocation5], %s369
        %s371 = sand.u32 %s187, 1
        %s372 = smul.addr %s371, 256
        %s373 = scalar_lea.vmem [#allocation15], %s372
        %v374 = vld [vmem:[%s319] sm:$0xff]
        %v375 = vld [vmem:[%s319 + $0x8] sm:$0xff]
        %v376 = vld [vmem:[%s319 + $0x10] sm:$0xff]
        %v377 = vld [vmem:[%s319 + $0x18] sm:$0xff]
        %v378 = vld [vmem:[%s319 + $0x20] sm:$0xff]
        %v379 = vld [vmem:[%s319 + $0x28] sm:$0xff]
        %v380 = vld [vmem:[%s319 + $0x30] sm:$0xff]
        %v381 = vld [vmem:[%s319 + $0x38] sm:$0xff]
        %v382 = vld [vmem:[%s319 + $0x40] sm:$0xff]
        %v383 = vld [vmem:[%s319 + $0x48] sm:$0xff]
        %v384 = vld [vmem:[%s319 + $0x50] sm:$0xff]
        %v385 = vld [vmem:[%s319 + $0x58] sm:$0xff]
        %v386 = vld [vmem:[%s319 + $0x60] sm:$0xff]
        %v387 = vld [vmem:[%s319 + $0x68] sm:$0xff]
        %v388 = vld [vmem:[%s319 + $0x70] sm:$0xff]
        %v389 = vld [vmem:[%s319 + $0x78] sm:$0xff]
        %v390 = vld [vmem:[%s319 + $0x80] sm:$0xff]
        %v391 = vld [vmem:[%s319 + $0x88] sm:$0xff]
        %v392 = vld [vmem:[%s319 + $0x90] sm:$0xff]
        %v393 = vld [vmem:[%s319 + $0x98] sm:$0xff]
        %v394 = vld [vmem:[%s319 + $0xa0] sm:$0xff]
        %v395 = vld [vmem:[%s319 + $0xa8] sm:$0xff]
        %v396 = vld [vmem:[%s319 + $0xb0] sm:$0xff]
        %v397 = vld [vmem:[%s319 + $0xb8] sm:$0xff]
        %v398 = vld [vmem:[%s319 + $0xc0] sm:$0xff]
        %v399 = vld [vmem:[%s319 + $0xc8] sm:$0xff]
        %v400 = vld [vmem:[%s319 + $0xd0] sm:$0xff]
        %v401 = vld [vmem:[%s319 + $0xd8] sm:$0xff]
        %v402 = vld [vmem:[%s319 + $0xe0] sm:$0xff]
        %v403 = vld [vmem:[%s319 + $0xe8] sm:$0xff]
        %v404 = vld [vmem:[%s319 + $0xf0] sm:$0xff]
        %v405 = vld [vmem:[%s319 + $0xf8] sm:$0xff]
        %v406 = vld [vmem:[#allocation6] sm:$0xf]
        %vm407 = vcmask 31744
        %v409 = vsel %vm407, %v374, 0
        %v412 = vsel %vm407, %v375, 0
        %v415 = vsel %vm407, %v376, 0
        %v418 = vsel %vm407, %v377, 0
        %v421 = vsel %vm407, %v378, 0
        %v424 = vsel %vm407, %v379, 0
        %v427 = vsel %vm407, %v380, 0
        %v430 = vsel %vm407, %v381, 0
        %v433 = vsel %vm407, %v382, 0
        %v436 = vsel %vm407, %v383, 0
        %v439 = vsel %vm407, %v384, 0
        %v442 = vsel %vm407, %v385, 0
        %v445 = vsel %vm407, %v386, 0
        %v448 = vsel %vm407, %v387, 0
        %v451 = vsel %vm407, %v388, 0
        %v454 = vsel %vm407, %v389, 0
        %v457 = vsel %vm407, %v390, 0
        %v460 = vsel %vm407, %v391, 0
        %v463 = vsel %vm407, %v392, 0
        %v466 = vsel %vm407, %v393, 0
        %v469 = vsel %vm407, %v394, 0
        %v472 = vsel %vm407, %v395, 0
        %v475 = vsel %vm407, %v396, 0
        %v478 = vsel %vm407, %v397, 0
        %v481 = vsel %vm407, %v398, 0
        %v484 = vsel %vm407, %v399, 0
        %v487 = vsel %vm407, %v400, 0
        %v490 = vsel %vm407, %v401, 0
        %v493 = vsel %vm407, %v402, 0
        %v496 = vsel %vm407, %v403, 0
        %v499 = vsel %vm407, %v404, 0
        %v502 = vsel %vm407, %v405, 0
        %vm504 = vcmask 1043456
        %v506 = vsel %vm504, %v406, 0
        %508 = vmatprep.subr.mxu0 0.0
        %509 = vmatpush1.msra.mxu0 %v506
        %510 = vmatprep.subr.mxu0 0.0
        %511 = vmatpush1.msra.mxu0 0.0
        %512 = vmatprep.subr.mxu0 0.0
        %513 = vmatpush1.msra.mxu0 0.0
        %514 = vmatprep.subr.mxu0 0.0
        %515 = vmatpush1.msra.mxu0 0.0
        %516 = vmatprep.subr.mxu0 0.0
        %517 = vmatpush1.msra.mxu0 0.0
        %518 = vmatprep.subr.mxu0 0.0
        %519 = vmatpush1.msra.mxu0 0.0
        %520 = vmatprep.subr.mxu0 0.0
        %521 = vmatpush1.msra.mxu0 0.0
        %522 = vmatprep.subr.mxu0 0.0
        %523 = vmatpush1.msra.mxu0 0.0
        %524 = vmatprep.subr.mxu0 0.0
        %525 = vmatpush1.msra.mxu0 0.0
        %526 = vmatprep.subr.mxu0 0.0
        %527 = vmatpush1.msra.mxu0 0.0
        %528 = vmatprep.subr.mxu0 0.0
        %529 = vmatpush1.msra.mxu0 0.0
        %530 = vmatprep.subr.mxu0 0.0
        %531 = vmatpush1.msra.mxu0 0.0
        %532 = vmatprep.subr.mxu0 0.0
        %533 = vmatpush1.msra.mxu0 0.0
        %534 = vmatprep.subr.mxu0 0.0
        %535 = vmatpush1.msra.mxu0 0.0
        %536 = vmatprep.subr.mxu0 0.0
        %537 = vmatpush1.msra.mxu0 0.0
        %538 = vmatprep.subr.mxu0 0.0
        %539 = vmatpush1.msra.mxu0 0.0
        %540 = vmatprep.subr.mxu0 0.0
        %541 = vmatpush1.msra.mxu0 0.0
        %542 = vmatprep.subr.mxu0 0.0
        %543 = vmatpush1.msra.mxu0 0.0
        %544 = vmatprep.subr.mxu0 0.0
        %545 = vmatpush1.msra.mxu0 0.0
        %546 = vmatprep.subr.mxu0 0.0
        %547 = vmatpush1.msra.mxu0 0.0
        %548 = vmatprep.subr.mxu0 0.0
        %549 = vmatpush1.msra.mxu0 0.0
        %550 = vmatprep.subr.mxu0 0.0
        %551 = vmatpush1.msra.mxu0 0.0
        %552 = vmatprep.subr.mxu0 0.0
        %553 = vmatpush1.msra.mxu0 0.0
        %554 = vmatprep.subr.mxu0 0.0
        %555 = vmatpush1.msra.mxu0 0.0
        %556 = vmatprep.subr.mxu0 0.0
        %557 = vmatpush1.msra.mxu0 0.0
        %558 = vmatprep.subr.mxu0 0.0
        %559 = vmatpush1.msra.mxu0 0.0
        %560 = vmatprep.subr.mxu0 0.0
        %561 = vmatpush1.msra.mxu0 0.0
        %562 = vmatprep.subr.mxu0 0.0
        %563 = vmatpush1.msra.mxu0 0.0
        %564 = vmatprep.subr.mxu0 0.0
        %565 = vmatpush1.msra.mxu0 0.0
        %566 = vmatprep.subr.mxu0 0.0
        %567 = vmatpush1.msra.mxu0 0.0
        %568 = vmatprep.subr.mxu0 0.0
        %569 = vmatpush1.msra.mxu0 0.0
        %570 = vmatprep.subr.mxu0 0.0
        %571 = vmatpush1.msra.mxu0 0.0
        %572 = vmatprep.mubr.f32.mxu0 0.0
        %573 = vmatmul.mubr.f32.gmra.mrb[0].mxu0 %v409
        %v574 = vpop.f32.mrb[0].mxu0
        %v575 = vadd.f32 0.0, %v574
        %v576 = vpop.f32.mrb[0].mxu0
        %577 = vmatprep.mubr.f32.mxu0 0.0
        %578 = vmatmul.mubr.f32.gmra.mrb[0].mxu0 %v412
        %v579 = vpop.f32.mrb[0].mxu0
        %v580 = vadd.f32 0.0, %v579
        %v581 = vpop.f32.mrb[0].mxu0
        %582 = vmatprep.mubr.f32.mxu0 0.0
        %583 = vmatmul.mubr.f32.gmra.mrb[0].mxu0 %v415
        %v584 = vpop.f32.mrb[0].mxu0
        %v585 = vadd.f32 0.0, %v584
        %v586 = vpop.f32.mrb[0].mxu0
        %587 = vmatprep.mubr.f32.mxu0 0.0
        %588 = vmatmul.mubr.f32.gmra.mrb[0].mxu0 %v418
        %v589 = vpop.f32.mrb[0].mxu0
        %v590 = vadd.f32 0.0, %v589
        %v591 = vpop.f32.mrb[0].mxu0
        %592 = vmatprep.mubr.f32.mxu0 0.0
        %593 = vmatmul.mubr.f32.gmra.mrb[0].mxu0 %v421
        %v594 = vpop.f32.mrb[0].mxu0
        %v595 = vadd.f32 0.0, %v594
        %v596 = vpop.f32.mrb[0].mxu0
        %597 = vmatprep.mubr.f32.mxu0 0.0
        %598 = vmatmul.mubr.f32.gmra.mrb[0].mxu0 %v424
        %v599 = vpop.f32.mrb[0].mxu0
        %v600 = vadd.f32 0.0, %v599
        %v601 = vpop.f32.mrb[0].mxu0
        %602 = vmatprep.mubr.f32.mxu0 0.0
        %603 = vmatmul.mubr.f32.gmra.mrb[0].mxu0 %v427
        %v604 = vpop.f32.mrb[0].mxu0
        %v605 = vadd.f32 0.0, %v604
        %v606 = vpop.f32.mrb[0].mxu0
        %607 = vmatprep.mubr.f32.mxu0 0.0
        %608 = vmatmul.mubr.f32.gmra.mrb[0].mxu0 %v430
        %v609 = vpop.f32.mrb[0].mxu0
        %v610 = vadd.f32 0.0, %v609
        %v611 = vpop.f32.mrb[0].mxu0
        %612 = vmatprep.mubr.f32.mxu0 0.0
        %613 = vmatmul.mubr.f32.gmra.mrb[0].mxu0 %v433
        %v614 = vpop.f32.mrb[0].mxu0
        %v615 = vadd.f32 0.0, %v614
        %v616 = vpop.f32.mrb[0].mxu0
        %617 = vmatprep.mubr.f32.mxu0 0.0
        %618 = vmatmul.mubr.f32.gmra.mrb[0].mxu0 %v436
        %v619 = vpop.f32.mrb[0].mxu0
        %v620 = vadd.f32 0.0, %v619
        %v621 = vpop.f32.mrb[0].mxu0
        %622 = vmatprep.mubr.f32.mxu0 0.0
        %623 = vmatmul.mubr.f32.gmra.mrb[0].mxu0 %v439
        %v624 = vpop.f32.mrb[0].mxu0
        %v625 = vadd.f32 0.0, %v624
        %v626 = vpop.f32.mrb[0].mxu0
        %627 = vmatprep.mubr.f32.mxu0 0.0
        %628 = vmatmul.mubr.f32.gmra.mrb[0].mxu0 %v442
        %v629 = vpop.f32.mrb[0].mxu0
        %v630 = vadd.f32 0.0, %v629
        %v631 = vpop.f32.mrb[0].mxu0
        %632 = vmatprep.mubr.f32.mxu0 0.0
        %633 = vmatmul.mubr.f32.gmra.mrb[0].mxu0 %v445
        %v634 = vpop.f32.mrb[0].mxu0
        %v635 = vadd.f32 0.0, %v634
        %v636 = vpop.f32.mrb[0].mxu0
        %637 = vmatprep.mubr.f32.mxu0 0.0
        %638 = vmatmul.mubr.f32.gmra.mrb[0].mxu0 %v448
        %v639 = vpop.f32.mrb[0].mxu0
        %v640 = vadd.f32 0.0, %v639
        %v641 = vpop.f32.mrb[0].mxu0
        %642 = vmatprep.mubr.f32.mxu0 0.0
        %643 = vmatmul.mubr.f32.gmra.mrb[0].mxu0 %v451
        %v644 = vpop.f32.mrb[0].mxu0
        %v645 = vadd.f32 0.0, %v644
        %v646 = vpop.f32.mrb[0].mxu0
        %647 = vmatprep.mubr.f32.mxu0 0.0
        %648 = vmatmul.mubr.f32.gmra.mrb[0].mxu0 %v454
        %v649 = vpop.f32.mrb[0].mxu0
        %v650 = vadd.f32 0.0, %v649
        %v651 = vpop.f32.mrb[0].mxu0
        %652 = vmatprep.mubr.f32.mxu0 0.0
        %653 = vmatmul.mubr.f32.gmra.mrb[0].mxu0 %v457
        %v654 = vpop.f32.mrb[0].mxu0
        %v655 = vadd.f32 0.0, %v654
        %v656 = vpop.f32.mrb[0].mxu0
        %657 = vmatprep.mubr.f32.mxu0 0.0
        %658 = vmatmul.mubr.f32.gmra.mrb[0].mxu0 %v460
        %v659 = vpop.f32.mrb[0].mxu0
        %v660 = vadd.f32 0.0, %v659
        %v661 = vpop.f32.mrb[0].mxu0
        %662 = vmatprep.mubr.f32.mxu0 0.0
        %663 = vmatmul.mubr.f32.gmra.mrb[0].mxu0 %v463
        %v664 = vpop.f32.mrb[0].mxu0
        %v665 = vadd.f32 0.0, %v664
        %v666 = vpop.f32.mrb[0].mxu0
        %667 = vmatprep.mubr.f32.mxu0 0.0
        %668 = vmatmul.mubr.f32.gmra.mrb[0].mxu0 %v466
        %v669 = vpop.f32.mrb[0].mxu0
        %v670 = vadd.f32 0.0, %v669
        %v671 = vpop.f32.mrb[0].mxu0
        %672 = vmatprep.mubr.f32.mxu0 0.0
        %673 = vmatmul.mubr.f32.gmra.mrb[0].mxu0 %v469
        %v674 = vpop.f32.mrb[0].mxu0
        %v675 = vadd.f32 0.0, %v674
        %v676 = vpop.f32.mrb[0].mxu0
        %677 = vmatprep.mubr.f32.mxu0 0.0
        %678 = vmatmul.mubr.f32.gmra.mrb[0].mxu0 %v472
        %v679 = vpop.f32.mrb[0].mxu0
        %v680 = vadd.f32 0.0, %v679
        %v681 = vpop.f32.mrb[0].mxu0
        %682 = vmatprep.mubr.f32.mxu0 0.0
        %683 = vmatmul.mubr.f32.gmra.mrb[0].mxu0 %v475
        %v684 = vpop.f32.mrb[0].mxu0
        %v685 = vadd.f32 0.0, %v684
        %v686 = vpop.f32.mrb[0].mxu0
        %687 = vmatprep.mubr.f32.mxu0 0.0
        %688 = vmatmul.mubr.f32.gmra.mrb[0].mxu0 %v478
        %v689 = vpop.f32.mrb[0].mxu0
        %v690 = vadd.f32 0.0, %v689
        %v691 = vpop.f32.mrb[0].mxu0
        %692 = vmatprep.mubr.f32.mxu0 0.0
        %693 = vmatmul.mubr.f32.gmra.mrb[0].mxu0 %v481
        %v694 = vpop.f32.mrb[0].mxu0
        %v695 = vadd.f32 0.0, %v694
        %v696 = vpop.f32.mrb[0].mxu0
        %697 = vmatprep.mubr.f32.mxu0 0.0
        %698 = vmatmul.mubr.f32.gmra.mrb[0].mxu0 %v484
        %v699 = vpop.f32.mrb[0].mxu0
        %v700 = vadd.f32 0.0, %v699
        %v701 = vpop.f32.mrb[0].mxu0
        %702 = vmatprep.mubr.f32.mxu0 0.0
        %703 = vmatmul.mubr.f32.gmra.mrb[0].mxu0 %v487
        %v704 = vpop.f32.mrb[0].mxu0
        %v705 = vadd.f32 0.0, %v704
        %v706 = vpop.f32.mrb[0].mxu0
        %707 = vmatprep.mubr.f32.mxu0 0.0
        %708 = vmatmul.mubr.f32.gmra.mrb[0].mxu0 %v490
        %v709 = vpop.f32.mrb[0].mxu0
        %v710 = vadd.f32 0.0, %v709
        %v711 = vpop.f32.mrb[0].mxu0
        %712 = vmatprep.mubr.f32.mxu0 0.0
        %713 = vmatmul.mubr.f32.gmra.mrb[0].mxu0 %v493
        %v714 = vpop.f32.mrb[0].mxu0
        %v715 = vadd.f32 0.0, %v714
        %v716 = vpop.f32.mrb[0].mxu0
        %717 = vmatprep.mubr.f32.mxu0 0.0
        %718 = vmatmul.mubr.f32.gmra.mrb[0].mxu0 %v496
        %v719 = vpop.f32.mrb[0].mxu0
        %v720 = vadd.f32 0.0, %v719
        %v721 = vpop.f32.mrb[0].mxu0
        %722 = vmatprep.mubr.f32.mxu0 0.0
        %723 = vmatmul.mubr.f32.gmra.mrb[0].mxu0 %v499
        %v724 = vpop.f32.mrb[0].mxu0
        %v725 = vadd.f32 0.0, %v724
        %v726 = vpop.f32.mrb[0].mxu0
        %727 = vmatprep.mubr.f32.mxu0 0.0
        %728 = vmatmul.mubr.f32.gmra.mrb[0].mxu0 %v502
        %v729 = vpop.f32.mrb[0].mxu0
        %v730 = vadd.f32 0.0, %v729
        %v731 = vpop.f32.mrb[0].mxu0
        %732 = vdwg.mxu0
        %v733 = vld [vmem:[#allocation8] sm:$0x1]
        %v735 = vlaneseq
        %v736 = vshrl.u32 %v735, 7
        %v737 = vsub.s32 0, %v736
        %v738 = vrot.slane %v733, %v737
        %v740 = vmul.f32 %v575, %v738
        %v741 = vmul.f32 %v580, %v738
        %v742 = vmul.f32 %v585, %v738
        %v743 = vmul.f32 %v590, %v738
        %v744 = vmul.f32 %v595, %v738
        %v745 = vmul.f32 %v600, %v738
        %v746 = vmul.f32 %v605, %v738
        %v747 = vmul.f32 %v610, %v738
        %v748 = vmul.f32 %v615, %v738
        %v749 = vmul.f32 %v620, %v738
        %v750 = vmul.f32 %v625, %v738
        %v751 = vmul.f32 %v630, %v738
        %v752 = vmul.f32 %v635, %v738
        %v753 = vmul.f32 %v640, %v738
        %v754 = vmul.f32 %v645, %v738
        %v755 = vmul.f32 %v650, %v738
        %v756 = vmul.f32 %v655, %v738
        %v757 = vmul.f32 %v660, %v738
        %v758 = vmul.f32 %v665, %v738
        %v759 = vmul.f32 %v670, %v738
        %v760 = vmul.f32 %v675, %v738
        %v761 = vmul.f32 %v680, %v738
        %v762 = vmul.f32 %v685, %v738
        %v763 = vmul.f32 %v690, %v738
        %v764 = vmul.f32 %v695, %v738
        %v765 = vmul.f32 %v700, %v738
        %v766 = vmul.f32 %v705, %v738
        %v767 = vmul.f32 %v710, %v738
        %v768 = vmul.f32 %v715, %v738
        %v769 = vmul.f32 %v720, %v738
        %v770 = vmul.f32 %v725, %v738
        %v771 = vmul.f32 %v730, %v738
        %v772 = vld [vmem:[#allocation9] sm:$0x1]
        %v774 = vlaneseq
        %v775 = vshrl.u32 %v774, 7
        %v776 = vsub.s32 0, %v775
        %v777 = vrot.slane %v772, %v776
        %v779 = vadd.f32 %v740, %v777
        %v780 = vadd.f32 %v741, %v777
        %v781 = vadd.f32 %v742, %v777
        %v782 = vadd.f32 %v743, %v777
        %v783 = vadd.f32 %v744, %v777
        %v784 = vadd.f32 %v745, %v777
        %v785 = vadd.f32 %v746, %v777
        %v786 = vadd.f32 %v747, %v777
        %v787 = vadd.f32 %v748, %v777
        %v788 = vadd.f32 %v749, %v777
        %v789 = vadd.f32 %v750, %v777
        %v790 = vadd.f32 %v751, %v777
        %v791 = vadd.f32 %v752, %v777
        %v792 = vadd.f32 %v753, %v777
        %v793 = vadd.f32 %v754, %v777
        %v794 = vadd.f32 %v755, %v777
        %v795 = vadd.f32 %v756, %v777
        %v796 = vadd.f32 %v757, %v777
        %v797 = vadd.f32 %v758, %v777
        %v798 = vadd.f32 %v759, %v777
        %v799 = vadd.f32 %v760, %v777
        %v800 = vadd.f32 %v761, %v777
        %v801 = vadd.f32 %v762, %v777
        %v802 = vadd.f32 %v763, %v777
        %v803 = vadd.f32 %v764, %v777
        %v804 = vadd.f32 %v765, %v777
        %v805 = vadd.f32 %v766, %v777
        %v806 = vadd.f32 %v767, %v777
        %v807 = vadd.f32 %v768, %v777
        %v808 = vadd.f32 %v769, %v777
        %v809 = vadd.f32 %v770, %v777
        %v810 = vadd.f32 %v771, %v777
        %v811 = vxor.u32 %v779, 2147483648
        %v812 = vxor.u32 %v780, 2147483648
        %v813 = vxor.u32 %v781, 2147483648
        %v814 = vxor.u32 %v782, 2147483648
        %v815 = vxor.u32 %v783, 2147483648
        %v816 = vxor.u32 %v784, 2147483648
        %v817 = vxor.u32 %v785, 2147483648
        %v818 = vxor.u32 %v786, 2147483648
        %v819 = vxor.u32 %v787, 2147483648
        %v820 = vxor.u32 %v788, 2147483648
        %v821 = vxor.u32 %v789, 2147483648
        %v822 = vxor.u32 %v790, 2147483648
        %v823 = vxor.u32 %v791, 2147483648
        %v824 = vxor.u32 %v792, 2147483648
        %v825 = vxor.u32 %v793, 2147483648
        %v826 = vxor.u32 %v794, 2147483648
        %v827 = vxor.u32 %v795, 2147483648
        %v828 = vxor.u32 %v796, 2147483648
        %v829 = vxor.u32 %v797, 2147483648
        %v830 = vxor.u32 %v798, 2147483648
        %v831 = vxor.u32 %v799, 2147483648
        %v832 = vxor.u32 %v800, 2147483648
        %v833 = vxor.u32 %v801, 2147483648
        %v834 = vxor.u32 %v802, 2147483648
        %v835 = vxor.u32 %v803, 2147483648
        %v836 = vxor.u32 %v804, 2147483648
        %v837 = vxor.u32 %v805, 2147483648
        %v838 = vxor.u32 %v806, 2147483648
        %v839 = vxor.u32 %v807, 2147483648
        %v840 = vxor.u32 %v808, 2147483648
        %v841 = vxor.u32 %v809, 2147483648
        %v842 = vxor.u32 %v810, 2147483648
        %v843 = vmul.f32 %v811, 1.442695
        %v844 = vpow.pop %v843
        %v845 = vmul.f32 %v812, 1.442695
        %v846 = vpow.pop %v845
        %v847 = vmul.f32 %v813, 1.442695
        %v848 = vpow.pop %v847
        %v849 = vmul.f32 %v814, 1.442695
        %v850 = vpow.pop %v849
        %v851 = vmul.f32 %v815, 1.442695
        %v852 = vpow.pop %v851
        %v853 = vmul.f32 %v816, 1.442695
        %v854 = vpow.pop %v853
        %v855 = vmul.f32 %v817, 1.442695
        %v856 = vpow.pop %v855
        %v857 = vmul.f32 %v818, 1.442695
        %v858 = vpow.pop %v857
        %v859 = vmul.f32 %v819, 1.442695
        %v860 = vpow.pop %v859
        %v861 = vmul.f32 %v820, 1.442695
        %v862 = vpow.pop %v861
        %v863 = vmul.f32 %v821, 1.442695
        %v864 = vpow.pop %v863
        %v865 = vmul.f32 %v822, 1.442695
        %v866 = vpow.pop %v865
        %v867 = vmul.f32 %v823, 1.442695
        %v868 = vpow.pop %v867
        %v869 = vmul.f32 %v824, 1.442695
        %v870 = vpow.pop %v869
        %v871 = vmul.f32 %v825, 1.442695
        %v872 = vpow.pop %v871
        %v873 = vmul.f32 %v826, 1.442695
        %v874 = vpow.pop %v873
        %v875 = vmul.f32 %v827, 1.442695
        %v876 = vpow.pop %v875
        %v877 = vmul.f32 %v828, 1.442695
        %v878 = vpow.pop %v877
        %v879 = vmul.f32 %v829, 1.442695
        %v880 = vpow.pop %v879
        %v881 = vmul.f32 %v830, 1.442695
        %v882 = vpow.pop %v881
        %v883 = vmul.f32 %v831, 1.442695
        %v884 = vpow.pop %v883
        %v885 = vmul.f32 %v832, 1.442695
        %v886 = vpow.pop %v885
        %v887 = vmul.f32 %v833, 1.442695
        %v888 = vpow.pop %v887
        %v889 = vmul.f32 %v834, 1.442695
        %v890 = vpow.pop %v889
        %v891 = vmul.f32 %v835, 1.442695
        %v892 = vpow.pop %v891
        %v893 = vmul.f32 %v836, 1.442695
        %v894 = vpow.pop %v893
        %v895 = vmul.f32 %v837, 1.442695
        %v896 = vpow.pop %v895
        %v897 = vmul.f32 %v838, 1.442695
        %v898 = vpow.pop %v897
        %v899 = vmul.f32 %v839, 1.442695
        %v900 = vpow.pop %v899
        %v901 = vmul.f32 %v840, 1.442695
        %v902 = vpow.pop %v901
        %v903 = vmul.f32 %v841, 1.442695
        %v904 = vpow.pop %v903
        %v905 = vmul.f32 %v842, 1.442695
        %v906 = vpow.pop %v905
        %v907 = vadd.f32 %v844, 1.0
        %v908 = vadd.f32 %v846, 1.0
        %v909 = vadd.f32 %v848, 1.0
        %v910 = vadd.f32 %v850, 1.0
        %v911 = vadd.f32 %v852, 1.0
        %v912 = vadd.f32 %v854, 1.0
        %v913 = vadd.f32 %v856, 1.0
        %v914 = vadd.f32 %v858, 1.0
        %v915 = vadd.f32 %v860, 1.0
        %v916 = vadd.f32 %v862, 1.0
        %v917 = vadd.f32 %v864, 1.0
        %v918 = vadd.f32 %v866, 1.0
        %v919 = vadd.f32 %v868, 1.0
        %v920 = vadd.f32 %v870, 1.0
        %v921 = vadd.f32 %v872, 1.0
        %v922 = vadd.f32 %v874, 1.0
        %v923 = vadd.f32 %v876, 1.0
        %v924 = vadd.f32 %v878, 1.0
        %v925 = vadd.f32 %v880, 1.0
        %v926 = vadd.f32 %v882, 1.0
        %v927 = vadd.f32 %v884, 1.0
        %v928 = vadd.f32 %v886, 1.0
        %v929 = vadd.f32 %v888, 1.0
        %v930 = vadd.f32 %v890, 1.0
        %v931 = vadd.f32 %v892, 1.0
        %v932 = vadd.f32 %v894, 1.0
        %v933 = vadd.f32 %v896, 1.0
        %v934 = vadd.f32 %v898, 1.0
        %v935 = vadd.f32 %v900, 1.0
        %v936 = vadd.f32 %v902, 1.0
        %v937 = vadd.f32 %v904, 1.0
        %v938 = vadd.f32 %v906, 1.0
        %v939 = vrcp.pop %v907
        %v940 = vmul.f32 1.0, %v939
        %v941 = vrcp.pop %v908
        %v942 = vmul.f32 1.0, %v941
        %v943 = vrcp.pop %v909
        %v944 = vmul.f32 1.0, %v943
        %v945 = vrcp.pop %v910
        %v946 = vmul.f32 1.0, %v945
        %v947 = vrcp.pop %v911
        %v948 = vmul.f32 1.0, %v947
        %v949 = vrcp.pop %v912
        %v950 = vmul.f32 1.0, %v949
        %v951 = vrcp.pop %v913
        %v952 = vmul.f32 1.0, %v951
        %v953 = vrcp.pop %v914
        %v954 = vmul.f32 1.0, %v953
        %v955 = vrcp.pop %v915
        %v956 = vmul.f32 1.0, %v955
        %v957 = vrcp.pop %v916
        %v958 = vmul.f32 1.0, %v957
        %v959 = vrcp.pop %v917
        %v960 = vmul.f32 1.0, %v959
        %v961 = vrcp.pop %v918
        %v962 = vmul.f32 1.0, %v961
        %v963 = vrcp.pop %v919
        %v964 = vmul.f32 1.0, %v963
        %v965 = vrcp.pop %v920
        %v966 = vmul.f32 1.0, %v965
        %v967 = vrcp.pop %v921
        %v968 = vmul.f32 1.0, %v967
        %v969 = vrcp.pop %v922
        %v970 = vmul.f32 1.0, %v969
        %v971 = vrcp.pop %v923
        %v972 = vmul.f32 1.0, %v971
        %v973 = vrcp.pop %v924
        %v974 = vmul.f32 1.0, %v973
        %v975 = vrcp.pop %v925
        %v976 = vmul.f32 1.0, %v975
        %v977 = vrcp.pop %v926
        %v978 = vmul.f32 1.0, %v977
        %v979 = vrcp.pop %v927
        %v980 = vmul.f32 1.0, %v979
        %v981 = vrcp.pop %v928
        %v982 = vmul.f32 1.0, %v981
        %v983 = vrcp.pop %v929
        %v984 = vmul.f32 1.0, %v983
        %v985 = vrcp.pop %v930
        %v986 = vmul.f32 1.0, %v985
        %v987 = vrcp.pop %v931
        %v988 = vmul.f32 1.0, %v987
        %v989 = vrcp.pop %v932
        %v990 = vmul.f32 1.0, %v989
        %v991 = vrcp.pop %v933
        %v992 = vmul.f32 1.0, %v991
        %v993 = vrcp.pop %v934
        %v994 = vmul.f32 1.0, %v993
        %v995 = vrcp.pop %v935
        %v996 = vmul.f32 1.0, %v995
        %v997 = vrcp.pop %v936
        %v998 = vmul.f32 1.0, %v997
        %v999 = vrcp.pop %v937
        %v1000 = vmul.f32 1.0, %v999
        %v1001 = vrcp.pop %v938
        %v1002 = vmul.f32 1.0, %v1001
        %v1003 = vmul.f32 %v779, %v940
        %v1004 = vmul.f32 %v780, %v942
        %v1005 = vmul.f32 %v781, %v944
        %v1006 = vmul.f32 %v782, %v946
        %v1007 = vmul.f32 %v783, %v948
        %v1008 = vmul.f32 %v784, %v950
        %v1009 = vmul.f32 %v785, %v952
        %v1010 = vmul.f32 %v786, %v954
        %v1011 = vmul.f32 %v787, %v956
        %v1012 = vmul.f32 %v788, %v958
        %v1013 = vmul.f32 %v789, %v960
        %v1014 = vmul.f32 %v790, %v962
        %v1015 = vmul.f32 %v791, %v964
        %v1016 = vmul.f32 %v792, %v966
        %v1017 = vmul.f32 %v793, %v968
        %v1018 = vmul.f32 %v794, %v970
        %v1019 = vmul.f32 %v795, %v972
        %v1020 = vmul.f32 %v796, %v974
        %v1021 = vmul.f32 %v797, %v976
        %v1022 = vmul.f32 %v798, %v978
        %v1023 = vmul.f32 %v799, %v980
        %v1024 = vmul.f32 %v800, %v982
        %v1025 = vmul.f32 %v801, %v984
        %v1026 = vmul.f32 %v802, %v986
        %v1027 = vmul.f32 %v803, %v988
        %v1028 = vmul.f32 %v804, %v990
        %v1029 = vmul.f32 %v805, %v992
        %v1030 = vmul.f32 %v806, %v994
        %v1031 = vmul.f32 %v807, %v996
        %v1032 = vmul.f32 %v808, %v998
        %v1033 = vmul.f32 %v809, %v1000
        %v1034 = vmul.f32 %v810, %v1002
        %1035 = vst.msk [vmem:[%s373] sm:$0xff] %vm407, %v1003
        %1036 = vst.msk [vmem:[%s373 + $0x8] sm:$0xff] %vm407, %v1004
        %1037 = vst.msk [vmem:[%s373 + $0x10] sm:$0xff] %vm407, %v1005
        %1038 = vst.msk [vmem:[%s373 + $0x18] sm:$0xff] %vm407, %v1006
        %1039 = vst.msk [vmem:[%s373 + $0x20] sm:$0xff] %vm407, %v1007
        %1040 = vst.msk [vmem:[%s373 + $0x28] sm:$0xff] %vm407, %v1008
        %1041 = vst.msk [vmem:[%s373 + $0x30] sm:$0xff] %vm407, %v1009
        %1042 = vst.msk [vmem:[%s373 + $0x38] sm:$0xff] %vm407, %v1010
        %1043 = vst.msk [vmem:[%s373 + $0x40] sm:$0xff] %vm407, %v1011
        %1044 = vst.msk [vmem:[%s373 + $0x48] sm:$0xff] %vm407, %v1012
        %1045 = vst.msk [vmem:[%s373 + $0x50] sm:$0xff] %vm407, %v1013
        %1046 = vst.msk [vmem:[%s373 + $0x58] sm:$0xff] %vm407, %v1014
        %1047 = vst.msk [vmem:[%s373 + $0x60] sm:$0xff] %vm407, %v1015
        %1048 = vst.msk [vmem:[%s373 + $0x68] sm:$0xff] %vm407, %v1016
        %1049 = vst.msk [vmem:[%s373 + $0x70] sm:$0xff] %vm407, %v1017
        %1050 = vst.msk [vmem:[%s373 + $0x78] sm:$0xff] %vm407, %v1018
        %1051 = vst.msk [vmem:[%s373 + $0x80] sm:$0xff] %vm407, %v1019
        %1052 = vst.msk [vmem:[%s373 + $0x88] sm:$0xff] %vm407, %v1020
        %1053 = vst.msk [vmem:[%s373 + $0x90] sm:$0xff] %vm407, %v1021
        %1054 = vst.msk [vmem:[%s373 + $0x98] sm:$0xff] %vm407, %v1022
        %1055 = vst.msk [vmem:[%s373 + $0xa0] sm:$0xff] %vm407, %v1023
        %1056 = vst.msk [vmem:[%s373 + $0xa8] sm:$0xff] %vm407, %v1024
        %1057 = vst.msk [vmem:[%s373 + $0xb0] sm:$0xff] %vm407, %v1025
        %1058 = vst.msk [vmem:[%s373 + $0xb8] sm:$0xff] %vm407, %v1026
        %1059 = vst.msk [vmem:[%s373 + $0xc0] sm:$0xff] %vm407, %v1027
        %1060 = vst.msk [vmem:[%s373 + $0xc8] sm:$0xff] %vm407, %v1028
        %1061 = vst.msk [vmem:[%s373 + $0xd0] sm:$0xff] %vm407, %v1029
        %1062 = vst.msk [vmem:[%s373 + $0xd8] sm:$0xff] %vm407, %v1030
        %1063 = vst.msk [vmem:[%s373 + $0xe0] sm:$0xff] %vm407, %v1031
        %1064 = vst.msk [vmem:[%s373 + $0xe8] sm:$0xff] %vm407, %v1032
        %1065 = vst.msk [vmem:[%s373 + $0xf0] sm:$0xff] %vm407, %v1033
        %1066 = vst.msk [vmem:[%s373 + $0xf8] sm:$0xff] %vm407, %v1034
        %1067 = vst.msk [vmem:[#allocation2] sm:$0xff] %vm407, 0.0
        %1068 = vst.msk [vmem:[#allocation2 + $0x8] sm:$0xff] %vm407, 0.0
        %vm1069 = vcmask 27648
        %1070 = vst.msk [vmem:[#allocation2 + $0x10] sm:$0xf] %vm1069, 0.0
        %1071 = vst.msk [vmem:[#allocation2 + $0x18] sm:$0xff] %vm407, 0.0
        %1072 = vst.msk [vmem:[#allocation2 + $0x20] sm:$0xff] %vm407, 0.0
        %1073 = vst.msk [vmem:[#allocation2 + $0x28] sm:$0xf] %vm1069, 0.0
        %1074 = vst.msk [vmem:[#allocation2 + $0x30] sm:$0xff] %vm407, 0.0
        %1075 = vst.msk [vmem:[#allocation2 + $0x38] sm:$0xff] %vm407, 0.0
        %1076 = vst.msk [vmem:[#allocation2 + $0x40] sm:$0xf] %vm1069, 0.0
        %1077 = vst.msk [vmem:[#allocation2 + $0x48] sm:$0xff] %vm407, 0.0
        %1078 = vst.msk [vmem:[#allocation2 + $0x50] sm:$0xff] %vm407, 0.0
        %1079 = vst.msk [vmem:[#allocation2 + $0x58] sm:$0xf] %vm1069, 0.0
        %1080 = vst.msk [vmem:[#allocation2 + $0x60] sm:$0xff] %vm407, 0.0
        %1081 = vst.msk [vmem:[#allocation2 + $0x68] sm:$0xff] %vm407, 0.0
        %1082 = vst.msk [vmem:[#allocation2 + $0x70] sm:$0xf] %vm1069, 0.0
        %1083 = vst.msk [vmem:[#allocation2 + $0x78] sm:$0xff] %vm407, 0.0
        %1084 = vst.msk [vmem:[#allocation2 + $0x80] sm:$0xff] %vm407, 0.0
        %1085 = vst.msk [vmem:[#allocation2 + $0x88] sm:$0xf] %vm1069, 0.0
        %1086 = vst.msk [vmem:[#allocation2 + $0x90] sm:$0xff] %vm407, 0.0
        %1087 = vst.msk [vmem:[#allocation2 + $0x98] sm:$0xff] %vm407, 0.0
        %1088 = vst.msk [vmem:[#allocation2 + $0xa0] sm:$0xf] %vm1069, 0.0
        %1089 = vst.msk [vmem:[#allocation2 + $0xa8] sm:$0xff] %vm407, 0.0
        %1090 = vst.msk [vmem:[#allocation2 + $0xb0] sm:$0xff] %vm407, 0.0
        %1091 = vst.msk [vmem:[#allocation2 + $0xb8] sm:$0xf] %vm1069, 0.0
        %1092 = vst.msk [vmem:[#allocation2 + $0xc0] sm:$0xff] %vm407, 0.0
        %1093 = vst.msk [vmem:[#allocation2 + $0xc8] sm:$0xff] %vm407, 0.0
        %1094 = vst.msk [vmem:[#allocation2 + $0xd0] sm:$0xf] %vm1069, 0.0
        %1095 = vst.msk [vmem:[#allocation2 + $0xd8] sm:$0xff] %vm407, 0.0
        %1096 = vst.msk [vmem:[#allocation2 + $0xe0] sm:$0xff] %vm407, 0.0
        %1097 = vst.msk [vmem:[#allocation2 + $0xe8] sm:$0xf] %vm1069, 0.0
        %1098 = vst.msk [vmem:[#allocation2 + $0xf0] sm:$0xff] %vm407, 0.0
        %1099 = vst.msk [vmem:[#allocation2 + $0xf8] sm:$0xff] %vm407, 0.0
        %1100 = vst.msk [vmem:[#allocation2 + $0x100] sm:$0xf] %vm1069, 0.0
        %1101 = vst.msk [vmem:[#allocation2 + $0x108] sm:$0xff] %vm407, 0.0
        %1102 = vst.msk [vmem:[#allocation2 + $0x110] sm:$0xff] %vm407, 0.0
        %1103 = vst.msk [vmem:[#allocation2 + $0x118] sm:$0xf] %vm1069, 0.0
        %1104 = vst.msk [vmem:[#allocation2 + $0x120] sm:$0xff] %vm407, 0.0
        %1105 = vst.msk [vmem:[#allocation2 + $0x128] sm:$0xff] %vm407, 0.0
        %1106 = vst.msk [vmem:[#allocation2 + $0x130] sm:$0xf] %vm1069, 0.0
        %1107 = vst.msk [vmem:[#allocation2 + $0x138] sm:$0xff] %vm407, 0.0
        %1108 = vst.msk [vmem:[#allocation2 + $0x140] sm:$0xff] %vm407, 0.0
        %1109 = vst.msk [vmem:[#allocation2 + $0x148] sm:$0xf] %vm1069, 0.0
        %1110 = vst.msk [vmem:[#allocation2 + $0x150] sm:$0xff] %vm407, 0.0
        %1111 = vst.msk [vmem:[#allocation2 + $0x158] sm:$0xff] %vm407, 0.0
        %1112 = vst.msk [vmem:[#allocation2 + $0x160] sm:$0xf] %vm1069, 0.0
        %1113 = vst.msk [vmem:[#allocation2 + $0x168] sm:$0xff] %vm407, 0.0
        %1114 = vst.msk [vmem:[#allocation2 + $0x170] sm:$0xff] %vm407, 0.0
        %1115 = vst.msk [vmem:[#allocation2 + $0x178] sm:$0xf] %vm1069, 0.0
        %1116 = vst.msk [vmem:[#allocation2 + $0x180] sm:$0xff] %vm407, 0.0
        %1117 = vst.msk [vmem:[#allocation2 + $0x188] sm:$0xff] %vm407, 0.0
        %1118 = vst.msk [vmem:[#allocation2 + $0x190] sm:$0xf] %vm1069, 0.0
        %1119 = vst.msk [vmem:[#allocation2 + $0x198] sm:$0xff] %vm407, 0.0
        %1120 = vst.msk [vmem:[#allocation2 + $0x1a0] sm:$0xff] %vm407, 0.0
        %1121 = vst.msk [vmem:[#allocation2 + $0x1a8] sm:$0xf] %vm1069, 0.0
        %1122 = vst.msk [vmem:[#allocation2 + $0x1b0] sm:$0xff] %vm407, 0.0
        %1123 = vst.msk [vmem:[#allocation2 + $0x1b8] sm:$0xff] %vm407, 0.0
        %1124 = vst.msk [vmem:[#allocation2 + $0x1c0] sm:$0xf] %vm1069, 0.0
        %1125 = vst.msk [vmem:[#allocation2 + $0x1c8] sm:$0xff] %vm407, 0.0
        %1126 = vst.msk [vmem:[#allocation2 + $0x1d0] sm:$0xff] %vm407, 0.0
        %1127 = vst.msk [vmem:[#allocation2 + $0x1d8] sm:$0xf] %vm1069, 0.0
        %s1128 = scalar_lea.vmem [#allocation2], 48
        %1129 = vst.msk [vmem:[%s1128 + $0x2] sm:$0xff] %vm407, %v1003
        %1130 = vst.msk [vmem:[%s1128 + $0xa] sm:$0xff] %vm407, %v1004
        %1131 = vst.msk [vmem:[%s1128 + $0x1a] sm:$0xff] %vm407, %v1005
        %1132 = vst.msk [vmem:[%s1128 + $0x22] sm:$0xff] %vm407, %v1006
        %1133 = vst.msk [vmem:[%s1128 + $0x32] sm:$0xff] %vm407, %v1007
        %1134 = vst.msk [vmem:[%s1128 + $0x3a] sm:$0xff] %vm407, %v1008
        %1135 = vst.msk [vmem:[%s1128 + $0x4a] sm:$0xff] %vm407, %v1009
        %1136 = vst.msk [vmem:[%s1128 + $0x52] sm:$0xff] %vm407, %v1010
        %1137 = vst.msk [vmem:[%s1128 + $0x62] sm:$0xff] %vm407, %v1011
        %1138 = vst.msk [vmem:[%s1128 + $0x6a] sm:$0xff] %vm407, %v1012
        %1139 = vst.msk [vmem:[%s1128 + $0x7a] sm:$0xff] %vm407, %v1013
        %1140 = vst.msk [vmem:[%s1128 + $0x82] sm:$0xff] %vm407, %v1014
        %1141 = vst.msk [vmem:[%s1128 + $0x92] sm:$0xff] %vm407, %v1015
        %1142 = vst.msk [vmem:[%s1128 + $0x9a] sm:$0xff] %vm407, %v1016
        %1143 = vst.msk [vmem:[%s1128 + $0xaa] sm:$0xff] %vm407, %v1017
        %1144 = vst.msk [vmem:[%s1128 + $0xb2] sm:$0xff] %vm407, %v1018
        %1145 = vst.msk [vmem:[%s1128 + $0xc2] sm:$0xff] %vm407, %v1019
        %1146 = vst.msk [vmem:[%s1128 + $0xca] sm:$0xff] %vm407, %v1020
        %1147 = vst.msk [vmem:[%s1128 + $0xda] sm:$0xff] %vm407, %v1021
        %1148 = vst.msk [vmem:[%s1128 + $0xe2] sm:$0xff] %vm407, %v1022
        %1149 = vst.msk [vmem:[%s1128 + $0xf2] sm:$0xff] %vm407, %v1023
        %1150 = vst.msk [vmem:[%s1128 + $0xfa] sm:$0xff] %vm407, %v1024
        %1151 = vst.msk [vmem:[%s1128 + $0x10a] sm:$0xff] %vm407, %v1025
        %1152 = vst.msk [vmem:[%s1128 + $0x112] sm:$0xff] %vm407, %v1026
        %1153 = vst.msk [vmem:[%s1128 + $0x122] sm:$0xff] %vm407, %v1027
        %1154 = vst.msk [vmem:[%s1128 + $0x12a] sm:$0xff] %vm407, %v1028
        %1155 = vst.msk [vmem:[%s1128 + $0x13a] sm:$0xff] %vm407, %v1029
        %1156 = vst.msk [vmem:[%s1128 + $0x142] sm:$0xff] %vm407, %v1030
        %1157 = vst.msk [vmem:[%s1128 + $0x152] sm:$0xff] %vm407, %v1031
        %1158 = vst.msk [vmem:[%s1128 + $0x15a] sm:$0xff] %vm407, %v1032
        %1159 = vst.msk [vmem:[%s1128 + $0x16a] sm:$0xff] %vm407, %v1033
        %1160 = vst.msk [vmem:[%s1128 + $0x172] sm:$0xff] %vm407, %v1034
        %v1161 = vld [vmem:[#allocation11] sm:$0xff]
        %v1162 = vld [vmem:[#allocation11 + $0x8] sm:$0xff]
        %v1163 = vld [vmem:[#allocation11 + $0x10] sm:$0xff]
        %v1164 = vld [vmem:[#allocation11 + $0x18] sm:$0x1]
        %v1165 = vld [vmem:[#allocation2] sm:$0xff]
        %v1166 = vld [vmem:[#allocation2 + $0x8] sm:$0xff]
        %v1167 = vld [vmem:[#allocation2 + $0x18] sm:$0xff]
        %v1168 = vld [vmem:[#allocation2 + $0x20] sm:$0xff]
        %v1169 = vld [vmem:[#allocation2 + $0x30] sm:$0xff]
        %v1170 = vld [vmem:[#allocation2 + $0x38] sm:$0xff]
        %v1171 = vld [vmem:[#allocation2 + $0x48] sm:$0xff]
        %v1172 = vld [vmem:[#allocation2 + $0x50] sm:$0xff]
        %v1173 = vld [vmem:[#allocation2 + $0x60] sm:$0xff]
        %v1174 = vld [vmem:[#allocation2 + $0x68] sm:$0xff]
        %v1175 = vld [vmem:[#allocation2 + $0x78] sm:$0xff]
        %v1176 = vld [vmem:[#allocation2 + $0x80] sm:$0xff]
        %v1177 = vld [vmem:[#allocation2 + $0x90] sm:$0xff]
        %v1178 = vld [vmem:[#allocation2 + $0x98] sm:$0xff]
        %v1179 = vld [vmem:[#allocation2 + $0xa8] sm:$0xff]
        %v1180 = vld [vmem:[#allocation2 + $0xb0] sm:$0xff]
        %v1181 = vld [vmem:[#allocation2 + $0xc0] sm:$0xff]
        %v1182 = vld [vmem:[#allocation2 + $0xc8] sm:$0xff]
        %v1183 = vld [vmem:[#allocation2 + $0xd8] sm:$0xff]
        %v1184 = vld [vmem:[#allocation2 + $0xe0] sm:$0xff]
        %v1185 = vld [vmem:[#allocation2 + $0xf0] sm:$0xff]
        %v1186 = vld [vmem:[#allocation2 + $0xf8] sm:$0xff]
        %v1187 = vld [vmem:[#allocation2 + $0x108] sm:$0xff]
        %v1188 = vld [vmem:[#allocation2 + $0x110] sm:$0xff]
        %v1189 = vld [vmem:[#allocation2 + $0x120] sm:$0xff]
        %v1190 = vld [vmem:[#allocation2 + $0x128] sm:$0xff]
        %v1191 = vld [vmem:[#allocation2 + $0x138] sm:$0xff]
        %v1192 = vld [vmem:[#allocation2 + $0x140] sm:$0xff]
        %v1193 = vld [vmem:[#allocation2 + $0x150] sm:$0xff]
        %v1194 = vld [vmem:[#allocation2 + $0x158] sm:$0xff]
        %v1195 = vld [vmem:[#allocation2 + $0x168] sm:$0xff]
        %v1196 = vld [vmem:[#allocation2 + $0x170] sm:$0xff]
        %v1197 = vlaneseq
        %v1198 = vshrl.u32 %v1197, 7
        %v1199 = vsub.s32 0, %v1198
        %v1200 = vrot.slane %v1161, %v1199
        %v1201 = vmul.f32 %v1165, %v1200
        %v1202 = vmul.f32 %v1166, %v1200
        %v1203 = vmul.f32 %v1167, %v1200
        %v1204 = vmul.f32 %v1168, %v1200
        %v1205 = vmul.f32 %v1169, %v1200
        %v1206 = vmul.f32 %v1170, %v1200
        %v1207 = vmul.f32 %v1171, %v1200
        %v1208 = vmul.f32 %v1172, %v1200
        %v1209 = vmul.f32 %v1173, %v1200
        %v1210 = vmul.f32 %v1174, %v1200
        %v1211 = vmul.f32 %v1175, %v1200
        %v1212 = vmul.f32 %v1176, %v1200
        %v1213 = vmul.f32 %v1177, %v1200
        %v1214 = vmul.f32 %v1178, %v1200
        %v1215 = vmul.f32 %v1179, %v1200
        %v1216 = vmul.f32 %v1180, %v1200
        %v1217 = vmul.f32 %v1181, %v1200
        %v1218 = vmul.f32 %v1182, %v1200
        %v1219 = vmul.f32 %v1183, %v1200
        %v1220 = vmul.f32 %v1184, %v1200
        %v1221 = vmul.f32 %v1185, %v1200
        %v1222 = vmul.f32 %v1186, %v1200
        %v1223 = vmul.f32 %v1187, %v1200
        %v1224 = vmul.f32 %v1188, %v1200
        %v1225 = vmul.f32 %v1189, %v1200
        %v1226 = vmul.f32 %v1190, %v1200
        %v1227 = vmul.f32 %v1191, %v1200
        %v1228 = vmul.f32 %v1192, %v1200
        %v1229 = vmul.f32 %v1193, %v1200
        %v1230 = vmul.f32 %v1194, %v1200
        %v1231 = vmul.f32 %v1195, %v1200
        %v1232 = vmul.f32 %v1196, %v1200
        %v1233 = vadd.f32 %v1201, 0.0
        %v1234 = vadd.f32 %v1202, 0.0
        %v1235 = vadd.f32 %v1203, 0.0
        %v1236 = vadd.f32 %v1204, 0.0
        %v1237 = vadd.f32 %v1205, 0.0
        %v1238 = vadd.f32 %v1206, 0.0
        %v1239 = vadd.f32 %v1207, 0.0
        %v1240 = vadd.f32 %v1208, 0.0
        %v1241 = vadd.f32 %v1209, 0.0
        %v1242 = vadd.f32 %v1210, 0.0
        %v1243 = vadd.f32 %v1211, 0.0
        %v1244 = vadd.f32 %v1212, 0.0
        %v1245 = vadd.f32 %v1213, 0.0
        %v1246 = vadd.f32 %v1214, 0.0
        %v1247 = vadd.f32 %v1215, 0.0
        %v1248 = vadd.f32 %v1216, 0.0
        %v1249 = vadd.f32 %v1217, 0.0
        %v1250 = vadd.f32 %v1218, 0.0
        %v1251 = vadd.f32 %v1219, 0.0
        %v1252 = vadd.f32 %v1220, 0.0
        %v1253 = vadd.f32 %v1221, 0.0
        %v1254 = vadd.f32 %v1222, 0.0
        %v1255 = vadd.f32 %v1223, 0.0
        %v1256 = vadd.f32 %v1224, 0.0
        %v1257 = vadd.f32 %v1225, 0.0
        %v1258 = vadd.f32 %v1226, 0.0
        %v1259 = vadd.f32 %v1227, 0.0
        %v1260 = vadd.f32 %v1228, 0.0
        %v1261 = vadd.f32 %v1229, 0.0
        %v1262 = vadd.f32 %v1230, 0.0
        %v1263 = vadd.f32 %v1231, 0.0
        %v1264 = vadd.f32 %v1232, 0.0
        %v1265 = vld [vmem:[#allocation2 + $0x1] sm:$0xff]
        %v1266 = vld [vmem:[#allocation2 + $0x9] sm:$0xff]
        %v1267 = vld [vmem:[#allocation2 + $0x19] sm:$0xff]
        %v1268 = vld [vmem:[#allocation2 + $0x21] sm:$0xff]
        %v1269 = vld [vmem:[#allocation2 + $0x31] sm:$0xff]
        %v1270 = vld [vmem:[#allocation2 + $0x39] sm:$0xff]
        %v1271 = vld [vmem:[#allocation2 + $0x49] sm:$0xff]
        %v1272 = vld [vmem:[#allocation2 + $0x51] sm:$0xff]
        %v1273 = vld [vmem:[#allocation2 + $0x61] sm:$0xff]
        %v1274 = vld [vmem:[#allocation2 + $0x69] sm:$0xff]
        %v1275 = vld [vmem:[#allocation2 + $0x79] sm:$0xff]
        %v1276 = vld [vmem:[#allocation2 + $0x81] sm:$0xff]
        %v1277 = vld [vmem:[#allocation2 + $0x91] sm:$0xff]
        %v1278 = vld [vmem:[#allocation2 + $0x99] sm:$0xff]
        %v1279 = vld [vmem:[#allocation2 + $0xa9] sm:$0xff]
        %v1280 = vld [vmem:[#allocation2 + $0xb1] sm:$0xff]
        %v1281 = vld [vmem:[#allocation2 + $0xc1] sm:$0xff]
        %v1282 = vld [vmem:[#allocation2 + $0xc9] sm:$0xff]
        %v1283 = vld [vmem:[#allocation2 + $0xd9] sm:$0xff]
        %v1284 = vld [vmem:[#allocation2 + $0xe1] sm:$0xff]
        %v1285 = vld [vmem:[#allocation2 + $0xf1] sm:$0xff]
        %v1286 = vld [vmem:[#allocation2 + $0xf9] sm:$0xff]
        %v1287 = vld [vmem:[#allocation2 + $0x109] sm:$0xff]
        %v1288 = vld [vmem:[#allocation2 + $0x111] sm:$0xff]
        %v1289 = vld [vmem:[#allocation2 + $0x121] sm:$0xff]
        %v1290 = vld [vmem:[#allocation2 + $0x129] sm:$0xff]
        %v1291 = vld [vmem:[#allocation2 + $0x139] sm:$0xff]
        %v1292 = vld [vmem:[#allocation2 + $0x141] sm:$0xff]
        %v1293 = vld [vmem:[#allocation2 + $0x151] sm:$0xff]
        %v1294 = vld [vmem:[#allocation2 + $0x159] sm:$0xff]
        %v1295 = vld [vmem:[#allocation2 + $0x169] sm:$0xff]
        %v1296 = vld [vmem:[#allocation2 + $0x171] sm:$0xff]
        %v1297 = vlaneseq
        %v1298 = vshrl.u32 %v1297, 7
        %v1299 = vsub.s32 1, %v1298
        %v1300 = vrot.slane %v1161, %v1299
        %v1301 = vmul.f32 %v1265, %v1300
        %v1302 = vmul.f32 %v1266, %v1300
        %v1303 = vmul.f32 %v1267, %v1300
        %v1304 = vmul.f32 %v1268, %v1300
        %v1305 = vmul.f32 %v1269, %v1300
        %v1306 = vmul.f32 %v1270, %v1300
        %v1307 = vmul.f32 %v1271, %v1300
        %v1308 = vmul.f32 %v1272, %v1300
        %v1309 = vmul.f32 %v1273, %v1300
        %v1310 = vmul.f32 %v1274, %v1300
        %v1311 = vmul.f32 %v1275, %v1300
        %v1312 = vmul.f32 %v1276, %v1300
        %v1313 = vmul.f32 %v1277, %v1300
        %v1314 = vmul.f32 %v1278, %v1300
        %v1315 = vmul.f32 %v1279, %v1300
        %v1316 = vmul.f32 %v1280, %v1300
        %v1317 = vmul.f32 %v1281, %v1300
        %v1318 = vmul.f32 %v1282, %v1300
        %v1319 = vmul.f32 %v1283, %v1300
        %v1320 = vmul.f32 %v1284, %v1300
        %v1321 = vmul.f32 %v1285, %v1300
        %v1322 = vmul.f32 %v1286, %v1300
        %v1323 = vmul.f32 %v1287, %v1300
        %v1324 = vmul.f32 %v1288, %v1300
        %v1325 = vmul.f32 %v1289, %v1300
        %v1326 = vmul.f32 %v1290, %v1300
        %v1327 = vmul.f32 %v1291, %v1300
        %v1328 = vmul.f32 %v1292, %v1300
        %v1329 = vmul.f32 %v1293, %v1300
        %v1330 = vmul.f32 %v1294, %v1300
        %v1331 = vmul.f32 %v1295, %v1300
        %v1332 = vmul.f32 %v1296, %v1300
        %v1333 = vadd.f32 %v1233, %v1301
        %v1334 = vadd.f32 %v1234, %v1302
        %v1335 = vadd.f32 %v1235, %v1303
        %v1336 = vadd.f32 %v1236, %v1304
        %v1337 = vadd.f32 %v1237, %v1305
        %v1338 = vadd.f32 %v1238, %v1306
        %v1339 = vadd.f32 %v1239, %v1307
        %v1340 = vadd.f32 %v1240, %v1308
        %v1341 = vadd.f32 %v1241, %v1309
        %v1342 = vadd.f32 %v1242, %v1310
        %v1343 = vadd.f32 %v1243, %v1311
        %v1344 = vadd.f32 %v1244, %v1312
        %v1345 = vadd.f32 %v1245, %v1313
        %v1346 = vadd.f32 %v1246, %v1314
        %v1347 = vadd.f32 %v1247, %v1315
        %v1348 = vadd.f32 %v1248, %v1316
        %v1349 = vadd.f32 %v1249, %v1317
        %v1350 = vadd.f32 %v1250, %v1318
        %v1351 = vadd.f32 %v1251, %v1319
        %v1352 = vadd.f32 %v1252, %v1320
        %v1353 = vadd.f32 %v1253, %v1321
        %v1354 = vadd.f32 %v1254, %v1322
        %v1355 = vadd.f32 %v1255, %v1323
        %v1356 = vadd.f32 %v1256, %v1324
        %v1357 = vadd.f32 %v1257, %v1325
        %v1358 = vadd.f32 %v1258, %v1326
        %v1359 = vadd.f32 %v1259, %v1327
        %v1360 = vadd.f32 %v1260, %v1328
        %v1361 = vadd.f32 %v1261, %v1329
        %v1362 = vadd.f32 %v1262, %v1330
        %v1363 = vadd.f32 %v1263, %v1331
        %v1364 = vadd.f32 %v1264, %v1332
        %v1365 = vld [vmem:[#allocation2 + $0x2] sm:$0xff]
        %v1366 = vld [vmem:[#allocation2 + $0xa] sm:$0xff]
        %v1367 = vld [vmem:[#allocation2 + $0x1a] sm:$0xff]
        %v1368 = vld [vmem:[#allocation2 + $0x22] sm:$0xff]
        %v1369 = vld [vmem:[#allocation2 + $0x32] sm:$0xff]
        %v1370 = vld [vmem:[#allocation2 + $0x3a] sm:$0xff]
        %v1371 = vld [vmem:[#allocation2 + $0x4a] sm:$0xff]
        %v1372 = vld [vmem:[#allocation2 + $0x52] sm:$0xff]
        %v1373 = vld [vmem:[#allocation2 + $0x62] sm:$0xff]
        %v1374 = vld [vmem:[#allocation2 + $0x6a] sm:$0xff]
        %v1375 = vld [vmem:[#allocation2 + $0x7a] sm:$0xff]
        %v1376 = vld [vmem:[#allocation2 + $0x82] sm:$0xff]
        %v1377 = vld [vmem:[#allocation2 + $0x92] sm:$0xff]
        %v1378 = vld [vmem:[#allocation2 + $0x9a] sm:$0xff]
        %v1379 = vld [vmem:[#allocation2 + $0xaa] sm:$0xff]
        %v1380 = vld [vmem:[#allocation2 + $0xb2] sm:$0xff]
        %v1381 = vld [vmem:[#allocation2 + $0xc2] sm:$0xff]
        %v1382 = vld [vmem:[#allocation2 + $0xca] sm:$0xff]
        %v1383 = vld [vmem:[#allocation2 + $0xda] sm:$0xff]
        %v1384 = vld [vmem:[#allocation2 + $0xe2] sm:$0xff]
        %v1385 = vld [vmem:[#allocation2 + $0xf2] sm:$0xff]
        %v1386 = vld [vmem:[#allocation2 + $0xfa] sm:$0xff]
        %v1387 = vld [vmem:[#allocation2 + $0x10a] sm:$0xff]
        %v1388 = vld [vmem:[#allocation2 + $0x112] sm:$0xff]
        %v1389 = vld [vmem:[#allocation2 + $0x122] sm:$0xff]
        %v1390 = vld [vmem:[#allocation2 + $0x12a] sm:$0xff]
        %v1391 = vld [vmem:[#allocation2 + $0x13a] sm:$0xff]
        %v1392 = vld [vmem:[#allocation2 + $0x142] sm:$0xff]
        %v1393 = vld [vmem:[#allocation2 + $0x152] sm:$0xff]
        %v1394 = vld [vmem:[#allocation2 + $0x15a] sm:$0xff]
        %v1395 = vld [vmem:[#allocation2 + $0x16a] sm:$0xff]
        %v1396 = vld [vmem:[#allocation2 + $0x172] sm:$0xff]
        %v1397 = vlaneseq
        %v1398 = vshrl.u32 %v1397, 7
        %v1399 = vsub.s32 2, %v1398
        %v1400 = vrot.slane %v1161, %v1399
        %v1401 = vmul.f32 %v1365, %v1400
        %v1402 = vmul.f32 %v1366, %v1400
        %v1403 = vmul.f32 %v1367, %v1400
        %v1404 = vmul.f32 %v1368, %v1400
        %v1405 = vmul.f32 %v1369, %v1400
        %v1406 = vmul.f32 %v1370, %v1400
        %v1407 = vmul.f32 %v1371, %v1400
        %v1408 = vmul.f32 %v1372, %v1400
        %v1409 = vmul.f32 %v1373, %v1400
        %v1410 = vmul.f32 %v1374, %v1400
        %v1411 = vmul.f32 %v1375, %v1400
        %v1412 = vmul.f32 %v1376, %v1400
        %v1413 = vmul.f32 %v1377, %v1400
        %v1414 = vmul.f32 %v1378, %v1400
        %v1415 = vmul.f32 %v1379, %v1400
        %v1416 = vmul.f32 %v1380, %v1400
        %v1417 = vmul.f32 %v1381, %v1400
        %v1418 = vmul.f32 %v1382, %v1400
        %v1419 = vmul.f32 %v1383, %v1400
        %v1420 = vmul.f32 %v1384, %v1400
        %v1421 = vmul.f32 %v1385, %v1400
        %v1422 = vmul.f32 %v1386, %v1400
        %v1423 = vmul.f32 %v1387, %v1400
        %v1424 = vmul.f32 %v1388, %v1400
        %v1425 = vmul.f32 %v1389, %v1400
        %v1426 = vmul.f32 %v1390, %v1400
        %v1427 = vmul.f32 %v1391, %v1400
        %v1428 = vmul.f32 %v1392, %v1400
        %v1429 = vmul.f32 %v1393, %v1400
        %v1430 = vmul.f32 %v1394, %v1400
        %v1431 = vmul.f32 %v1395, %v1400
        %v1432 = vmul.f32 %v1396, %v1400
        %v1433 = vadd.f32 %v1333, %v1401
        %v1434 = vadd.f32 %v1334, %v1402
        %v1435 = vadd.f32 %v1335, %v1403
        %v1436 = vadd.f32 %v1336, %v1404
        %v1437 = vadd.f32 %v1337, %v1405
        %v1438 = vadd.f32 %v1338, %v1406
        %v1439 = vadd.f32 %v1339, %v1407
        %v1440 = vadd.f32 %v1340, %v1408
        %v1441 = vadd.f32 %v1341, %v1409
        %v1442 = vadd.f32 %v1342, %v1410
        %v1443 = vadd.f32 %v1343, %v1411
        %v1444 = vadd.f32 %v1344, %v1412
        %v1445 = vadd.f32 %v1345, %v1413
        %v1446 = vadd.f32 %v1346, %v1414
        %v1447 = vadd.f32 %v1347, %v1415
        %v1448 = vadd.f32 %v1348, %v1416
        %v1449 = vadd.f32 %v1349, %v1417
        %v1450 = vadd.f32 %v1350, %v1418
        %v1451 = vadd.f32 %v1351, %v1419
        %v1452 = vadd.f32 %v1352, %v1420
        %v1453 = vadd.f32 %v1353, %v1421
        %v1454 = vadd.f32 %v1354, %v1422
        %v1455 = vadd.f32 %v1355, %v1423
        %v1456 = vadd.f32 %v1356, %v1424
        %v1457 = vadd.f32 %v1357, %v1425
        %v1458 = vadd.f32 %v1358, %v1426
        %v1459 = vadd.f32 %v1359, %v1427
        %v1460 = vadd.f32 %v1360, %v1428
        %v1461 = vadd.f32 %v1361, %v1429
        %v1462 = vadd.f32 %v1362, %v1430
        %v1463 = vadd.f32 %v1363, %v1431
        %v1464 = vadd.f32 %v1364, %v1432
        %v1465 = vld [vmem:[#allocation2 + $0x3] sm:$0xff]
        %v1466 = vld [vmem:[#allocation2 + $0xb] sm:$0xff]
        %v1467 = vld [vmem:[#allocation2 + $0x1b] sm:$0xff]
        %v1468 = vld [vmem:[#allocation2 + $0x23] sm:$0xff]
        %v1469 = vld [vmem:[#allocation2 + $0x33] sm:$0xff]
        %v1470 = vld [vmem:[#allocation2 + $0x3b] sm:$0xff]
        %v1471 = vld [vmem:[#allocation2 + $0x4b] sm:$0xff]
        %v1472 = vld [vmem:[#allocation2 + $0x53] sm:$0xff]
        %v1473 = vld [vmem:[#allocation2 + $0x63] sm:$0xff]
        %v1474 = vld [vmem:[#allocation2 + $0x6b] sm:$0xff]
        %v1475 = vld [vmem:[#allocation2 + $0x7b] sm:$0xff]
        %v1476 = vld [vmem:[#allocation2 + $0x83] sm:$0xff]
        %v1477 = vld [vmem:[#allocation2 + $0x93] sm:$0xff]
        %v1478 = vld [vmem:[#allocation2 + $0x9b] sm:$0xff]
        %v1479 = vld [vmem:[#allocation2 + $0xab] sm:$0xff]
        %v1480 = vld [vmem:[#allocation2 + $0xb3] sm:$0xff]
        %v1481 = vld [vmem:[#allocation2 + $0xc3] sm:$0xff]
        %v1482 = vld [vmem:[#allocation2 + $0xcb] sm:$0xff]
        %v1483 = vld [vmem:[#allocation2 + $0xdb] sm:$0xff]
        %v1484 = vld [vmem:[#allocation2 + $0xe3] sm:$0xff]
        %v1485 = vld [vmem:[#allocation2 + $0xf3] sm:$0xff]
        %v1486 = vld [vmem:[#allocation2 + $0xfb] sm:$0xff]
        %v1487 = vld [vmem:[#allocation2 + $0x10b] sm:$0xff]
        %v1488 = vld [vmem:[#allocation2 + $0x113] sm:$0xff]
        %v1489 = vld [vmem:[#allocation2 + $0x123] sm:$0xff]
        %v1490 = vld [vmem:[#allocation2 + $0x12b] sm:$0xff]
        %v1491 = vld [vmem:[#allocation2 + $0x13b] sm:$0xff]
        %v1492 = vld [vmem:[#allocation2 + $0x143] sm:$0xff]
        %v1493 = vld [vmem:[#allocation2 + $0x153] sm:$0xff]
        %v1494 = vld [vmem:[#allocation2 + $0x15b] sm:$0xff]
        %v1495 = vld [vmem:[#allocation2 + $0x16b] sm:$0xff]
        %v1496 = vld [vmem:[#allocation2 + $0x173] sm:$0xff]
        %v1497 = vlaneseq
        %v1498 = vshrl.u32 %v1497, 7
        %v1499 = vsub.s32 3, %v1498
        %v1500 = vrot.slane %v1161, %v1499
        %v1501 = vmul.f32 %v1465, %v1500
        %v1502 = vmul.f32 %v1466, %v1500
        %v1503 = vmul.f32 %v1467, %v1500
        %v1504 = vmul.f32 %v1468, %v1500
        %v1505 = vmul.f32 %v1469, %v1500
        %v1506 = vmul.f32 %v1470, %v1500
        %v1507 = vmul.f32 %v1471, %v1500
        %v1508 = vmul.f32 %v1472, %v1500
        %v1509 = vmul.f32 %v1473, %v1500
        %v1510 = vmul.f32 %v1474, %v1500
        %v1511 = vmul.f32 %v1475, %v1500
        %v1512 = vmul.f32 %v1476, %v1500
        %v1513 = vmul.f32 %v1477, %v1500
        %v1514 = vmul.f32 %v1478, %v1500
        %v1515 = vmul.f32 %v1479, %v1500
        %v1516 = vmul.f32 %v1480, %v1500
        %v1517 = vmul.f32 %v1481, %v1500
        %v1518 = vmul.f32 %v1482, %v1500
        %v1519 = vmul.f32 %v1483, %v1500
        %v1520 = vmul.f32 %v1484, %v1500
        %v1521 = vmul.f32 %v1485, %v1500
        %v1522 = vmul.f32 %v1486, %v1500
        %v1523 = vmul.f32 %v1487, %v1500
        %v1524 = vmul.f32 %v1488, %v1500
        %v1525 = vmul.f32 %v1489, %v1500
        %v1526 = vmul.f32 %v1490, %v1500
        %v1527 = vmul.f32 %v1491, %v1500
        %v1528 = vmul.f32 %v1492, %v1500
        %v1529 = vmul.f32 %v1493, %v1500
        %v1530 = vmul.f32 %v1494, %v1500
        %v1531 = vmul.f32 %v1495, %v1500
        %v1532 = vmul.f32 %v1496, %v1500
        %v1533 = vadd.f32 %v1433, %v1501
        %v1534 = vadd.f32 %v1434, %v1502
        %v1535 = vadd.f32 %v1435, %v1503
        %v1536 = vadd.f32 %v1436, %v1504
        %v1537 = vadd.f32 %v1437, %v1505
        %v1538 = vadd.f32 %v1438, %v1506
        %v1539 = vadd.f32 %v1439, %v1507
        %v1540 = vadd.f32 %v1440, %v1508
        %v1541 = vadd.f32 %v1441, %v1509
        %v1542 = vadd.f32 %v1442, %v1510
        %v1543 = vadd.f32 %v1443, %v1511
        %v1544 = vadd.f32 %v1444, %v1512
        %v1545 = vadd.f32 %v1445, %v1513
        %v1546 = vadd.f32 %v1446, %v1514
        %v1547 = vadd.f32 %v1447, %v1515
        %v1548 = vadd.f32 %v1448, %v1516
        %v1549 = vadd.f32 %v1449, %v1517
        %v1550 = vadd.f32 %v1450, %v1518
        %v1551 = vadd.f32 %v1451, %v1519
        %v1552 = vadd.f32 %v1452, %v1520
        %v1553 = vadd.f32 %v1453, %v1521
        %v1554 = vadd.f32 %v1454, %v1522
        %v1555 = vadd.f32 %v1455, %v1523
        %v1556 = vadd.f32 %v1456, %v1524
        %v1557 = vadd.f32 %v1457, %v1525
        %v1558 = vadd.f32 %v1458, %v1526
        %v1559 = vadd.f32 %v1459, %v1527
        %v1560 = vadd.f32 %v1460, %v1528
        %v1561 = vadd.f32 %v1461, %v1529
        %v1562 = vadd.f32 %v1462, %v1530
        %v1563 = vadd.f32 %v1463, %v1531
        %v1564 = vadd.f32 %v1464, %v1532
        %v1565 = vld [vmem:[#allocation2 + $0x4] sm:$0xff]
        %v1566 = vld [vmem:[#allocation2 + $0xc] sm:$0xff]
        %v1567 = vld [vmem:[#allocation2 + $0x1c] sm:$0xff]
        %v1568 = vld [vmem:[#allocation2 + $0x24] sm:$0xff]
        %v1569 = vld [vmem:[#allocation2 + $0x34] sm:$0xff]
        %v1570 = vld [vmem:[#allocation2 + $0x3c] sm:$0xff]
        %v1571 = vld [vmem:[#allocation2 + $0x4c] sm:$0xff]
        %v1572 = vld [vmem:[#allocation2 + $0x54] sm:$0xff]
        %v1573 = vld [vmem:[#allocation2 + $0x64] sm:$0xff]
        %v1574 = vld [vmem:[#allocation2 + $0x6c] sm:$0xff]
        %v1575 = vld [vmem:[#allocation2 + $0x7c] sm:$0xff]
        %v1576 = vld [vmem:[#allocation2 + $0x84] sm:$0xff]
        %v1577 = vld [vmem:[#allocation2 + $0x94] sm:$0xff]
        %v1578 = vld [vmem:[#allocation2 + $0x9c] sm:$0xff]
        %v1579 = vld [vmem:[#allocation2 + $0xac] sm:$0xff]
        %v1580 = vld [vmem:[#allocation2 + $0xb4] sm:$0xff]
        %v1581 = vld [vmem:[#allocation2 + $0xc4] sm:$0xff]
        %v1582 = vld [vmem:[#allocation2 + $0xcc] sm:$0xff]
        %v1583 = vld [vmem:[#allocation2 + $0xdc] sm:$0xff]
        %v1584 = vld [vmem:[#allocation2 + $0xe4] sm:$0xff]
        %v1585 = vld [vmem:[#allocation2 + $0xf4] sm:$0xff]
        %v1586 = vld [vmem:[#allocation2 + $0xfc] sm:$0xff]
        %v1587 = vld [vmem:[#allocation2 + $0x10c] sm:$0xff]
        %v1588 = vld [vmem:[#allocation2 + $0x114] sm:$0xff]
        %v1589 = vld [vmem:[#allocation2 + $0x124] sm:$0xff]
        %v1590 = vld [vmem:[#allocation2 + $0x12c] sm:$0xff]
        %v1591 = vld [vmem:[#allocation2 + $0x13c] sm:$0xff]
        %v1592 = vld [vmem:[#allocation2 + $0x144] sm:$0xff]
        %v1593 = vld [vmem:[#allocation2 + $0x154] sm:$0xff]
        %v1594 = vld [vmem:[#allocation2 + $0x15c] sm:$0xff]
        %v1595 = vld [vmem:[#allocation2 + $0x16c] sm:$0xff]
        %v1596 = vld [vmem:[#allocation2 + $0x174] sm:$0xff]
        %v1597 = vlaneseq
        %v1598 = vshrl.u32 %v1597, 7
        %v1599 = vsub.s32 4, %v1598
        %v1600 = vrot.slane %v1161, %v1599
        %v1601 = vmul.f32 %v1565, %v1600
        %v1602 = vmul.f32 %v1566, %v1600
        %v1603 = vmul.f32 %v1567, %v1600
        %v1604 = vmul.f32 %v1568, %v1600
        %v1605 = vmul.f32 %v1569, %v1600
        %v1606 = vmul.f32 %v1570, %v1600
        %v1607 = vmul.f32 %v1571, %v1600
        %v1608 = vmul.f32 %v1572, %v1600
        %v1609 = vmul.f32 %v1573, %v1600
        %v1610 = vmul.f32 %v1574, %v1600
        %v1611 = vmul.f32 %v1575, %v1600
        %v1612 = vmul.f32 %v1576, %v1600
        %v1613 = vmul.f32 %v1577, %v1600
        %v1614 = vmul.f32 %v1578, %v1600
        %v1615 = vmul.f32 %v1579, %v1600
        %v1616 = vmul.f32 %v1580, %v1600
        %v1617 = vmul.f32 %v1581, %v1600
        %v1618 = vmul.f32 %v1582, %v1600
        %v1619 = vmul.f32 %v1583, %v1600
        %v1620 = vmul.f32 %v1584, %v1600
        %v1621 = vmul.f32 %v1585, %v1600
        %v1622 = vmul.f32 %v1586, %v1600
        %v1623 = vmul.f32 %v1587, %v1600
        %v1624 = vmul.f32 %v1588, %v1600
        %v1625 = vmul.f32 %v1589, %v1600
        %v1626 = vmul.f32 %v1590, %v1600
        %v1627 = vmul.f32 %v1591, %v1600
        %v1628 = vmul.f32 %v1592, %v1600
        %v1629 = vmul.f32 %v1593, %v1600
        %v1630 = vmul.f32 %v1594, %v1600
        %v1631 = vmul.f32 %v1595, %v1600
        %v1632 = vmul.f32 %v1596, %v1600
        %v1633 = vadd.f32 %v1533, %v1601
        %v1634 = vadd.f32 %v1534, %v1602
        %v1635 = vadd.f32 %v1535, %v1603
        %v1636 = vadd.f32 %v1536, %v1604
        %v1637 = vadd.f32 %v1537, %v1605
        %v1638 = vadd.f32 %v1538, %v1606
        %v1639 = vadd.f32 %v1539, %v1607
        %v1640 = vadd.f32 %v1540, %v1608
        %v1641 = vadd.f32 %v1541, %v1609
        %v1642 = vadd.f32 %v1542, %v1610
        %v1643 = vadd.f32 %v1543, %v1611
        %v1644 = vadd.f32 %v1544, %v1612
        %v1645 = vadd.f32 %v1545, %v1613
        %v1646 = vadd.f32 %v1546, %v1614
        %v1647 = vadd.f32 %v1547, %v1615
        %v1648 = vadd.f32 %v1548, %v1616
        %v1649 = vadd.f32 %v1549, %v1617
        %v1650 = vadd.f32 %v1550, %v1618
        %v1651 = vadd.f32 %v1551, %v1619
        %v1652 = vadd.f32 %v1552, %v1620
        %v1653 = vadd.f32 %v1553, %v1621
        %v1654 = vadd.f32 %v1554, %v1622
        %v1655 = vadd.f32 %v1555, %v1623
        %v1656 = vadd.f32 %v1556, %v1624
        %v1657 = vadd.f32 %v1557, %v1625
        %v1658 = vadd.f32 %v1558, %v1626
        %v1659 = vadd.f32 %v1559, %v1627
        %v1660 = vadd.f32 %v1560, %v1628
        %v1661 = vadd.f32 %v1561, %v1629
        %v1662 = vadd.f32 %v1562, %v1630
        %v1663 = vadd.f32 %v1563, %v1631
        %v1664 = vadd.f32 %v1564, %v1632
        %s1665 = scalar_lea.vmem [#allocation2], 24
        %v1666 = vld [vmem:[%s1665] sm:$0xff]
        %v1667 = vld [vmem:[%s1665 + $0x8] sm:$0xff]
        %v1668 = vld [vmem:[%s1665 + $0x18] sm:$0xff]
        %v1669 = vld [vmem:[%s1665 + $0x20] sm:$0xff]
        %v1670 = vld [vmem:[%s1665 + $0x30] sm:$0xff]
        %v1671 = vld [vmem:[%s1665 + $0x38] sm:$0xff]
        %v1672 = vld [vmem:[%s1665 + $0x48] sm:$0xff]
        %v1673 = vld [vmem:[%s1665 + $0x50] sm:$0xff]
        %v1674 = vld [vmem:[%s1665 + $0x60] sm:$0xff]
        %v1675 = vld [vmem:[%s1665 + $0x68] sm:$0xff]
        %v1676 = vld [vmem:[%s1665 + $0x78] sm:$0xff]
        %v1677 = vld [vmem:[%s1665 + $0x80] sm:$0xff]
        %v1678 = vld [vmem:[%s1665 + $0x90] sm:$0xff]
        %v1679 = vld [vmem:[%s1665 + $0x98] sm:$0xff]
        %v1680 = vld [vmem:[%s1665 + $0xa8] sm:$0xff]
        %v1681 = vld [vmem:[%s1665 + $0xb0] sm:$0xff]
        %v1682 = vld [vmem:[%s1665 + $0xc0] sm:$0xff]
        %v1683 = vld [vmem:[%s1665 + $0xc8] sm:$0xff]
        %v1684 = vld [vmem:[%s1665 + $0xd8] sm:$0xff]
        %v1685 = vld [vmem:[%s1665 + $0xe0] sm:$0xff]
        %v1686 = vld [vmem:[%s1665 + $0xf0] sm:$0xff]
        %v1687 = vld [vmem:[%s1665 + $0xf8] sm:$0xff]
        %v1688 = vld [vmem:[%s1665 + $0x108] sm:$0xff]
        %v1689 = vld [vmem:[%s1665 + $0x110] sm:$0xff]
        %v1690 = vld [vmem:[%s1665 + $0x120] sm:$0xff]
        %v1691 = vld [vmem:[%s1665 + $0x128] sm:$0xff]
        %v1692 = vld [vmem:[%s1665 + $0x138] sm:$0xff]
        %v1693 = vld [vmem:[%s1665 + $0x140] sm:$0xff]
        %v1694 = vld [vmem:[%s1665 + $0x150] sm:$0xff]
        %v1695 = vld [vmem:[%s1665 + $0x158] sm:$0xff]
        %v1696 = vld [vmem:[%s1665 + $0x168] sm:$0xff]
        %v1697 = vld [vmem:[%s1665 + $0x170] sm:$0xff]
        %v1698 = vlaneseq
        %v1699 = vshrl.u32 %v1698, 7
        %v1700 = vsub.s32 5, %v1699
        %v1701 = vrot.slane %v1161, %v1700
        %v1702 = vmul.f32 %v1666, %v1701
        %v1703 = vmul.f32 %v1667, %v1701
        %v1704 = vmul.f32 %v1668, %v1701
        %v1705 = vmul.f32 %v1669, %v1701
        %v1706 = vmul.f32 %v1670, %v1701
        %v1707 = vmul.f32 %v1671, %v1701
        %v1708 = vmul.f32 %v1672, %v1701
        %v1709 = vmul.f32 %v1673, %v1701
        %v1710 = vmul.f32 %v1674, %v1701
        %v1711 = vmul.f32 %v1675, %v1701
        %v1712 = vmul.f32 %v1676, %v1701
        %v1713 = vmul.f32 %v1677, %v1701
        %v1714 = vmul.f32 %v1678, %v1701
        %v1715 = vmul.f32 %v1679, %v1701
        %v1716 = vmul.f32 %v1680, %v1701
        %v1717 = vmul.f32 %v1681, %v1701
        %v1718 = vmul.f32 %v1682, %v1701
        %v1719 = vmul.f32 %v1683, %v1701
        %v1720 = vmul.f32 %v1684, %v1701
        %v1721 = vmul.f32 %v1685, %v1701
        %v1722 = vmul.f32 %v1686, %v1701
        %v1723 = vmul.f32 %v1687, %v1701
        %v1724 = vmul.f32 %v1688, %v1701
        %v1725 = vmul.f32 %v1689, %v1701
        %v1726 = vmul.f32 %v1690, %v1701
        %v1727 = vmul.f32 %v1691, %v1701
        %v1728 = vmul.f32 %v1692, %v1701
        %v1729 = vmul.f32 %v1693, %v1701
        %v1730 = vmul.f32 %v1694, %v1701
        %v1731 = vmul.f32 %v1695, %v1701
        %v1732 = vmul.f32 %v1696, %v1701
        %v1733 = vmul.f32 %v1697, %v1701
        %v1734 = vadd.f32 %v1633, %v1702
        %v1735 = vadd.f32 %v1634, %v1703
        %v1736 = vadd.f32 %v1635, %v1704
        %v1737 = vadd.f32 %v1636, %v1705
        %v1738 = vadd.f32 %v1637, %v1706
        %v1739 = vadd.f32 %v1638, %v1707
        %v1740 = vadd.f32 %v1639, %v1708
        %v1741 = vadd.f32 %v1640, %v1709
        %v1742 = vadd.f32 %v1641, %v1710
        %v1743 = vadd.f32 %v1642, %v1711
        %v1744 = vadd.f32 %v1643, %v1712
        %v1745 = vadd.f32 %v1644, %v1713
        %v1746 = vadd.f32 %v1645, %v1714
        %v1747 = vadd.f32 %v1646, %v1715
        %v1748 = vadd.f32 %v1647, %v1716
        %v1749 = vadd.f32 %v1648, %v1717
        %v1750 = vadd.f32 %v1649, %v1718
        %v1751 = vadd.f32 %v1650, %v1719
        %v1752 = vadd.f32 %v1651, %v1720
        %v1753 = vadd.f32 %v1652, %v1721
        %v1754 = vadd.f32 %v1653, %v1722
        %v1755 = vadd.f32 %v1654, %v1723
        %v1756 = vadd.f32 %v1655, %v1724
        %v1757 = vadd.f32 %v1656, %v1725
        %v1758 = vadd.f32 %v1657, %v1726
        %v1759 = vadd.f32 %v1658, %v1727
        %v1760 = vadd.f32 %v1659, %v1728
        %v1761 = vadd.f32 %v1660, %v1729
        %v1762 = vadd.f32 %v1661, %v1730
        %v1763 = vadd.f32 %v1662, %v1731
        %v1764 = vadd.f32 %v1663, %v1732
        %v1765 = vadd.f32 %v1664, %v1733
        %v1766 = vld [vmem:[%s1665 + $0x1] sm:$0xff]
        %v1767 = vld [vmem:[%s1665 + $0x9] sm:$0xff]
        %v1768 = vld [vmem:[%s1665 + $0x19] sm:$0xff]
        %v1769 = vld [vmem:[%s1665 + $0x21] sm:$0xff]
        %v1770 = vld [vmem:[%s1665 + $0x31] sm:$0xff]
        %v1771 = vld [vmem:[%s1665 + $0x39] sm:$0xff]
        %v1772 = vld [vmem:[%s1665 + $0x49] sm:$0xff]
        %v1773 = vld [vmem:[%s1665 + $0x51] sm:$0xff]
        %v1774 = vld [vmem:[%s1665 + $0x61] sm:$0xff]
        %v1775 = vld [vmem:[%s1665 + $0x69] sm:$0xff]
        %v1776 = vld [vmem:[%s1665 + $0x79] sm:$0xff]
        %v1777 = vld [vmem:[%s1665 + $0x81] sm:$0xff]
        %v1778 = vld [vmem:[%s1665 + $0x91] sm:$0xff]
        %v1779 = vld [vmem:[%s1665 + $0x99] sm:$0xff]
        %v1780 = vld [vmem:[%s1665 + $0xa9] sm:$0xff]
        %v1781 = vld [vmem:[%s1665 + $0xb1] sm:$0xff]
        %v1782 = vld [vmem:[%s1665 + $0xc1] sm:$0xff]
        %v1783 = vld [vmem:[%s1665 + $0xc9] sm:$0xff]
        %v1784 = vld [vmem:[%s1665 + $0xd9] sm:$0xff]
        %v1785 = vld [vmem:[%s1665 + $0xe1] sm:$0xff]
        %v1786 = vld [vmem:[%s1665 + $0xf1] sm:$0xff]
        %v1787 = vld [vmem:[%s1665 + $0xf9] sm:$0xff]
        %v1788 = vld [vmem:[%s1665 + $0x109] sm:$0xff]
        %v1789 = vld [vmem:[%s1665 + $0x111] sm:$0xff]
        %v1790 = vld [vmem:[%s1665 + $0x121] sm:$0xff]
        %v1791 = vld [vmem:[%s1665 + $0x129] sm:$0xff]
        %v1792 = vld [vmem:[%s1665 + $0x139] sm:$0xff]
        %v1793 = vld [vmem:[%s1665 + $0x141] sm:$0xff]
        %v1794 = vld [vmem:[%s1665 + $0x151] sm:$0xff]
        %v1795 = vld [vmem:[%s1665 + $0x159] sm:$0xff]
        %v1796 = vld [vmem:[%s1665 + $0x169] sm:$0xff]
        %v1797 = vld [vmem:[%s1665 + $0x171] sm:$0xff]
        %v1798 = vlaneseq
        %v1799 = vshrl.u32 %v1798, 7
        %v1800 = vsub.s32 6, %v1799
        %v1801 = vrot.slane %v1161, %v1800
        %v1802 = vmul.f32 %v1766, %v1801
        %v1803 = vmul.f32 %v1767, %v1801
        %v1804 = vmul.f32 %v1768, %v1801
        %v1805 = vmul.f32 %v1769, %v1801
        %v1806 = vmul.f32 %v1770, %v1801
        %v1807 = vmul.f32 %v1771, %v1801
        %v1808 = vmul.f32 %v1772, %v1801
        %v1809 = vmul.f32 %v1773, %v1801
        %v1810 = vmul.f32 %v1774, %v1801
        %v1811 = vmul.f32 %v1775, %v1801
        %v1812 = vmul.f32 %v1776, %v1801
        %v1813 = vmul.f32 %v1777, %v1801
        %v1814 = vmul.f32 %v1778, %v1801
        %v1815 = vmul.f32 %v1779, %v1801
        %v1816 = vmul.f32 %v1780, %v1801
        %v1817 = vmul.f32 %v1781, %v1801
        %v1818 = vmul.f32 %v1782, %v1801
        %v1819 = vmul.f32 %v1783, %v1801
        %v1820 = vmul.f32 %v1784, %v1801
        %v1821 = vmul.f32 %v1785, %v1801
        %v1822 = vmul.f32 %v1786, %v1801
        %v1823 = vmul.f32 %v1787, %v1801
        %v1824 = vmul.f32 %v1788, %v1801
        %v1825 = vmul.f32 %v1789, %v1801
        %v1826 = vmul.f32 %v1790, %v1801
        %v1827 = vmul.f32 %v1791, %v1801
        %v1828 = vmul.f32 %v1792, %v1801
        %v1829 = vmul.f32 %v1793, %v1801
        %v1830 = vmul.f32 %v1794, %v1801
        %v1831 = vmul.f32 %v1795, %v1801
        %v1832 = vmul.f32 %v1796, %v1801
        %v1833 = vmul.f32 %v1797, %v1801
        %v1834 = vadd.f32 %v1734, %v1802
        %v1835 = vadd.f32 %v1735, %v1803
        %v1836 = vadd.f32 %v1736, %v1804
        %v1837 = vadd.f32 %v1737, %v1805
        %v1838 = vadd.f32 %v1738, %v1806
        %v1839 = vadd.f32 %v1739, %v1807
        %v1840 = vadd.f32 %v1740, %v1808
        %v1841 = vadd.f32 %v1741, %v1809
        %v1842 = vadd.f32 %v1742, %v1810
        %v1843 = vadd.f32 %v1743, %v1811
        %v1844 = vadd.f32 %v1744, %v1812
        %v1845 = vadd.f32 %v1745, %v1813
        %v1846 = vadd.f32 %v1746, %v1814
        %v1847 = vadd.f32 %v1747, %v1815
        %v1848 = vadd.f32 %v1748, %v1816
        %v1849 = vadd.f32 %v1749, %v1817
        %v1850 = vadd.f32 %v1750, %v1818
        %v1851 = vadd.f32 %v1751, %v1819
        %v1852 = vadd.f32 %v1752, %v1820
        %v1853 = vadd.f32 %v1753, %v1821
        %v1854 = vadd.f32 %v1754, %v1822
        %v1855 = vadd.f32 %v1755, %v1823
        %v1856 = vadd.f32 %v1756, %v1824
        %v1857 = vadd.f32 %v1757, %v1825
        %v1858 = vadd.f32 %v1758, %v1826
        %v1859 = vadd.f32 %v1759, %v1827
        %v1860 = vadd.f32 %v1760, %v1828
        %v1861 = vadd.f32 %v1761, %v1829
        %v1862 = vadd.f32 %v1762, %v1830
        %v1863 = vadd.f32 %v1763, %v1831
        %v1864 = vadd.f32 %v1764, %v1832
        %v1865 = vadd.f32 %v1765, %v1833
        %v1866 = vld [vmem:[%s1665 + $0x2] sm:$0xff]
        %v1867 = vld [vmem:[%s1665 + $0xa] sm:$0xff]
        %v1868 = vld [vmem:[%s1665 + $0x1a] sm:$0xff]
        %v1869 = vld [vmem:[%s1665 + $0x22] sm:$0xff]
        %v1870 = vld [vmem:[%s1665 + $0x32] sm:$0xff]
        %v1871 = vld [vmem:[%s1665 + $0x3a] sm:$0xff]
        %v1872 = vld [vmem:[%s1665 + $0x4a] sm:$0xff]
        %v1873 = vld [vmem:[%s1665 + $0x52] sm:$0xff]
        %v1874 = vld [vmem:[%s1665 + $0x62] sm:$0xff]
        %v1875 = vld [vmem:[%s1665 + $0x6a] sm:$0xff]
        %v1876 = vld [vmem:[%s1665 + $0x7a] sm:$0xff]
        %v1877 = vld [vmem:[%s1665 + $0x82] sm:$0xff]
        %v1878 = vld [vmem:[%s1665 + $0x92] sm:$0xff]
        %v1879 = vld [vmem:[%s1665 + $0x9a] sm:$0xff]
        %v1880 = vld [vmem:[%s1665 + $0xaa] sm:$0xff]
        %v1881 = vld [vmem:[%s1665 + $0xb2] sm:$0xff]
        %v1882 = vld [vmem:[%s1665 + $0xc2] sm:$0xff]
        %v1883 = vld [vmem:[%s1665 + $0xca] sm:$0xff]
        %v1884 = vld [vmem:[%s1665 + $0xda] sm:$0xff]
        %v1885 = vld [vmem:[%s1665 + $0xe2] sm:$0xff]
        %v1886 = vld [vmem:[%s1665 + $0xf2] sm:$0xff]
        %v1887 = vld [vmem:[%s1665 + $0xfa] sm:$0xff]
        %v1888 = vld [vmem:[%s1665 + $0x10a] sm:$0xff]
        %v1889 = vld [vmem:[%s1665 + $0x112] sm:$0xff]
        %v1890 = vld [vmem:[%s1665 + $0x122] sm:$0xff]
        %v1891 = vld [vmem:[%s1665 + $0x12a] sm:$0xff]
        %v1892 = vld [vmem:[%s1665 + $0x13a] sm:$0xff]
        %v1893 = vld [vmem:[%s1665 + $0x142] sm:$0xff]
        %v1894 = vld [vmem:[%s1665 + $0x152] sm:$0xff]
        %v1895 = vld [vmem:[%s1665 + $0x15a] sm:$0xff]
        %v1896 = vld [vmem:[%s1665 + $0x16a] sm:$0xff]
        %v1897 = vld [vmem:[%s1665 + $0x172] sm:$0xff]
        %v1898 = vlaneseq
        %v1899 = vshrl.u32 %v1898, 7
        %v1900 = vsub.s32 7, %v1899
        %v1901 = vrot.slane %v1161, %v1900
        %v1902 = vmul.f32 %v1866, %v1901
        %v1903 = vmul.f32 %v1867, %v1901
        %v1904 = vmul.f32 %v1868, %v1901
        %v1905 = vmul.f32 %v1869, %v1901
        %v1906 = vmul.f32 %v1870, %v1901
        %v1907 = vmul.f32 %v1871, %v1901
        %v1908 = vmul.f32 %v1872, %v1901
        %v1909 = vmul.f32 %v1873, %v1901
        %v1910 = vmul.f32 %v1874, %v1901
        %v1911 = vmul.f32 %v1875, %v1901
        %v1912 = vmul.f32 %v1876, %v1901
        %v1913 = vmul.f32 %v1877, %v1901
        %v1914 = vmul.f32 %v1878, %v1901
        %v1915 = vmul.f32 %v1879, %v1901
        %v1916 = vmul.f32 %v1880, %v1901
        %v1917 = vmul.f32 %v1881, %v1901
        %v1918 = vmul.f32 %v1882, %v1901
        %v1919 = vmul.f32 %v1883, %v1901
        %v1920 = vmul.f32 %v1884, %v1901
        %v1921 = vmul.f32 %v1885, %v1901
        %v1922 = vmul.f32 %v1886, %v1901
        %v1923 = vmul.f32 %v1887, %v1901
        %v1924 = vmul.f32 %v1888, %v1901
        %v1925 = vmul.f32 %v1889, %v1901
        %v1926 = vmul.f32 %v1890, %v1901
        %v1927 = vmul.f32 %v1891, %v1901
        %v1928 = vmul.f32 %v1892, %v1901
        %v1929 = vmul.f32 %v1893, %v1901
        %v1930 = vmul.f32 %v1894, %v1901
        %v1931 = vmul.f32 %v1895, %v1901
        %v1932 = vmul.f32 %v1896, %v1901
        %v1933 = vmul.f32 %v1897, %v1901
        %v1934 = vadd.f32 %v1834, %v1902
        %v1935 = vadd.f32 %v1835, %v1903
        %v1936 = vadd.f32 %v1836, %v1904
        %v1937 = vadd.f32 %v1837, %v1905
        %v1938 = vadd.f32 %v1838, %v1906
        %v1939 = vadd.f32 %v1839, %v1907
        %v1940 = vadd.f32 %v1840, %v1908
        %v1941 = vadd.f32 %v1841, %v1909
        %v1942 = vadd.f32 %v1842, %v1910
        %v1943 = vadd.f32 %v1843, %v1911
        %v1944 = vadd.f32 %v1844, %v1912
        %v1945 = vadd.f32 %v1845, %v1913
        %v1946 = vadd.f32 %v1846, %v1914
        %v1947 = vadd.f32 %v1847, %v1915
        %v1948 = vadd.f32 %v1848, %v1916
        %v1949 = vadd.f32 %v1849, %v1917
        %v1950 = vadd.f32 %v1850, %v1918
        %v1951 = vadd.f32 %v1851, %v1919
        %v1952 = vadd.f32 %v1852, %v1920
        %v1953 = vadd.f32 %v1853, %v1921
        %v1954 = vadd.f32 %v1854, %v1922
        %v1955 = vadd.f32 %v1855, %v1923
        %v1956 = vadd.f32 %v1856, %v1924
        %v1957 = vadd.f32 %v1857, %v1925
        %v1958 = vadd.f32 %v1858, %v1926
        %v1959 = vadd.f32 %v1859, %v1927
        %v1960 = vadd.f32 %v1860, %v1928
        %v1961 = vadd.f32 %v1861, %v1929
        %v1962 = vadd.f32 %v1862, %v1930
        %v1963 = vadd.f32 %v1863, %v1931
        %v1964 = vadd.f32 %v1864, %v1932
        %v1965 = vadd.f32 %v1865, %v1933
        %v1966 = vld [vmem:[%s1665 + $0x3] sm:$0xff]
        %v1967 = vld [vmem:[%s1665 + $0xb] sm:$0xff]
        %v1968 = vld [vmem:[%s1665 + $0x1b] sm:$0xff]
        %v1969 = vld [vmem:[%s1665 + $0x23] sm:$0xff]
        %v1970 = vld [vmem:[%s1665 + $0x33] sm:$0xff]
        %v1971 = vld [vmem:[%s1665 + $0x3b] sm:$0xff]
        %v1972 = vld [vmem:[%s1665 + $0x4b] sm:$0xff]
        %v1973 = vld [vmem:[%s1665 + $0x53] sm:$0xff]
        %v1974 = vld [vmem:[%s1665 + $0x63] sm:$0xff]
        %v1975 = vld [vmem:[%s1665 + $0x6b] sm:$0xff]
        %v1976 = vld [vmem:[%s1665 + $0x7b] sm:$0xff]
        %v1977 = vld [vmem:[%s1665 + $0x83] sm:$0xff]
        %v1978 = vld [vmem:[%s1665 + $0x93] sm:$0xff]
        %v1979 = vld [vmem:[%s1665 + $0x9b] sm:$0xff]
        %v1980 = vld [vmem:[%s1665 + $0xab] sm:$0xff]
        %v1981 = vld [vmem:[%s1665 + $0xb3] sm:$0xff]
        %v1982 = vld [vmem:[%s1665 + $0xc3] sm:$0xff]
        %v1983 = vld [vmem:[%s1665 + $0xcb] sm:$0xff]
        %v1984 = vld [vmem:[%s1665 + $0xdb] sm:$0xff]
        %v1985 = vld [vmem:[%s1665 + $0xe3] sm:$0xff]
        %v1986 = vld [vmem:[%s1665 + $0xf3] sm:$0xff]
        %v1987 = vld [vmem:[%s1665 + $0xfb] sm:$0xff]
        %v1988 = vld [vmem:[%s1665 + $0x10b] sm:$0xff]
        %v1989 = vld [vmem:[%s1665 + $0x113] sm:$0xff]
        %v1990 = vld [vmem:[%s1665 + $0x123] sm:$0xff]
        %v1991 = vld [vmem:[%s1665 + $0x12b] sm:$0xff]
        %v1992 = vld [vmem:[%s1665 + $0x13b] sm:$0xff]
        %v1993 = vld [vmem:[%s1665 + $0x143] sm:$0xff]
        %v1994 = vld [vmem:[%s1665 + $0x153] sm:$0xff]
        %v1995 = vld [vmem:[%s1665 + $0x15b] sm:$0xff]
        %v1996 = vld [vmem:[%s1665 + $0x16b] sm:$0xff]
        %v1997 = vld [vmem:[%s1665 + $0x173] sm:$0xff]
        %v1998 = vlaneseq
        %v1999 = vshrl.u32 %v1998, 7
        %v2000 = vsub.s32 0, %v1999
        %v2001 = vrot.slane %v1162, %v2000
        %v2002 = vmul.f32 %v1966, %v2001
        %v2003 = vmul.f32 %v1967, %v2001
        %v2004 = vmul.f32 %v1968, %v2001
        %v2005 = vmul.f32 %v1969, %v2001
        %v2006 = vmul.f32 %v1970, %v2001
        %v2007 = vmul.f32 %v1971, %v2001
        %v2008 = vmul.f32 %v1972, %v2001
        %v2009 = vmul.f32 %v1973, %v2001
        %v2010 = vmul.f32 %v1974, %v2001
        %v2011 = vmul.f32 %v1975, %v2001
        %v2012 = vmul.f32 %v1976, %v2001
        %v2013 = vmul.f32 %v1977, %v2001
        %v2014 = vmul.f32 %v1978, %v2001
        %v2015 = vmul.f32 %v1979, %v2001
        %v2016 = vmul.f32 %v1980, %v2001
        %v2017 = vmul.f32 %v1981, %v2001
        %v2018 = vmul.f32 %v1982, %v2001
        %v2019 = vmul.f32 %v1983, %v2001
        %v2020 = vmul.f32 %v1984, %v2001
        %v2021 = vmul.f32 %v1985, %v2001
        %v2022 = vmul.f32 %v1986, %v2001
        %v2023 = vmul.f32 %v1987, %v2001
        %v2024 = vmul.f32 %v1988, %v2001
        %v2025 = vmul.f32 %v1989, %v2001
        %v2026 = vmul.f32 %v1990, %v2001
        %v2027 = vmul.f32 %v1991, %v2001
        %v2028 = vmul.f32 %v1992, %v2001
        %v2029 = vmul.f32 %v1993, %v2001
        %v2030 = vmul.f32 %v1994, %v2001
        %v2031 = vmul.f32 %v1995, %v2001
        %v2032 = vmul.f32 %v1996, %v2001
        %v2033 = vmul.f32 %v1997, %v2001
        %v2034 = vadd.f32 %v1934, %v2002
        %v2035 = vadd.f32 %v1935, %v2003
        %v2036 = vadd.f32 %v1936, %v2004
        %v2037 = vadd.f32 %v1937, %v2005
        %v2038 = vadd.f32 %v1938, %v2006
        %v2039 = vadd.f32 %v1939, %v2007
        %v2040 = vadd.f32 %v1940, %v2008
        %v2041 = vadd.f32 %v1941, %v2009
        %v2042 = vadd.f32 %v1942, %v2010
        %v2043 = vadd.f32 %v1943, %v2011
        %v2044 = vadd.f32 %v1944, %v2012
        %v2045 = vadd.f32 %v1945, %v2013
        %v2046 = vadd.f32 %v1946, %v2014
        %v2047 = vadd.f32 %v1947, %v2015
        %v2048 = vadd.f32 %v1948, %v2016
        %v2049 = vadd.f32 %v1949, %v2017
        %v2050 = vadd.f32 %v1950, %v2018
        %v2051 = vadd.f32 %v1951, %v2019
        %v2052 = vadd.f32 %v1952, %v2020
        %v2053 = vadd.f32 %v1953, %v2021
        %v2054 = vadd.f32 %v1954, %v2022
        %v2055 = vadd.f32 %v1955, %v2023
        %v2056 = vadd.f32 %v1956, %v2024
        %v2057 = vadd.f32 %v1957, %v2025
        %v2058 = vadd.f32 %v1958, %v2026
        %v2059 = vadd.f32 %v1959, %v2027
        %v2060 = vadd.f32 %v1960, %v2028
        %v2061 = vadd.f32 %v1961, %v2029
        %v2062 = vadd.f32 %v1962, %v2030
        %v2063 = vadd.f32 %v1963, %v2031
        %v2064 = vadd.f32 %v1964, %v2032
        %v2065 = vadd.f32 %v1965, %v2033
        %v2066 = vld [vmem:[%s1665 + $0x4] sm:$0xff]
        %v2067 = vld [vmem:[%s1665 + $0xc] sm:$0xff]
        %v2068 = vld [vmem:[%s1665 + $0x1c] sm:$0xff]
        %v2069 = vld [vmem:[%s1665 + $0x24] sm:$0xff]
        %v2070 = vld [vmem:[%s1665 + $0x34] sm:$0xff]
        %v2071 = vld [vmem:[%s1665 + $0x3c] sm:$0xff]
        %v2072 = vld [vmem:[%s1665 + $0x4c] sm:$0xff]
        %v2073 = vld [vmem:[%s1665 + $0x54] sm:$0xff]
        %v2074 = vld [vmem:[%s1665 + $0x64] sm:$0xff]
        %v2075 = vld [vmem:[%s1665 + $0x6c] sm:$0xff]
        %v2076 = vld [vmem:[%s1665 + $0x7c] sm:$0xff]
        %v2077 = vld [vmem:[%s1665 + $0x84] sm:$0xff]
        %v2078 = vld [vmem:[%s1665 + $0x94] sm:$0xff]
        %v2079 = vld [vmem:[%s1665 + $0x9c] sm:$0xff]
        %v2080 = vld [vmem:[%s1665 + $0xac] sm:$0xff]
        %v2081 = vld [vmem:[%s1665 + $0xb4] sm:$0xff]
        %v2082 = vld [vmem:[%s1665 + $0xc4] sm:$0xff]
        %v2083 = vld [vmem:[%s1665 + $0xcc] sm:$0xff]
        %v2084 = vld [vmem:[%s1665 + $0xdc] sm:$0xff]
        %v2085 = vld [vmem:[%s1665 + $0xe4] sm:$0xff]
        %v2086 = vld [vmem:[%s1665 + $0xf4] sm:$0xff]
        %v2087 = vld [vmem:[%s1665 + $0xfc] sm:$0xff]
        %v2088 = vld [vmem:[%s1665 + $0x10c] sm:$0xff]
        %v2089 = vld [vmem:[%s1665 + $0x114] sm:$0xff]
        %v2090 = vld [vmem:[%s1665 + $0x124] sm:$0xff]
        %v2091 = vld [vmem:[%s1665 + $0x12c] sm:$0xff]
        %v2092 = vld [vmem:[%s1665 + $0x13c] sm:$0xff]
        %v2093 = vld [vmem:[%s1665 + $0x144] sm:$0xff]
        %v2094 = vld [vmem:[%s1665 + $0x154] sm:$0xff]
        %v2095 = vld [vmem:[%s1665 + $0x15c] sm:$0xff]
        %v2096 = vld [vmem:[%s1665 + $0x16c] sm:$0xff]
        %v2097 = vld [vmem:[%s1665 + $0x174] sm:$0xff]
        %v2098 = vlaneseq
        %v2099 = vshrl.u32 %v2098, 7
        %v2100 = vsub.s32 1, %v2099
        %v2101 = vrot.slane %v1162, %v2100
        %v2102 = vmul.f32 %v2066, %v2101
        %v2103 = vmul.f32 %v2067, %v2101
        %v2104 = vmul.f32 %v2068, %v2101
        %v2105 = vmul.f32 %v2069, %v2101
        %v2106 = vmul.f32 %v2070, %v2101
        %v2107 = vmul.f32 %v2071, %v2101
        %v2108 = vmul.f32 %v2072, %v2101
        %v2109 = vmul.f32 %v2073, %v2101
        %v2110 = vmul.f32 %v2074, %v2101
        %v2111 = vmul.f32 %v2075, %v2101
        %v2112 = vmul.f32 %v2076, %v2101
        %v2113 = vmul.f32 %v2077, %v2101
        %v2114 = vmul.f32 %v2078, %v2101
        %v2115 = vmul.f32 %v2079, %v2101
        %v2116 = vmul.f32 %v2080, %v2101
        %v2117 = vmul.f32 %v2081, %v2101
        %v2118 = vmul.f32 %v2082, %v2101
        %v2119 = vmul.f32 %v2083, %v2101
        %v2120 = vmul.f32 %v2084, %v2101
        %v2121 = vmul.f32 %v2085, %v2101
        %v2122 = vmul.f32 %v2086, %v2101
        %v2123 = vmul.f32 %v2087, %v2101
        %v2124 = vmul.f32 %v2088, %v2101
        %v2125 = vmul.f32 %v2089, %v2101
        %v2126 = vmul.f32 %v2090, %v2101
        %v2127 = vmul.f32 %v2091, %v2101
        %v2128 = vmul.f32 %v2092, %v2101
        %v2129 = vmul.f32 %v2093, %v2101
        %v2130 = vmul.f32 %v2094, %v2101
        %v2131 = vmul.f32 %v2095, %v2101
        %v2132 = vmul.f32 %v2096, %v2101
        %v2133 = vmul.f32 %v2097, %v2101
        %v2134 = vadd.f32 %v2034, %v2102
        %v2135 = vadd.f32 %v2035, %v2103
        %v2136 = vadd.f32 %v2036, %v2104
        %v2137 = vadd.f32 %v2037, %v2105
        %v2138 = vadd.f32 %v2038, %v2106
        %v2139 = vadd.f32 %v2039, %v2107
        %v2140 = vadd.f32 %v2040, %v2108
        %v2141 = vadd.f32 %v2041, %v2109
        %v2142 = vadd.f32 %v2042, %v2110
        %v2143 = vadd.f32 %v2043, %v2111
        %v2144 = vadd.f32 %v2044, %v2112
        %v2145 = vadd.f32 %v2045, %v2113
        %v2146 = vadd.f32 %v2046, %v2114
        %v2147 = vadd.f32 %v2047, %v2115
        %v2148 = vadd.f32 %v2048, %v2116
        %v2149 = vadd.f32 %v2049, %v2117
        %v2150 = vadd.f32 %v2050, %v2118
        %v2151 = vadd.f32 %v2051, %v2119
        %v2152 = vadd.f32 %v2052, %v2120
        %v2153 = vadd.f32 %v2053, %v2121
        %v2154 = vadd.f32 %v2054, %v2122
        %v2155 = vadd.f32 %v2055, %v2123
        %v2156 = vadd.f32 %v2056, %v2124
        %v2157 = vadd.f32 %v2057, %v2125
        %v2158 = vadd.f32 %v2058, %v2126
        %v2159 = vadd.f32 %v2059, %v2127
        %v2160 = vadd.f32 %v2060, %v2128
        %v2161 = vadd.f32 %v2061, %v2129
        %v2162 = vadd.f32 %v2062, %v2130
        %v2163 = vadd.f32 %v2063, %v2131
        %v2164 = vadd.f32 %v2064, %v2132
        %v2165 = vadd.f32 %v2065, %v2133
        %v2166 = vld [vmem:[%s1128] sm:$0xff]
        %v2167 = vld [vmem:[%s1128 + $0x8] sm:$0xff]
        %v2168 = vld [vmem:[%s1128 + $0x18] sm:$0xff]
        %v2169 = vld [vmem:[%s1128 + $0x20] sm:$0xff]
        %v2170 = vld [vmem:[%s1128 + $0x30] sm:$0xff]
        %v2171 = vld [vmem:[%s1128 + $0x38] sm:$0xff]
        %v2172 = vld [vmem:[%s1128 + $0x48] sm:$0xff]
        %v2173 = vld [vmem:[%s1128 + $0x50] sm:$0xff]
        %v2174 = vld [vmem:[%s1128 + $0x60] sm:$0xff]
        %v2175 = vld [vmem:[%s1128 + $0x68] sm:$0xff]
        %v2176 = vld [vmem:[%s1128 + $0x78] sm:$0xff]
        %v2177 = vld [vmem:[%s1128 + $0x80] sm:$0xff]
        %v2178 = vld [vmem:[%s1128 + $0x90] sm:$0xff]
        %v2179 = vld [vmem:[%s1128 + $0x98] sm:$0xff]
        %v2180 = vld [vmem:[%s1128 + $0xa8] sm:$0xff]
        %v2181 = vld [vmem:[%s1128 + $0xb0] sm:$0xff]
        %v2182 = vld [vmem:[%s1128 + $0xc0] sm:$0xff]
        %v2183 = vld [vmem:[%s1128 + $0xc8] sm:$0xff]
        %v2184 = vld [vmem:[%s1128 + $0xd8] sm:$0xff]
        %v2185 = vld [vmem:[%s1128 + $0xe0] sm:$0xff]
        %v2186 = vld [vmem:[%s1128 + $0xf0] sm:$0xff]
        %v2187 = vld [vmem:[%s1128 + $0xf8] sm:$0xff]
        %v2188 = vld [vmem:[%s1128 + $0x108] sm:$0xff]
        %v2189 = vld [vmem:[%s1128 + $0x110] sm:$0xff]
        %v2190 = vld [vmem:[%s1128 + $0x120] sm:$0xff]
        %v2191 = vld [vmem:[%s1128 + $0x128] sm:$0xff]
        %v2192 = vld [vmem:[%s1128 + $0x138] sm:$0xff]
        %v2193 = vld [vmem:[%s1128 + $0x140] sm:$0xff]
        %v2194 = vld [vmem:[%s1128 + $0x150] sm:$0xff]
        %v2195 = vld [vmem:[%s1128 + $0x158] sm:$0xff]
        %v2196 = vld [vmem:[%s1128 + $0x168] sm:$0xff]
        %v2197 = vld [vmem:[%s1128 + $0x170] sm:$0xff]
        %v2198 = vlaneseq
        %v2199 = vshrl.u32 %v2198, 7
        %v2200 = vsub.s32 2, %v2199
        %v2201 = vrot.slane %v1162, %v2200
        %v2202 = vmul.f32 %v2166, %v2201
        %v2203 = vmul.f32 %v2167, %v2201
        %v2204 = vmul.f32 %v2168, %v2201
        %v2205 = vmul.f32 %v2169, %v2201
        %v2206 = vmul.f32 %v2170, %v2201
        %v2207 = vmul.f32 %v2171, %v2201
        %v2208 = vmul.f32 %v2172, %v2201
        %v2209 = vmul.f32 %v2173, %v2201
        %v2210 = vmul.f32 %v2174, %v2201
        %v2211 = vmul.f32 %v2175, %v2201
        %v2212 = vmul.f32 %v2176, %v2201
        %v2213 = vmul.f32 %v2177, %v2201
        %v2214 = vmul.f32 %v2178, %v2201
        %v2215 = vmul.f32 %v2179, %v2201
        %v2216 = vmul.f32 %v2180, %v2201
        %v2217 = vmul.f32 %v2181, %v2201
        %v2218 = vmul.f32 %v2182, %v2201
        %v2219 = vmul.f32 %v2183, %v2201
        %v2220 = vmul.f32 %v2184, %v2201
        %v2221 = vmul.f32 %v2185, %v2201
        %v2222 = vmul.f32 %v2186, %v2201
        %v2223 = vmul.f32 %v2187, %v2201
        %v2224 = vmul.f32 %v2188, %v2201
        %v2225 = vmul.f32 %v2189, %v2201
        %v2226 = vmul.f32 %v2190, %v2201
        %v2227 = vmul.f32 %v2191, %v2201
        %v2228 = vmul.f32 %v2192, %v2201
        %v2229 = vmul.f32 %v2193, %v2201
        %v2230 = vmul.f32 %v2194, %v2201
        %v2231 = vmul.f32 %v2195, %v2201
        %v2232 = vmul.f32 %v2196, %v2201
        %v2233 = vmul.f32 %v2197, %v2201
        %v2234 = vadd.f32 %v2134, %v2202
        %v2235 = vadd.f32 %v2135, %v2203
        %v2236 = vadd.f32 %v2136, %v2204
        %v2237 = vadd.f32 %v2137, %v2205
        %v2238 = vadd.f32 %v2138, %v2206
        %v2239 = vadd.f32 %v2139, %v2207
        %v2240 = vadd.f32 %v2140, %v2208
        %v2241 = vadd.f32 %v2141, %v2209
        %v2242 = vadd.f32 %v2142, %v2210
        %v2243 = vadd.f32 %v2143, %v2211
        %v2244 = vadd.f32 %v2144, %v2212
        %v2245 = vadd.f32 %v2145, %v2213
        %v2246 = vadd.f32 %v2146, %v2214
        %v2247 = vadd.f32 %v2147, %v2215
        %v2248 = vadd.f32 %v2148, %v2216
        %v2249 = vadd.f32 %v2149, %v2217
        %v2250 = vadd.f32 %v2150, %v2218
        %v2251 = vadd.f32 %v2151, %v2219
        %v2252 = vadd.f32 %v2152, %v2220
        %v2253 = vadd.f32 %v2153, %v2221
        %v2254 = vadd.f32 %v2154, %v2222
        %v2255 = vadd.f32 %v2155, %v2223
        %v2256 = vadd.f32 %v2156, %v2224
        %v2257 = vadd.f32 %v2157, %v2225
        %v2258 = vadd.f32 %v2158, %v2226
        %v2259 = vadd.f32 %v2159, %v2227
        %v2260 = vadd.f32 %v2160, %v2228
        %v2261 = vadd.f32 %v2161, %v2229
        %v2262 = vadd.f32 %v2162, %v2230
        %v2263 = vadd.f32 %v2163, %v2231
        %v2264 = vadd.f32 %v2164, %v2232
        %v2265 = vadd.f32 %v2165, %v2233
        %v2266 = vld [vmem:[%s1128 + $0x1] sm:$0xff]
        %v2267 = vld [vmem:[%s1128 + $0x9] sm:$0xff]
        %v2268 = vld [vmem:[%s1128 + $0x19] sm:$0xff]
        %v2269 = vld [vmem:[%s1128 + $0x21] sm:$0xff]
        %v2270 = vld [vmem:[%s1128 + $0x31] sm:$0xff]
        %v2271 = vld [vmem:[%s1128 + $0x39] sm:$0xff]
        %v2272 = vld [vmem:[%s1128 + $0x49] sm:$0xff]
        %v2273 = vld [vmem:[%s1128 + $0x51] sm:$0xff]
        %v2274 = vld [vmem:[%s1128 + $0x61] sm:$0xff]
        %v2275 = vld [vmem:[%s1128 + $0x69] sm:$0xff]
        %v2276 = vld [vmem:[%s1128 + $0x79] sm:$0xff]
        %v2277 = vld [vmem:[%s1128 + $0x81] sm:$0xff]
        %v2278 = vld [vmem:[%s1128 + $0x91] sm:$0xff]
        %v2279 = vld [vmem:[%s1128 + $0x99] sm:$0xff]
        %v2280 = vld [vmem:[%s1128 + $0xa9] sm:$0xff]
        %v2281 = vld [vmem:[%s1128 + $0xb1] sm:$0xff]
        %v2282 = vld [vmem:[%s1128 + $0xc1] sm:$0xff]
        %v2283 = vld [vmem:[%s1128 + $0xc9] sm:$0xff]
        %v2284 = vld [vmem:[%s1128 + $0xd9] sm:$0xff]
        %v2285 = vld [vmem:[%s1128 + $0xe1] sm:$0xff]
        %v2286 = vld [vmem:[%s1128 + $0xf1] sm:$0xff]
        %v2287 = vld [vmem:[%s1128 + $0xf9] sm:$0xff]
        %v2288 = vld [vmem:[%s1128 + $0x109] sm:$0xff]
        %v2289 = vld [vmem:[%s1128 + $0x111] sm:$0xff]
        %v2290 = vld [vmem:[%s1128 + $0x121] sm:$0xff]
        %v2291 = vld [vmem:[%s1128 + $0x129] sm:$0xff]
        %v2292 = vld [vmem:[%s1128 + $0x139] sm:$0xff]
        %v2293 = vld [vmem:[%s1128 + $0x141] sm:$0xff]
        %v2294 = vld [vmem:[%s1128 + $0x151] sm:$0xff]
        %v2295 = vld [vmem:[%s1128 + $0x159] sm:$0xff]
        %v2296 = vld [vmem:[%s1128 + $0x169] sm:$0xff]
        %v2297 = vld [vmem:[%s1128 + $0x171] sm:$0xff]
        %v2298 = vlaneseq
        %v2299 = vshrl.u32 %v2298, 7
        %v2300 = vsub.s32 3, %v2299
        %v2301 = vrot.slane %v1162, %v2300
        %v2302 = vmul.f32 %v2266, %v2301
        %v2303 = vmul.f32 %v2267, %v2301
        %v2304 = vmul.f32 %v2268, %v2301
        %v2305 = vmul.f32 %v2269, %v2301
        %v2306 = vmul.f32 %v2270, %v2301
        %v2307 = vmul.f32 %v2271, %v2301
        %v2308 = vmul.f32 %v2272, %v2301
        %v2309 = vmul.f32 %v2273, %v2301
        %v2310 = vmul.f32 %v2274, %v2301
        %v2311 = vmul.f32 %v2275, %v2301
        %v2312 = vmul.f32 %v2276, %v2301
        %v2313 = vmul.f32 %v2277, %v2301
        %v2314 = vmul.f32 %v2278, %v2301
        %v2315 = vmul.f32 %v2279, %v2301
        %v2316 = vmul.f32 %v2280, %v2301
        %v2317 = vmul.f32 %v2281, %v2301
        %v2318 = vmul.f32 %v2282, %v2301
        %v2319 = vmul.f32 %v2283, %v2301
        %v2320 = vmul.f32 %v2284, %v2301
        %v2321 = vmul.f32 %v2285, %v2301
        %v2322 = vmul.f32 %v2286, %v2301
        %v2323 = vmul.f32 %v2287, %v2301
        %v2324 = vmul.f32 %v2288, %v2301
        %v2325 = vmul.f32 %v2289, %v2301
        %v2326 = vmul.f32 %v2290, %v2301
        %v2327 = vmul.f32 %v2291, %v2301
        %v2328 = vmul.f32 %v2292, %v2301
        %v2329 = vmul.f32 %v2293, %v2301
        %v2330 = vmul.f32 %v2294, %v2301
        %v2331 = vmul.f32 %v2295, %v2301
        %v2332 = vmul.f32 %v2296, %v2301
        %v2333 = vmul.f32 %v2297, %v2301
        %v2334 = vadd.f32 %v2234, %v2302
        %v2335 = vadd.f32 %v2235, %v2303
        %v2336 = vadd.f32 %v2236, %v2304
        %v2337 = vadd.f32 %v2237, %v2305
        %v2338 = vadd.f32 %v2238, %v2306
        %v2339 = vadd.f32 %v2239, %v2307
        %v2340 = vadd.f32 %v2240, %v2308
        %v2341 = vadd.f32 %v2241, %v2309
        %v2342 = vadd.f32 %v2242, %v2310
        %v2343 = vadd.f32 %v2243, %v2311
        %v2344 = vadd.f32 %v2244, %v2312
        %v2345 = vadd.f32 %v2245, %v2313
        %v2346 = vadd.f32 %v2246, %v2314
        %v2347 = vadd.f32 %v2247, %v2315
        %v2348 = vadd.f32 %v2248, %v2316
        %v2349 = vadd.f32 %v2249, %v2317
        %v2350 = vadd.f32 %v2250, %v2318
        %v2351 = vadd.f32 %v2251, %v2319
        %v2352 = vadd.f32 %v2252, %v2320
        %v2353 = vadd.f32 %v2253, %v2321
        %v2354 = vadd.f32 %v2254, %v2322
        %v2355 = vadd.f32 %v2255, %v2323
        %v2356 = vadd.f32 %v2256, %v2324
        %v2357 = vadd.f32 %v2257, %v2325
        %v2358 = vadd.f32 %v2258, %v2326
        %v2359 = vadd.f32 %v2259, %v2327
        %v2360 = vadd.f32 %v2260, %v2328
        %v2361 = vadd.f32 %v2261, %v2329
        %v2362 = vadd.f32 %v2262, %v2330
        %v2363 = vadd.f32 %v2263, %v2331
        %v2364 = vadd.f32 %v2264, %v2332
        %v2365 = vadd.f32 %v2265, %v2333
        %v2366 = vld [vmem:[%s1128 + $0x2] sm:$0xff]
        %v2367 = vld [vmem:[%s1128 + $0xa] sm:$0xff]
        %v2368 = vld [vmem:[%s1128 + $0x1a] sm:$0xff]
        %v2369 = vld [vmem:[%s1128 + $0x22] sm:$0xff]
        %v2370 = vld [vmem:[%s1128 + $0x32] sm:$0xff]
        %v2371 = vld [vmem:[%s1128 + $0x3a] sm:$0xff]
        %v2372 = vld [vmem:[%s1128 + $0x4a] sm:$0xff]
        %v2373 = vld [vmem:[%s1128 + $0x52] sm:$0xff]
        %v2374 = vld [vmem:[%s1128 + $0x62] sm:$0xff]
        %v2375 = vld [vmem:[%s1128 + $0x6a] sm:$0xff]
        %v2376 = vld [vmem:[%s1128 + $0x7a] sm:$0xff]
        %v2377 = vld [vmem:[%s1128 + $0x82] sm:$0xff]
        %v2378 = vld [vmem:[%s1128 + $0x92] sm:$0xff]
        %v2379 = vld [vmem:[%s1128 + $0x9a] sm:$0xff]
        %v2380 = vld [vmem:[%s1128 + $0xaa] sm:$0xff]
        %v2381 = vld [vmem:[%s1128 + $0xb2] sm:$0xff]
        %v2382 = vld [vmem:[%s1128 + $0xc2] sm:$0xff]
        %v2383 = vld [vmem:[%s1128 + $0xca] sm:$0xff]
        %v2384 = vld [vmem:[%s1128 + $0xda] sm:$0xff]
        %v2385 = vld [vmem:[%s1128 + $0xe2] sm:$0xff]
        %v2386 = vld [vmem:[%s1128 + $0xf2] sm:$0xff]
        %v2387 = vld [vmem:[%s1128 + $0xfa] sm:$0xff]
        %v2388 = vld [vmem:[%s1128 + $0x10a] sm:$0xff]
        %v2389 = vld [vmem:[%s1128 + $0x112] sm:$0xff]
        %v2390 = vld [vmem:[%s1128 + $0x122] sm:$0xff]
        %v2391 = vld [vmem:[%s1128 + $0x12a] sm:$0xff]
        %v2392 = vld [vmem:[%s1128 + $0x13a] sm:$0xff]
        %v2393 = vld [vmem:[%s1128 + $0x142] sm:$0xff]
        %v2394 = vld [vmem:[%s1128 + $0x152] sm:$0xff]
        %v2395 = vld [vmem:[%s1128 + $0x15a] sm:$0xff]
        %v2396 = vld [vmem:[%s1128 + $0x16a] sm:$0xff]
        %v2397 = vld [vmem:[%s1128 + $0x172] sm:$0xff]
        %v2398 = vlaneseq
        %v2399 = vshrl.u32 %v2398, 7
        %v2400 = vsub.s32 4, %v2399
        %v2401 = vrot.slane %v1162, %v2400
        %v2402 = vmul.f32 %v2366, %v2401
        %v2403 = vmul.f32 %v2367, %v2401
        %v2404 = vmul.f32 %v2368, %v2401
        %v2405 = vmul.f32 %v2369, %v2401
        %v2406 = vmul.f32 %v2370, %v2401
        %v2407 = vmul.f32 %v2371, %v2401
        %v2408 = vmul.f32 %v2372, %v2401
        %v2409 = vmul.f32 %v2373, %v2401
        %v2410 = vmul.f32 %v2374, %v2401
        %v2411 = vmul.f32 %v2375, %v2401
        %v2412 = vmul.f32 %v2376, %v2401
        %v2413 = vmul.f32 %v2377, %v2401
        %v2414 = vmul.f32 %v2378, %v2401
        %v2415 = vmul.f32 %v2379, %v2401
        %v2416 = vmul.f32 %v2380, %v2401
        %v2417 = vmul.f32 %v2381, %v2401
        %v2418 = vmul.f32 %v2382, %v2401
        %v2419 = vmul.f32 %v2383, %v2401
        %v2420 = vmul.f32 %v2384, %v2401
        %v2421 = vmul.f32 %v2385, %v2401
        %v2422 = vmul.f32 %v2386, %v2401
        %v2423 = vmul.f32 %v2387, %v2401
        %v2424 = vmul.f32 %v2388, %v2401
        %v2425 = vmul.f32 %v2389, %v2401
        %v2426 = vmul.f32 %v2390, %v2401
        %v2427 = vmul.f32 %v2391, %v2401
        %v2428 = vmul.f32 %v2392, %v2401
        %v2429 = vmul.f32 %v2393, %v2401
        %v2430 = vmul.f32 %v2394, %v2401
        %v2431 = vmul.f32 %v2395, %v2401
        %v2432 = vmul.f32 %v2396, %v2401
        %v2433 = vmul.f32 %v2397, %v2401
        %v2434 = vadd.f32 %v2334, %v2402
        %v2435 = vadd.f32 %v2335, %v2403
        %v2436 = vadd.f32 %v2336, %v2404
        %v2437 = vadd.f32 %v2337, %v2405
        %v2438 = vadd.f32 %v2338, %v2406
        %v2439 = vadd.f32 %v2339, %v2407
        %v2440 = vadd.f32 %v2340, %v2408
        %v2441 = vadd.f32 %v2341, %v2409
        %v2442 = vadd.f32 %v2342, %v2410
        %v2443 = vadd.f32 %v2343, %v2411
        %v2444 = vadd.f32 %v2344, %v2412
        %v2445 = vadd.f32 %v2345, %v2413
        %v2446 = vadd.f32 %v2346, %v2414
        %v2447 = vadd.f32 %v2347, %v2415
        %v2448 = vadd.f32 %v2348, %v2416
        %v2449 = vadd.f32 %v2349, %v2417
        %v2450 = vadd.f32 %v2350, %v2418
        %v2451 = vadd.f32 %v2351, %v2419
        %v2452 = vadd.f32 %v2352, %v2420
        %v2453 = vadd.f32 %v2353, %v2421
        %v2454 = vadd.f32 %v2354, %v2422
        %v2455 = vadd.f32 %v2355, %v2423
        %v2456 = vadd.f32 %v2356, %v2424
        %v2457 = vadd.f32 %v2357, %v2425
        %v2458 = vadd.f32 %v2358, %v2426
        %v2459 = vadd.f32 %v2359, %v2427
        %v2460 = vadd.f32 %v2360, %v2428
        %v2461 = vadd.f32 %v2361, %v2429
        %v2462 = vadd.f32 %v2362, %v2430
        %v2463 = vadd.f32 %v2363, %v2431
        %v2464 = vadd.f32 %v2364, %v2432
        %v2465 = vadd.f32 %v2365, %v2433
        %v2466 = vld [vmem:[%s1128 + $0x3] sm:$0xff]
        %v2467 = vld [vmem:[%s1128 + $0xb] sm:$0xff]
        %v2468 = vld [vmem:[%s1128 + $0x1b] sm:$0xff]
        %v2469 = vld [vmem:[%s1128 + $0x23] sm:$0xff]
        %v2470 = vld [vmem:[%s1128 + $0x33] sm:$0xff]
        %v2471 = vld [vmem:[%s1128 + $0x3b] sm:$0xff]
        %v2472 = vld [vmem:[%s1128 + $0x4b] sm:$0xff]
        %v2473 = vld [vmem:[%s1128 + $0x53] sm:$0xff]
        %v2474 = vld [vmem:[%s1128 + $0x63] sm:$0xff]
        %v2475 = vld [vmem:[%s1128 + $0x6b] sm:$0xff]
        %v2476 = vld [vmem:[%s1128 + $0x7b] sm:$0xff]
        %v2477 = vld [vmem:[%s1128 + $0x83] sm:$0xff]
        %v2478 = vld [vmem:[%s1128 + $0x93] sm:$0xff]
        %v2479 = vld [vmem:[%s1128 + $0x9b] sm:$0xff]
        %v2480 = vld [vmem:[%s1128 + $0xab] sm:$0xff]
        %v2481 = vld [vmem:[%s1128 + $0xb3] sm:$0xff]
        %v2482 = vld [vmem:[%s1128 + $0xc3] sm:$0xff]
        %v2483 = vld [vmem:[%s1128 + $0xcb] sm:$0xff]
        %v2484 = vld [vmem:[%s1128 + $0xdb] sm:$0xff]
        %v2485 = vld [vmem:[%s1128 + $0xe3] sm:$0xff]
        %v2486 = vld [vmem:[%s1128 + $0xf3] sm:$0xff]
        %v2487 = vld [vmem:[%s1128 + $0xfb] sm:$0xff]
        %v2488 = vld [vmem:[%s1128 + $0x10b] sm:$0xff]
        %v2489 = vld [vmem:[%s1128 + $0x113] sm:$0xff]
        %v2490 = vld [vmem:[%s1128 + $0x123] sm:$0xff]
        %v2491 = vld [vmem:[%s1128 + $0x12b] sm:$0xff]
        %v2492 = vld [vmem:[%s1128 + $0x13b] sm:$0xff]
        %v2493 = vld [vmem:[%s1128 + $0x143] sm:$0xff]
        %v2494 = vld [vmem:[%s1128 + $0x153] sm:$0xff]
        %v2495 = vld [vmem:[%s1128 + $0x15b] sm:$0xff]
        %v2496 = vld [vmem:[%s1128 + $0x16b] sm:$0xff]
        %v2497 = vld [vmem:[%s1128 + $0x173] sm:$0xff]
        %v2498 = vlaneseq
        %v2499 = vshrl.u32 %v2498, 7
        %v2500 = vsub.s32 5, %v2499
        %v2501 = vrot.slane %v1162, %v2500
        %v2502 = vmul.f32 %v2466, %v2501
        %v2503 = vmul.f32 %v2467, %v2501
        %v2504 = vmul.f32 %v2468, %v2501
        %v2505 = vmul.f32 %v2469, %v2501
        %v2506 = vmul.f32 %v2470, %v2501
        %v2507 = vmul.f32 %v2471, %v2501
        %v2508 = vmul.f32 %v2472, %v2501
        %v2509 = vmul.f32 %v2473, %v2501
        %v2510 = vmul.f32 %v2474, %v2501
        %v2511 = vmul.f32 %v2475, %v2501
        %v2512 = vmul.f32 %v2476, %v2501
        %v2513 = vmul.f32 %v2477, %v2501
        %v2514 = vmul.f32 %v2478, %v2501
        %v2515 = vmul.f32 %v2479, %v2501
        %v2516 = vmul.f32 %v2480, %v2501
        %v2517 = vmul.f32 %v2481, %v2501
        %v2518 = vmul.f32 %v2482, %v2501
        %v2519 = vmul.f32 %v2483, %v2501
        %v2520 = vmul.f32 %v2484, %v2501
        %v2521 = vmul.f32 %v2485, %v2501
        %v2522 = vmul.f32 %v2486, %v2501
        %v2523 = vmul.f32 %v2487, %v2501
        %v2524 = vmul.f32 %v2488, %v2501
        %v2525 = vmul.f32 %v2489, %v2501
        %v2526 = vmul.f32 %v2490, %v2501
        %v2527 = vmul.f32 %v2491, %v2501
        %v2528 = vmul.f32 %v2492, %v2501
        %v2529 = vmul.f32 %v2493, %v2501
        %v2530 = vmul.f32 %v2494, %v2501
        %v2531 = vmul.f32 %v2495, %v2501
        %v2532 = vmul.f32 %v2496, %v2501
        %v2533 = vmul.f32 %v2497, %v2501
        %v2534 = vadd.f32 %v2434, %v2502
        %v2535 = vadd.f32 %v2435, %v2503
        %v2536 = vadd.f32 %v2436, %v2504
        %v2537 = vadd.f32 %v2437, %v2505
        %v2538 = vadd.f32 %v2438, %v2506
        %v2539 = vadd.f32 %v2439, %v2507
        %v2540 = vadd.f32 %v2440, %v2508
        %v2541 = vadd.f32 %v2441, %v2509
        %v2542 = vadd.f32 %v2442, %v2510
        %v2543 = vadd.f32 %v2443, %v2511
        %v2544 = vadd.f32 %v2444, %v2512
        %v2545 = vadd.f32 %v2445, %v2513
        %v2546 = vadd.f32 %v2446, %v2514
        %v2547 = vadd.f32 %v2447, %v2515
        %v2548 = vadd.f32 %v2448, %v2516
        %v2549 = vadd.f32 %v2449, %v2517
        %v2550 = vadd.f32 %v2450, %v2518
        %v2551 = vadd.f32 %v2451, %v2519
        %v2552 = vadd.f32 %v2452, %v2520
        %v2553 = vadd.f32 %v2453, %v2521
        %v2554 = vadd.f32 %v2454, %v2522
        %v2555 = vadd.f32 %v2455, %v2523
        %v2556 = vadd.f32 %v2456, %v2524
        %v2557 = vadd.f32 %v2457, %v2525
        %v2558 = vadd.f32 %v2458, %v2526
        %v2559 = vadd.f32 %v2459, %v2527
        %v2560 = vadd.f32 %v2460, %v2528
        %v2561 = vadd.f32 %v2461, %v2529
        %v2562 = vadd.f32 %v2462, %v2530
        %v2563 = vadd.f32 %v2463, %v2531
        %v2564 = vadd.f32 %v2464, %v2532
        %v2565 = vadd.f32 %v2465, %v2533
        %v2566 = vld [vmem:[%s1128 + $0x4] sm:$0xff]
        %v2567 = vld [vmem:[%s1128 + $0xc] sm:$0xff]
        %v2568 = vld [vmem:[%s1128 + $0x1c] sm:$0xff]
        %v2569 = vld [vmem:[%s1128 + $0x24] sm:$0xff]
        %v2570 = vld [vmem:[%s1128 + $0x34] sm:$0xff]
        %v2571 = vld [vmem:[%s1128 + $0x3c] sm:$0xff]
        %v2572 = vld [vmem:[%s1128 + $0x4c] sm:$0xff]
        %v2573 = vld [vmem:[%s1128 + $0x54] sm:$0xff]
        %v2574 = vld [vmem:[%s1128 + $0x64] sm:$0xff]
        %v2575 = vld [vmem:[%s1128 + $0x6c] sm:$0xff]
        %v2576 = vld [vmem:[%s1128 + $0x7c] sm:$0xff]
        %v2577 = vld [vmem:[%s1128 + $0x84] sm:$0xff]
        %v2578 = vld [vmem:[%s1128 + $0x94] sm:$0xff]
        %v2579 = vld [vmem:[%s1128 + $0x9c] sm:$0xff]
        %v2580 = vld [vmem:[%s1128 + $0xac] sm:$0xff]
        %v2581 = vld [vmem:[%s1128 + $0xb4] sm:$0xff]
        %v2582 = vld [vmem:[%s1128 + $0xc4] sm:$0xff]
        %v2583 = vld [vmem:[%s1128 + $0xcc] sm:$0xff]
        %v2584 = vld [vmem:[%s1128 + $0xdc] sm:$0xff]
        %v2585 = vld [vmem:[%s1128 + $0xe4] sm:$0xff]
        %v2586 = vld [vmem:[%s1128 + $0xf4] sm:$0xff]
        %v2587 = vld [vmem:[%s1128 + $0xfc] sm:$0xff]
        %v2588 = vld [vmem:[%s1128 + $0x10c] sm:$0xff]
        %v2589 = vld [vmem:[%s1128 + $0x114] sm:$0xff]
        %v2590 = vld [vmem:[%s1128 + $0x124] sm:$0xff]
        %v2591 = vld [vmem:[%s1128 + $0x12c] sm:$0xff]
        %v2592 = vld [vmem:[%s1128 + $0x13c] sm:$0xff]
        %v2593 = vld [vmem:[%s1128 + $0x144] sm:$0xff]
        %v2594 = vld [vmem:[%s1128 + $0x154] sm:$0xff]
        %v2595 = vld [vmem:[%s1128 + $0x15c] sm:$0xff]
        %v2596 = vld [vmem:[%s1128 + $0x16c] sm:$0xff]
        %v2597 = vld [vmem:[%s1128 + $0x174] sm:$0xff]
        %v2598 = vlaneseq
        %v2599 = vshrl.u32 %v2598, 7
        %v2600 = vsub.s32 6, %v2599
        %v2601 = vrot.slane %v1162, %v2600
        %v2602 = vmul.f32 %v2566, %v2601
        %v2603 = vmul.f32 %v2567, %v2601
        %v2604 = vmul.f32 %v2568, %v2601
        %v2605 = vmul.f32 %v2569, %v2601
        %v2606 = vmul.f32 %v2570, %v2601
        %v2607 = vmul.f32 %v2571, %v2601
        %v2608 = vmul.f32 %v2572, %v2601
        %v2609 = vmul.f32 %v2573, %v2601
        %v2610 = vmul.f32 %v2574, %v2601
        %v2611 = vmul.f32 %v2575, %v2601
        %v2612 = vmul.f32 %v2576, %v2601
        %v2613 = vmul.f32 %v2577, %v2601
        %v2614 = vmul.f32 %v2578, %v2601
        %v2615 = vmul.f32 %v2579, %v2601
        %v2616 = vmul.f32 %v2580, %v2601
        %v2617 = vmul.f32 %v2581, %v2601
        %v2618 = vmul.f32 %v2582, %v2601
        %v2619 = vmul.f32 %v2583, %v2601
        %v2620 = vmul.f32 %v2584, %v2601
        %v2621 = vmul.f32 %v2585, %v2601
        %v2622 = vmul.f32 %v2586, %v2601
        %v2623 = vmul.f32 %v2587, %v2601
        %v2624 = vmul.f32 %v2588, %v2601
        %v2625 = vmul.f32 %v2589, %v2601
        %v2626 = vmul.f32 %v2590, %v2601
        %v2627 = vmul.f32 %v2591, %v2601
        %v2628 = vmul.f32 %v2592, %v2601
        %v2629 = vmul.f32 %v2593, %v2601
        %v2630 = vmul.f32 %v2594, %v2601
        %v2631 = vmul.f32 %v2595, %v2601
        %v2632 = vmul.f32 %v2596, %v2601
        %v2633 = vmul.f32 %v2597, %v2601
        %v2634 = vadd.f32 %v2534, %v2602
        %v2635 = vadd.f32 %v2535, %v2603
        %v2636 = vadd.f32 %v2536, %v2604
        %v2637 = vadd.f32 %v2537, %v2605
        %v2638 = vadd.f32 %v2538, %v2606
        %v2639 = vadd.f32 %v2539, %v2607
        %v2640 = vadd.f32 %v2540, %v2608
        %v2641 = vadd.f32 %v2541, %v2609
        %v2642 = vadd.f32 %v2542, %v2610
        %v2643 = vadd.f32 %v2543, %v2611
        %v2644 = vadd.f32 %v2544, %v2612
        %v2645 = vadd.f32 %v2545, %v2613
        %v2646 = vadd.f32 %v2546, %v2614
        %v2647 = vadd.f32 %v2547, %v2615
        %v2648 = vadd.f32 %v2548, %v2616
        %v2649 = vadd.f32 %v2549, %v2617
        %v2650 = vadd.f32 %v2550, %v2618
        %v2651 = vadd.f32 %v2551, %v2619
        %v2652 = vadd.f32 %v2552, %v2620
        %v2653 = vadd.f32 %v2553, %v2621
        %v2654 = vadd.f32 %v2554, %v2622
        %v2655 = vadd.f32 %v2555, %v2623
        %v2656 = vadd.f32 %v2556, %v2624
        %v2657 = vadd.f32 %v2557, %v2625
        %v2658 = vadd.f32 %v2558, %v2626
        %v2659 = vadd.f32 %v2559, %v2627
        %v2660 = vadd.f32 %v2560, %v2628
        %v2661 = vadd.f32 %v2561, %v2629
        %v2662 = vadd.f32 %v2562, %v2630
        %v2663 = vadd.f32 %v2563, %v2631
        %v2664 = vadd.f32 %v2564, %v2632
        %v2665 = vadd.f32 %v2565, %v2633
        %s2666 = scalar_lea.vmem [#allocation2], 72
        %v2667 = vld [vmem:[%s2666] sm:$0xff]
        %v2668 = vld [vmem:[%s2666 + $0x8] sm:$0xff]
        %v2669 = vld [vmem:[%s2666 + $0x18] sm:$0xff]
        %v2670 = vld [vmem:[%s2666 + $0x20] sm:$0xff]
        %v2671 = vld [vmem:[%s2666 + $0x30] sm:$0xff]
        %v2672 = vld [vmem:[%s2666 + $0x38] sm:$0xff]
        %v2673 = vld [vmem:[%s2666 + $0x48] sm:$0xff]
        %v2674 = vld [vmem:[%s2666 + $0x50] sm:$0xff]
        %v2675 = vld [vmem:[%s2666 + $0x60] sm:$0xff]
        %v2676 = vld [vmem:[%s2666 + $0x68] sm:$0xff]
        %v2677 = vld [vmem:[%s2666 + $0x78] sm:$0xff]
        %v2678 = vld [vmem:[%s2666 + $0x80] sm:$0xff]
        %v2679 = vld [vmem:[%s2666 + $0x90] sm:$0xff]
        %v2680 = vld [vmem:[%s2666 + $0x98] sm:$0xff]
        %v2681 = vld [vmem:[%s2666 + $0xa8] sm:$0xff]
        %v2682 = vld [vmem:[%s2666 + $0xb0] sm:$0xff]
        %v2683 = vld [vmem:[%s2666 + $0xc0] sm:$0xff]
        %v2684 = vld [vmem:[%s2666 + $0xc8] sm:$0xff]
        %v2685 = vld [vmem:[%s2666 + $0xd8] sm:$0xff]
        %v2686 = vld [vmem:[%s2666 + $0xe0] sm:$0xff]
        %v2687 = vld [vmem:[%s2666 + $0xf0] sm:$0xff]
        %v2688 = vld [vmem:[%s2666 + $0xf8] sm:$0xff]
        %v2689 = vld [vmem:[%s2666 + $0x108] sm:$0xff]
        %v2690 = vld [vmem:[%s2666 + $0x110] sm:$0xff]
        %v2691 = vld [vmem:[%s2666 + $0x120] sm:$0xff]
        %v2692 = vld [vmem:[%s2666 + $0x128] sm:$0xff]
        %v2693 = vld [vmem:[%s2666 + $0x138] sm:$0xff]
        %v2694 = vld [vmem:[%s2666 + $0x140] sm:$0xff]
        %v2695 = vld [vmem:[%s2666 + $0x150] sm:$0xff]
        %v2696 = vld [vmem:[%s2666 + $0x158] sm:$0xff]
        %v2697 = vld [vmem:[%s2666 + $0x168] sm:$0xff]
        %v2698 = vld [vmem:[%s2666 + $0x170] sm:$0xff]
        %v2699 = vlaneseq
        %v2700 = vshrl.u32 %v2699, 7
        %v2701 = vsub.s32 7, %v2700
        %v2702 = vrot.slane %v1162, %v2701
        %v2703 = vmul.f32 %v2667, %v2702
        %v2704 = vmul.f32 %v2668, %v2702
        %v2705 = vmul.f32 %v2669, %v2702
        %v2706 = vmul.f32 %v2670, %v2702
        %v2707 = vmul.f32 %v2671, %v2702
        %v2708 = vmul.f32 %v2672, %v2702
        %v2709 = vmul.f32 %v2673, %v2702
        %v2710 = vmul.f32 %v2674, %v2702
        %v2711 = vmul.f32 %v2675, %v2702
        %v2712 = vmul.f32 %v2676, %v2702
        %v2713 = vmul.f32 %v2677, %v2702
        %v2714 = vmul.f32 %v2678, %v2702
        %v2715 = vmul.f32 %v2679, %v2702
        %v2716 = vmul.f32 %v2680, %v2702
        %v2717 = vmul.f32 %v2681, %v2702
        %v2718 = vmul.f32 %v2682, %v2702
        %v2719 = vmul.f32 %v2683, %v2702
        %v2720 = vmul.f32 %v2684, %v2702
        %v2721 = vmul.f32 %v2685, %v2702
        %v2722 = vmul.f32 %v2686, %v2702
        %v2723 = vmul.f32 %v2687, %v2702
        %v2724 = vmul.f32 %v2688, %v2702
        %v2725 = vmul.f32 %v2689, %v2702
        %v2726 = vmul.f32 %v2690, %v2702
        %v2727 = vmul.f32 %v2691, %v2702
        %v2728 = vmul.f32 %v2692, %v2702
        %v2729 = vmul.f32 %v2693, %v2702
        %v2730 = vmul.f32 %v2694, %v2702
        %v2731 = vmul.f32 %v2695, %v2702
        %v2732 = vmul.f32 %v2696, %v2702
        %v2733 = vmul.f32 %v2697, %v2702
        %v2734 = vmul.f32 %v2698, %v2702
        %v2735 = vadd.f32 %v2634, %v2703
        %v2736 = vadd.f32 %v2635, %v2704
        %v2737 = vadd.f32 %v2636, %v2705
        %v2738 = vadd.f32 %v2637, %v2706
        %v2739 = vadd.f32 %v2638, %v2707
        %v2740 = vadd.f32 %v2639, %v2708
        %v2741 = vadd.f32 %v2640, %v2709
        %v2742 = vadd.f32 %v2641, %v2710
        %v2743 = vadd.f32 %v2642, %v2711
        %v2744 = vadd.f32 %v2643, %v2712
        %v2745 = vadd.f32 %v2644, %v2713
        %v2746 = vadd.f32 %v2645, %v2714
        %v2747 = vadd.f32 %v2646, %v2715
        %v2748 = vadd.f32 %v2647, %v2716
        %v2749 = vadd.f32 %v2648, %v2717
        %v2750 = vadd.f32 %v2649, %v2718
        %v2751 = vadd.f32 %v2650, %v2719
        %v2752 = vadd.f32 %v2651, %v2720
        %v2753 = vadd.f32 %v2652, %v2721
        %v2754 = vadd.f32 %v2653, %v2722
        %v2755 = vadd.f32 %v2654, %v2723
        %v2756 = vadd.f32 %v2655, %v2724
        %v2757 = vadd.f32 %v2656, %v2725
        %v2758 = vadd.f32 %v2657, %v2726
        %v2759 = vadd.f32 %v2658, %v2727
        %v2760 = vadd.f32 %v2659, %v2728
        %v2761 = vadd.f32 %v2660, %v2729
        %v2762 = vadd.f32 %v2661, %v2730
        %v2763 = vadd.f32 %v2662, %v2731
        %v2764 = vadd.f32 %v2663, %v2732
        %v2765 = vadd.f32 %v2664, %v2733
        %v2766 = vadd.f32 %v2665, %v2734
        %v2767 = vld [vmem:[%s2666 + $0x1] sm:$0xff]
        %v2768 = vld [vmem:[%s2666 + $0x9] sm:$0xff]
        %v2769 = vld [vmem:[%s2666 + $0x19] sm:$0xff]
        %v2770 = vld [vmem:[%s2666 + $0x21] sm:$0xff]
        %v2771 = vld [vmem:[%s2666 + $0x31] sm:$0xff]
        %v2772 = vld [vmem:[%s2666 + $0x39] sm:$0xff]
        %v2773 = vld [vmem:[%s2666 + $0x49] sm:$0xff]
        %v2774 = vld [vmem:[%s2666 + $0x51] sm:$0xff]
        %v2775 = vld [vmem:[%s2666 + $0x61] sm:$0xff]
        %v2776 = vld [vmem:[%s2666 + $0x69] sm:$0xff]
        %v2777 = vld [vmem:[%s2666 + $0x79] sm:$0xff]
        %v2778 = vld [vmem:[%s2666 + $0x81] sm:$0xff]
        %v2779 = vld [vmem:[%s2666 + $0x91] sm:$0xff]
        %v2780 = vld [vmem:[%s2666 + $0x99] sm:$0xff]
        %v2781 = vld [vmem:[%s2666 + $0xa9] sm:$0xff]
        %v2782 = vld [vmem:[%s2666 + $0xb1] sm:$0xff]
        %v2783 = vld [vmem:[%s2666 + $0xc1] sm:$0xff]
        %v2784 = vld [vmem:[%s2666 + $0xc9] sm:$0xff]
        %v2785 = vld [vmem:[%s2666 + $0xd9] sm:$0xff]
        %v2786 = vld [vmem:[%s2666 + $0xe1] sm:$0xff]
        %v2787 = vld [vmem:[%s2666 + $0xf1] sm:$0xff]
        %v2788 = vld [vmem:[%s2666 + $0xf9] sm:$0xff]
        %v2789 = vld [vmem:[%s2666 + $0x109] sm:$0xff]
        %v2790 = vld [vmem:[%s2666 + $0x111] sm:$0xff]
        %v2791 = vld [vmem:[%s2666 + $0x121] sm:$0xff]
        %v2792 = vld [vmem:[%s2666 + $0x129] sm:$0xff]
        %v2793 = vld [vmem:[%s2666 + $0x139] sm:$0xff]
        %v2794 = vld [vmem:[%s2666 + $0x141] sm:$0xff]
        %v2795 = vld [vmem:[%s2666 + $0x151] sm:$0xff]
        %v2796 = vld [vmem:[%s2666 + $0x159] sm:$0xff]
        %v2797 = vld [vmem:[%s2666 + $0x169] sm:$0xff]
        %v2798 = vld [vmem:[%s2666 + $0x171] sm:$0xff]
        %v2799 = vlaneseq
        %v2800 = vshrl.u32 %v2799, 7
        %v2801 = vsub.s32 0, %v2800
        %v2802 = vrot.slane %v1163, %v2801
        %v2803 = vmul.f32 %v2767, %v2802
        %v2804 = vmul.f32 %v2768, %v2802
        %v2805 = vmul.f32 %v2769, %v2802
        %v2806 = vmul.f32 %v2770, %v2802
        %v2807 = vmul.f32 %v2771, %v2802
        %v2808 = vmul.f32 %v2772, %v2802
        %v2809 = vmul.f32 %v2773, %v2802
        %v2810 = vmul.f32 %v2774, %v2802
        %v2811 = vmul.f32 %v2775, %v2802
        %v2812 = vmul.f32 %v2776, %v2802
        %v2813 = vmul.f32 %v2777, %v2802
        %v2814 = vmul.f32 %v2778, %v2802
        %v2815 = vmul.f32 %v2779, %v2802
        %v2816 = vmul.f32 %v2780, %v2802
        %v2817 = vmul.f32 %v2781, %v2802
        %v2818 = vmul.f32 %v2782, %v2802
        %v2819 = vmul.f32 %v2783, %v2802
        %v2820 = vmul.f32 %v2784, %v2802
        %v2821 = vmul.f32 %v2785, %v2802
        %v2822 = vmul.f32 %v2786, %v2802
        %v2823 = vmul.f32 %v2787, %v2802
        %v2824 = vmul.f32 %v2788, %v2802
        %v2825 = vmul.f32 %v2789, %v2802
        %v2826 = vmul.f32 %v2790, %v2802
        %v2827 = vmul.f32 %v2791, %v2802
        %v2828 = vmul.f32 %v2792, %v2802
        %v2829 = vmul.f32 %v2793, %v2802
        %v2830 = vmul.f32 %v2794, %v2802
        %v2831 = vmul.f32 %v2795, %v2802
        %v2832 = vmul.f32 %v2796, %v2802
        %v2833 = vmul.f32 %v2797, %v2802
        %v2834 = vmul.f32 %v2798, %v2802
        %v2835 = vadd.f32 %v2735, %v2803
        %v2836 = vadd.f32 %v2736, %v2804
        %v2837 = vadd.f32 %v2737, %v2805
        %v2838 = vadd.f32 %v2738, %v2806
        %v2839 = vadd.f32 %v2739, %v2807
        %v2840 = vadd.f32 %v2740, %v2808
        %v2841 = vadd.f32 %v2741, %v2809
        %v2842 = vadd.f32 %v2742, %v2810
        %v2843 = vadd.f32 %v2743, %v2811
        %v2844 = vadd.f32 %v2744, %v2812
        %v2845 = vadd.f32 %v2745, %v2813
        %v2846 = vadd.f32 %v2746, %v2814
        %v2847 = vadd.f32 %v2747, %v2815
        %v2848 = vadd.f32 %v2748, %v2816
        %v2849 = vadd.f32 %v2749, %v2817
        %v2850 = vadd.f32 %v2750, %v2818
        %v2851 = vadd.f32 %v2751, %v2819
        %v2852 = vadd.f32 %v2752, %v2820
        %v2853 = vadd.f32 %v2753, %v2821
        %v2854 = vadd.f32 %v2754, %v2822
        %v2855 = vadd.f32 %v2755, %v2823
        %v2856 = vadd.f32 %v2756, %v2824
        %v2857 = vadd.f32 %v2757, %v2825
        %v2858 = vadd.f32 %v2758, %v2826
        %v2859 = vadd.f32 %v2759, %v2827
        %v2860 = vadd.f32 %v2760, %v2828
        %v2861 = vadd.f32 %v2761, %v2829
        %v2862 = vadd.f32 %v2762, %v2830
        %v2863 = vadd.f32 %v2763, %v2831
        %v2864 = vadd.f32 %v2764, %v2832
        %v2865 = vadd.f32 %v2765, %v2833
        %v2866 = vadd.f32 %v2766, %v2834
        %v2867 = vld [vmem:[%s2666 + $0x2] sm:$0xff]
        %v2868 = vld [vmem:[%s2666 + $0xa] sm:$0xff]
        %v2869 = vld [vmem:[%s2666 + $0x1a] sm:$0xff]
        %v2870 = vld [vmem:[%s2666 + $0x22] sm:$0xff]
        %v2871 = vld [vmem:[%s2666 + $0x32] sm:$0xff]
        %v2872 = vld [vmem:[%s2666 + $0x3a] sm:$0xff]
        %v2873 = vld [vmem:[%s2666 + $0x4a] sm:$0xff]
        %v2874 = vld [vmem:[%s2666 + $0x52] sm:$0xff]
        %v2875 = vld [vmem:[%s2666 + $0x62] sm:$0xff]
        %v2876 = vld [vmem:[%s2666 + $0x6a] sm:$0xff]
        %v2877 = vld [vmem:[%s2666 + $0x7a] sm:$0xff]
        %v2878 = vld [vmem:[%s2666 + $0x82] sm:$0xff]
        %v2879 = vld [vmem:[%s2666 + $0x92] sm:$0xff]
        %v2880 = vld [vmem:[%s2666 + $0x9a] sm:$0xff]
        %v2881 = vld [vmem:[%s2666 + $0xaa] sm:$0xff]
        %v2882 = vld [vmem:[%s2666 + $0xb2] sm:$0xff]
        %v2883 = vld [vmem:[%s2666 + $0xc2] sm:$0xff]
        %v2884 = vld [vmem:[%s2666 + $0xca] sm:$0xff]
        %v2885 = vld [vmem:[%s2666 + $0xda] sm:$0xff]
        %v2886 = vld [vmem:[%s2666 + $0xe2] sm:$0xff]
        %v2887 = vld [vmem:[%s2666 + $0xf2] sm:$0xff]
        %v2888 = vld [vmem:[%s2666 + $0xfa] sm:$0xff]
        %v2889 = vld [vmem:[%s2666 + $0x10a] sm:$0xff]
        %v2890 = vld [vmem:[%s2666 + $0x112] sm:$0xff]
        %v2891 = vld [vmem:[%s2666 + $0x122] sm:$0xff]
        %v2892 = vld [vmem:[%s2666 + $0x12a] sm:$0xff]
        %v2893 = vld [vmem:[%s2666 + $0x13a] sm:$0xff]
        %v2894 = vld [vmem:[%s2666 + $0x142] sm:$0xff]
        %v2895 = vld [vmem:[%s2666 + $0x152] sm:$0xff]
        %v2896 = vld [vmem:[%s2666 + $0x15a] sm:$0xff]
        %v2897 = vld [vmem:[%s2666 + $0x16a] sm:$0xff]
        %v2898 = vld [vmem:[%s2666 + $0x172] sm:$0xff]
        %v2899 = vlaneseq
        %v2900 = vshrl.u32 %v2899, 7
        %v2901 = vsub.s32 1, %v2900
        %v2902 = vrot.slane %v1163, %v2901
        %v2903 = vmul.f32 %v2867, %v2902
        %v2904 = vmul.f32 %v2868, %v2902
        %v2905 = vmul.f32 %v2869, %v2902
        %v2906 = vmul.f32 %v2870, %v2902
        %v2907 = vmul.f32 %v2871, %v2902
        %v2908 = vmul.f32 %v2872, %v2902
        %v2909 = vmul.f32 %v2873, %v2902
        %v2910 = vmul.f32 %v2874, %v2902
        %v2911 = vmul.f32 %v2875, %v2902
        %v2912 = vmul.f32 %v2876, %v2902
        %v2913 = vmul.f32 %v2877, %v2902
        %v2914 = vmul.f32 %v2878, %v2902
        %v2915 = vmul.f32 %v2879, %v2902
        %v2916 = vmul.f32 %v2880, %v2902
        %v2917 = vmul.f32 %v2881, %v2902
        %v2918 = vmul.f32 %v2882, %v2902
        %v2919 = vmul.f32 %v2883, %v2902
        %v2920 = vmul.f32 %v2884, %v2902
        %v2921 = vmul.f32 %v2885, %v2902
        %v2922 = vmul.f32 %v2886, %v2902
        %v2923 = vmul.f32 %v2887, %v2902
        %v2924 = vmul.f32 %v2888, %v2902
        %v2925 = vmul.f32 %v2889, %v2902
        %v2926 = vmul.f32 %v2890, %v2902
        %v2927 = vmul.f32 %v2891, %v2902
        %v2928 = vmul.f32 %v2892, %v2902
        %v2929 = vmul.f32 %v2893, %v2902
        %v2930 = vmul.f32 %v2894, %v2902
        %v2931 = vmul.f32 %v2895, %v2902
        %v2932 = vmul.f32 %v2896, %v2902
        %v2933 = vmul.f32 %v2897, %v2902
        %v2934 = vmul.f32 %v2898, %v2902
        %v2935 = vadd.f32 %v2835, %v2903
        %v2936 = vadd.f32 %v2836, %v2904
        %v2937 = vadd.f32 %v2837, %v2905
        %v2938 = vadd.f32 %v2838, %v2906
        %v2939 = vadd.f32 %v2839, %v2907
        %v2940 = vadd.f32 %v2840, %v2908
        %v2941 = vadd.f32 %v2841, %v2909
        %v2942 = vadd.f32 %v2842, %v2910
        %v2943 = vadd.f32 %v2843, %v2911
        %v2944 = vadd.f32 %v2844, %v2912
        %v2945 = vadd.f32 %v2845, %v2913
        %v2946 = vadd.f32 %v2846, %v2914
        %v2947 = vadd.f32 %v2847, %v2915
        %v2948 = vadd.f32 %v2848, %v2916
        %v2949 = vadd.f32 %v2849, %v2917
        %v2950 = vadd.f32 %v2850, %v2918
        %v2951 = vadd.f32 %v2851, %v2919
        %v2952 = vadd.f32 %v2852, %v2920
        %v2953 = vadd.f32 %v2853, %v2921
        %v2954 = vadd.f32 %v2854, %v2922
        %v2955 = vadd.f32 %v2855, %v2923
        %v2956 = vadd.f32 %v2856, %v2924
        %v2957 = vadd.f32 %v2857, %v2925
        %v2958 = vadd.f32 %v2858, %v2926
        %v2959 = vadd.f32 %v2859, %v2927
        %v2960 = vadd.f32 %v2860, %v2928
        %v2961 = vadd.f32 %v2861, %v2929
        %v2962 = vadd.f32 %v2862, %v2930
        %v2963 = vadd.f32 %v2863, %v2931
        %v2964 = vadd.f32 %v2864, %v2932
        %v2965 = vadd.f32 %v2865, %v2933
        %v2966 = vadd.f32 %v2866, %v2934
        %v2967 = vld [vmem:[%s2666 + $0x3] sm:$0xff]
        %v2968 = vld [vmem:[%s2666 + $0xb] sm:$0xff]
        %v2969 = vld [vmem:[%s2666 + $0x1b] sm:$0xff]
        %v2970 = vld [vmem:[%s2666 + $0x23] sm:$0xff]
        %v2971 = vld [vmem:[%s2666 + $0x33] sm:$0xff]
        %v2972 = vld [vmem:[%s2666 + $0x3b] sm:$0xff]
        %v2973 = vld [vmem:[%s2666 + $0x4b] sm:$0xff]
        %v2974 = vld [vmem:[%s2666 + $0x53] sm:$0xff]
        %v2975 = vld [vmem:[%s2666 + $0x63] sm:$0xff]
        %v2976 = vld [vmem:[%s2666 + $0x6b] sm:$0xff]
        %v2977 = vld [vmem:[%s2666 + $0x7b] sm:$0xff]
        %v2978 = vld [vmem:[%s2666 + $0x83] sm:$0xff]
        %v2979 = vld [vmem:[%s2666 + $0x93] sm:$0xff]
        %v2980 = vld [vmem:[%s2666 + $0x9b] sm:$0xff]
        %v2981 = vld [vmem:[%s2666 + $0xab] sm:$0xff]
        %v2982 = vld [vmem:[%s2666 + $0xb3] sm:$0xff]
        %v2983 = vld [vmem:[%s2666 + $0xc3] sm:$0xff]
        %v2984 = vld [vmem:[%s2666 + $0xcb] sm:$0xff]
        %v2985 = vld [vmem:[%s2666 + $0xdb] sm:$0xff]
        %v2986 = vld [vmem:[%s2666 + $0xe3] sm:$0xff]
        %v2987 = vld [vmem:[%s2666 + $0xf3] sm:$0xff]
        %v2988 = vld [vmem:[%s2666 + $0xfb] sm:$0xff]
        %v2989 = vld [vmem:[%s2666 + $0x10b] sm:$0xff]
        %v2990 = vld [vmem:[%s2666 + $0x113] sm:$0xff]
        %v2991 = vld [vmem:[%s2666 + $0x123] sm:$0xff]
        %v2992 = vld [vmem:[%s2666 + $0x12b] sm:$0xff]
        %v2993 = vld [vmem:[%s2666 + $0x13b] sm:$0xff]
        %v2994 = vld [vmem:[%s2666 + $0x143] sm:$0xff]
        %v2995 = vld [vmem:[%s2666 + $0x153] sm:$0xff]
        %v2996 = vld [vmem:[%s2666 + $0x15b] sm:$0xff]
        %v2997 = vld [vmem:[%s2666 + $0x16b] sm:$0xff]
        %v2998 = vld [vmem:[%s2666 + $0x173] sm:$0xff]
        %v2999 = vlaneseq
        %v3000 = vshrl.u32 %v2999, 7
        %v3001 = vsub.s32 2, %v3000
        %v3002 = vrot.slane %v1163, %v3001
        %v3003 = vmul.f32 %v2967, %v3002
        %v3004 = vmul.f32 %v2968, %v3002
        %v3005 = vmul.f32 %v2969, %v3002
        %v3006 = vmul.f32 %v2970, %v3002
        %v3007 = vmul.f32 %v2971, %v3002
        %v3008 = vmul.f32 %v2972, %v3002
        %v3009 = vmul.f32 %v2973, %v3002
        %v3010 = vmul.f32 %v2974, %v3002
        %v3011 = vmul.f32 %v2975, %v3002
        %v3012 = vmul.f32 %v2976, %v3002
        %v3013 = vmul.f32 %v2977, %v3002
        %v3014 = vmul.f32 %v2978, %v3002
        %v3015 = vmul.f32 %v2979, %v3002
        %v3016 = vmul.f32 %v2980, %v3002
        %v3017 = vmul.f32 %v2981, %v3002
        %v3018 = vmul.f32 %v2982, %v3002
        %v3019 = vmul.f32 %v2983, %v3002
        %v3020 = vmul.f32 %v2984, %v3002
        %v3021 = vmul.f32 %v2985, %v3002
        %v3022 = vmul.f32 %v2986, %v3002
        %v3023 = vmul.f32 %v2987, %v3002
        %v3024 = vmul.f32 %v2988, %v3002
        %v3025 = vmul.f32 %v2989, %v3002
        %v3026 = vmul.f32 %v2990, %v3002
        %v3027 = vmul.f32 %v2991, %v3002
        %v3028 = vmul.f32 %v2992, %v3002
        %v3029 = vmul.f32 %v2993, %v3002
        %v3030 = vmul.f32 %v2994, %v3002
        %v3031 = vmul.f32 %v2995, %v3002
        %v3032 = vmul.f32 %v2996, %v3002
        %v3033 = vmul.f32 %v2997, %v3002
        %v3034 = vmul.f32 %v2998, %v3002
        %v3035 = vadd.f32 %v2935, %v3003
        %v3036 = vadd.f32 %v2936, %v3004
        %v3037 = vadd.f32 %v2937, %v3005
        %v3038 = vadd.f32 %v2938, %v3006
        %v3039 = vadd.f32 %v2939, %v3007
        %v3040 = vadd.f32 %v2940, %v3008
        %v3041 = vadd.f32 %v2941, %v3009
        %v3042 = vadd.f32 %v2942, %v3010
        %v3043 = vadd.f32 %v2943, %v3011
        %v3044 = vadd.f32 %v2944, %v3012
        %v3045 = vadd.f32 %v2945, %v3013
        %v3046 = vadd.f32 %v2946, %v3014
        %v3047 = vadd.f32 %v2947, %v3015
        %v3048 = vadd.f32 %v2948, %v3016
        %v3049 = vadd.f32 %v2949, %v3017
        %v3050 = vadd.f32 %v2950, %v3018
        %v3051 = vadd.f32 %v2951, %v3019
        %v3052 = vadd.f32 %v2952, %v3020
        %v3053 = vadd.f32 %v2953, %v3021
        %v3054 = vadd.f32 %v2954, %v3022
        %v3055 = vadd.f32 %v2955, %v3023
        %v3056 = vadd.f32 %v2956, %v3024
        %v3057 = vadd.f32 %v2957, %v3025
        %v3058 = vadd.f32 %v2958, %v3026
        %v3059 = vadd.f32 %v2959, %v3027
        %v3060 = vadd.f32 %v2960, %v3028
        %v3061 = vadd.f32 %v2961, %v3029
        %v3062 = vadd.f32 %v2962, %v3030
        %v3063 = vadd.f32 %v2963, %v3031
        %v3064 = vadd.f32 %v2964, %v3032
        %v3065 = vadd.f32 %v2965, %v3033
        %v3066 = vadd.f32 %v2966, %v3034
        %v3067 = vld [vmem:[%s2666 + $0x4] sm:$0xff]
        %v3068 = vld [vmem:[%s2666 + $0xc] sm:$0xff]
        %v3069 = vld [vmem:[%s2666 + $0x1c] sm:$0xff]
        %v3070 = vld [vmem:[%s2666 + $0x24] sm:$0xff]
        %v3071 = vld [vmem:[%s2666 + $0x34] sm:$0xff]
        %v3072 = vld [vmem:[%s2666 + $0x3c] sm:$0xff]
        %v3073 = vld [vmem:[%s2666 + $0x4c] sm:$0xff]
        %v3074 = vld [vmem:[%s2666 + $0x54] sm:$0xff]
        %v3075 = vld [vmem:[%s2666 + $0x64] sm:$0xff]
        %v3076 = vld [vmem:[%s2666 + $0x6c] sm:$0xff]
        %v3077 = vld [vmem:[%s2666 + $0x7c] sm:$0xff]
        %v3078 = vld [vmem:[%s2666 + $0x84] sm:$0xff]
        %v3079 = vld [vmem:[%s2666 + $0x94] sm:$0xff]
        %v3080 = vld [vmem:[%s2666 + $0x9c] sm:$0xff]
        %v3081 = vld [vmem:[%s2666 + $0xac] sm:$0xff]
        %v3082 = vld [vmem:[%s2666 + $0xb4] sm:$0xff]
        %v3083 = vld [vmem:[%s2666 + $0xc4] sm:$0xff]
        %v3084 = vld [vmem:[%s2666 + $0xcc] sm:$0xff]
        %v3085 = vld [vmem:[%s2666 + $0xdc] sm:$0xff]
        %v3086 = vld [vmem:[%s2666 + $0xe4] sm:$0xff]
        %v3087 = vld [vmem:[%s2666 + $0xf4] sm:$0xff]
        %v3088 = vld [vmem:[%s2666 + $0xfc] sm:$0xff]
        %v3089 = vld [vmem:[%s2666 + $0x10c] sm:$0xff]
        %v3090 = vld [vmem:[%s2666 + $0x114] sm:$0xff]
        %v3091 = vld [vmem:[%s2666 + $0x124] sm:$0xff]
        %v3092 = vld [vmem:[%s2666 + $0x12c] sm:$0xff]
        %v3093 = vld [vmem:[%s2666 + $0x13c] sm:$0xff]
        %v3094 = vld [vmem:[%s2666 + $0x144] sm:$0xff]
        %v3095 = vld [vmem:[%s2666 + $0x154] sm:$0xff]
        %v3096 = vld [vmem:[%s2666 + $0x15c] sm:$0xff]
        %v3097 = vld [vmem:[%s2666 + $0x16c] sm:$0xff]
        %v3098 = vld [vmem:[%s2666 + $0x174] sm:$0xff]
        %v3099 = vlaneseq
        %v3100 = vshrl.u32 %v3099, 7
        %v3101 = vsub.s32 3, %v3100
        %v3102 = vrot.slane %v1163, %v3101
        %v3103 = vmul.f32 %v3067, %v3102
        %v3104 = vmul.f32 %v3068, %v3102
        %v3105 = vmul.f32 %v3069, %v3102
        %v3106 = vmul.f32 %v3070, %v3102
        %v3107 = vmul.f32 %v3071, %v3102
        %v3108 = vmul.f32 %v3072, %v3102
        %v3109 = vmul.f32 %v3073, %v3102
        %v3110 = vmul.f32 %v3074, %v3102
        %v3111 = vmul.f32 %v3075, %v3102
        %v3112 = vmul.f32 %v3076, %v3102
        %v3113 = vmul.f32 %v3077, %v3102
        %v3114 = vmul.f32 %v3078, %v3102
        %v3115 = vmul.f32 %v3079, %v3102
        %v3116 = vmul.f32 %v3080, %v3102
        %v3117 = vmul.f32 %v3081, %v3102
        %v3118 = vmul.f32 %v3082, %v3102
        %v3119 = vmul.f32 %v3083, %v3102
        %v3120 = vmul.f32 %v3084, %v3102
        %v3121 = vmul.f32 %v3085, %v3102
        %v3122 = vmul.f32 %v3086, %v3102
        %v3123 = vmul.f32 %v3087, %v3102
        %v3124 = vmul.f32 %v3088, %v3102
        %v3125 = vmul.f32 %v3089, %v3102
        %v3126 = vmul.f32 %v3090, %v3102
        %v3127 = vmul.f32 %v3091, %v3102
        %v3128 = vmul.f32 %v3092, %v3102
        %v3129 = vmul.f32 %v3093, %v3102
        %v3130 = vmul.f32 %v3094, %v3102
        %v3131 = vmul.f32 %v3095, %v3102
        %v3132 = vmul.f32 %v3096, %v3102
        %v3133 = vmul.f32 %v3097, %v3102
        %v3134 = vmul.f32 %v3098, %v3102
        %v3135 = vadd.f32 %v3035, %v3103
        %v3136 = vadd.f32 %v3036, %v3104
        %v3137 = vadd.f32 %v3037, %v3105
        %v3138 = vadd.f32 %v3038, %v3106
        %v3139 = vadd.f32 %v3039, %v3107
        %v3140 = vadd.f32 %v3040, %v3108
        %v3141 = vadd.f32 %v3041, %v3109
        %v3142 = vadd.f32 %v3042, %v3110
        %v3143 = vadd.f32 %v3043, %v3111
        %v3144 = vadd.f32 %v3044, %v3112
        %v3145 = vadd.f32 %v3045, %v3113
        %v3146 = vadd.f32 %v3046, %v3114
        %v3147 = vadd.f32 %v3047, %v3115
        %v3148 = vadd.f32 %v3048, %v3116
        %v3149 = vadd.f32 %v3049, %v3117
        %v3150 = vadd.f32 %v3050, %v3118
        %v3151 = vadd.f32 %v3051, %v3119
        %v3152 = vadd.f32 %v3052, %v3120
        %v3153 = vadd.f32 %v3053, %v3121
        %v3154 = vadd.f32 %v3054, %v3122
        %v3155 = vadd.f32 %v3055, %v3123
        %v3156 = vadd.f32 %v3056, %v3124
        %v3157 = vadd.f32 %v3057, %v3125
        %v3158 = vadd.f32 %v3058, %v3126
        %v3159 = vadd.f32 %v3059, %v3127
        %v3160 = vadd.f32 %v3060, %v3128
        %v3161 = vadd.f32 %v3061, %v3129
        %v3162 = vadd.f32 %v3062, %v3130
        %v3163 = vadd.f32 %v3063, %v3131
        %v3164 = vadd.f32 %v3064, %v3132
        %v3165 = vadd.f32 %v3065, %v3133
        %v3166 = vadd.f32 %v3066, %v3134
        %s3167 = scalar_lea.vmem [#allocation2], 96
        %v3168 = vld [vmem:[%s3167] sm:$0xff]
        %v3169 = vld [vmem:[%s3167 + $0x8] sm:$0xff]
        %v3170 = vld [vmem:[%s3167 + $0x18] sm:$0xff]
        %v3171 = vld [vmem:[%s3167 + $0x20] sm:$0xff]
        %v3172 = vld [vmem:[%s3167 + $0x30] sm:$0xff]
        %v3173 = vld [vmem:[%s3167 + $0x38] sm:$0xff]
        %v3174 = vld [vmem:[%s3167 + $0x48] sm:$0xff]
        %v3175 = vld [vmem:[%s3167 + $0x50] sm:$0xff]
        %v3176 = vld [vmem:[%s3167 + $0x60] sm:$0xff]
        %v3177 = vld [vmem:[%s3167 + $0x68] sm:$0xff]
        %v3178 = vld [vmem:[%s3167 + $0x78] sm:$0xff]
        %v3179 = vld [vmem:[%s3167 + $0x80] sm:$0xff]
        %v3180 = vld [vmem:[%s3167 + $0x90] sm:$0xff]
        %v3181 = vld [vmem:[%s3167 + $0x98] sm:$0xff]
        %v3182 = vld [vmem:[%s3167 + $0xa8] sm:$0xff]
        %v3183 = vld [vmem:[%s3167 + $0xb0] sm:$0xff]
        %v3184 = vld [vmem:[%s3167 + $0xc0] sm:$0xff]
        %v3185 = vld [vmem:[%s3167 + $0xc8] sm:$0xff]
        %v3186 = vld [vmem:[%s3167 + $0xd8] sm:$0xff]
        %v3187 = vld [vmem:[%s3167 + $0xe0] sm:$0xff]
        %v3188 = vld [vmem:[%s3167 + $0xf0] sm:$0xff]
        %v3189 = vld [vmem:[%s3167 + $0xf8] sm:$0xff]
        %v3190 = vld [vmem:[%s3167 + $0x108] sm:$0xff]
        %v3191 = vld [vmem:[%s3167 + $0x110] sm:$0xff]
        %v3192 = vld [vmem:[%s3167 + $0x120] sm:$0xff]
        %v3193 = vld [vmem:[%s3167 + $0x128] sm:$0xff]
        %v3194 = vld [vmem:[%s3167 + $0x138] sm:$0xff]
        %v3195 = vld [vmem:[%s3167 + $0x140] sm:$0xff]
        %v3196 = vld [vmem:[%s3167 + $0x150] sm:$0xff]
        %v3197 = vld [vmem:[%s3167 + $0x158] sm:$0xff]
        %v3198 = vld [vmem:[%s3167 + $0x168] sm:$0xff]
        %v3199 = vld [vmem:[%s3167 + $0x170] sm:$0xff]
        %v3200 = vlaneseq
        %v3201 = vshrl.u32 %v3200, 7
        %v3202 = vsub.s32 4, %v3201
        %v3203 = vrot.slane %v1163, %v3202
        %v3204 = vmul.f32 %v3168, %v3203
        %v3205 = vmul.f32 %v3169, %v3203
        %v3206 = vmul.f32 %v3170, %v3203
        %v3207 = vmul.f32 %v3171, %v3203
        %v3208 = vmul.f32 %v3172, %v3203
        %v3209 = vmul.f32 %v3173, %v3203
        %v3210 = vmul.f32 %v3174, %v3203
        %v3211 = vmul.f32 %v3175, %v3203
        %v3212 = vmul.f32 %v3176, %v3203
        %v3213 = vmul.f32 %v3177, %v3203
        %v3214 = vmul.f32 %v3178, %v3203
        %v3215 = vmul.f32 %v3179, %v3203
        %v3216 = vmul.f32 %v3180, %v3203
        %v3217 = vmul.f32 %v3181, %v3203
        %v3218 = vmul.f32 %v3182, %v3203
        %v3219 = vmul.f32 %v3183, %v3203
        %v3220 = vmul.f32 %v3184, %v3203
        %v3221 = vmul.f32 %v3185, %v3203
        %v3222 = vmul.f32 %v3186, %v3203
        %v3223 = vmul.f32 %v3187, %v3203
        %v3224 = vmul.f32 %v3188, %v3203
        %v3225 = vmul.f32 %v3189, %v3203
        %v3226 = vmul.f32 %v3190, %v3203
        %v3227 = vmul.f32 %v3191, %v3203
        %v3228 = vmul.f32 %v3192, %v3203
        %v3229 = vmul.f32 %v3193, %v3203
        %v3230 = vmul.f32 %v3194, %v3203
        %v3231 = vmul.f32 %v3195, %v3203
        %v3232 = vmul.f32 %v3196, %v3203
        %v3233 = vmul.f32 %v3197, %v3203
        %v3234 = vmul.f32 %v3198, %v3203
        %v3235 = vmul.f32 %v3199, %v3203
        %v3236 = vadd.f32 %v3135, %v3204
        %v3237 = vadd.f32 %v3136, %v3205
        %v3238 = vadd.f32 %v3137, %v3206
        %v3239 = vadd.f32 %v3138, %v3207
        %v3240 = vadd.f32 %v3139, %v3208
        %v3241 = vadd.f32 %v3140, %v3209
        %v3242 = vadd.f32 %v3141, %v3210
        %v3243 = vadd.f32 %v3142, %v3211
        %v3244 = vadd.f32 %v3143, %v3212
        %v3245 = vadd.f32 %v3144, %v3213
        %v3246 = vadd.f32 %v3145, %v3214
        %v3247 = vadd.f32 %v3146, %v3215
        %v3248 = vadd.f32 %v3147, %v3216
        %v3249 = vadd.f32 %v3148, %v3217
        %v3250 = vadd.f32 %v3149, %v3218
        %v3251 = vadd.f32 %v3150, %v3219
        %v3252 = vadd.f32 %v3151, %v3220
        %v3253 = vadd.f32 %v3152, %v3221
        %v3254 = vadd.f32 %v3153, %v3222
        %v3255 = vadd.f32 %v3154, %v3223
        %v3256 = vadd.f32 %v3155, %v3224
        %v3257 = vadd.f32 %v3156, %v3225
        %v3258 = vadd.f32 %v3157, %v3226
        %v3259 = vadd.f32 %v3158, %v3227
        %v3260 = vadd.f32 %v3159, %v3228
        %v3261 = vadd.f32 %v3160, %v3229
        %v3262 = vadd.f32 %v3161, %v3230
        %v3263 = vadd.f32 %v3162, %v3231
        %v3264 = vadd.f32 %v3163, %v3232
        %v3265 = vadd.f32 %v3164, %v3233
        %v3266 = vadd.f32 %v3165, %v3234
        %v3267 = vadd.f32 %v3166, %v3235
        %v3268 = vld [vmem:[%s3167 + $0x1] sm:$0xff]
        %v3269 = vld [vmem:[%s3167 + $0x9] sm:$0xff]
        %v3270 = vld [vmem:[%s3167 + $0x19] sm:$0xff]
        %v3271 = vld [vmem:[%s3167 + $0x21] sm:$0xff]
        %v3272 = vld [vmem:[%s3167 + $0x31] sm:$0xff]
        %v3273 = vld [vmem:[%s3167 + $0x39] sm:$0xff]
        %v3274 = vld [vmem:[%s3167 + $0x49] sm:$0xff]
        %v3275 = vld [vmem:[%s3167 + $0x51] sm:$0xff]
        %v3276 = vld [vmem:[%s3167 + $0x61] sm:$0xff]
        %v3277 = vld [vmem:[%s3167 + $0x69] sm:$0xff]
        %v3278 = vld [vmem:[%s3167 + $0x79] sm:$0xff]
        %v3279 = vld [vmem:[%s3167 + $0x81] sm:$0xff]
        %v3280 = vld [vmem:[%s3167 + $0x91] sm:$0xff]
        %v3281 = vld [vmem:[%s3167 + $0x99] sm:$0xff]
        %v3282 = vld [vmem:[%s3167 + $0xa9] sm:$0xff]
        %v3283 = vld [vmem:[%s3167 + $0xb1] sm:$0xff]
        %v3284 = vld [vmem:[%s3167 + $0xc1] sm:$0xff]
        %v3285 = vld [vmem:[%s3167 + $0xc9] sm:$0xff]
        %v3286 = vld [vmem:[%s3167 + $0xd9] sm:$0xff]
        %v3287 = vld [vmem:[%s3167 + $0xe1] sm:$0xff]
        %v3288 = vld [vmem:[%s3167 + $0xf1] sm:$0xff]
        %v3289 = vld [vmem:[%s3167 + $0xf9] sm:$0xff]
        %v3290 = vld [vmem:[%s3167 + $0x109] sm:$0xff]
        %v3291 = vld [vmem:[%s3167 + $0x111] sm:$0xff]
        %v3292 = vld [vmem:[%s3167 + $0x121] sm:$0xff]
        %v3293 = vld [vmem:[%s3167 + $0x129] sm:$0xff]
        %v3294 = vld [vmem:[%s3167 + $0x139] sm:$0xff]
        %v3295 = vld [vmem:[%s3167 + $0x141] sm:$0xff]
        %v3296 = vld [vmem:[%s3167 + $0x151] sm:$0xff]
        %v3297 = vld [vmem:[%s3167 + $0x159] sm:$0xff]
        %v3298 = vld [vmem:[%s3167 + $0x169] sm:$0xff]
        %v3299 = vld [vmem:[%s3167 + $0x171] sm:$0xff]
        %v3300 = vlaneseq
        %v3301 = vshrl.u32 %v3300, 7
        %v3302 = vsub.s32 5, %v3301
        %v3303 = vrot.slane %v1163, %v3302
        %v3304 = vmul.f32 %v3268, %v3303
        %v3305 = vmul.f32 %v3269, %v3303
        %v3306 = vmul.f32 %v3270, %v3303
        %v3307 = vmul.f32 %v3271, %v3303
        %v3308 = vmul.f32 %v3272, %v3303
        %v3309 = vmul.f32 %v3273, %v3303
        %v3310 = vmul.f32 %v3274, %v3303
        %v3311 = vmul.f32 %v3275, %v3303
        %v3312 = vmul.f32 %v3276, %v3303
        %v3313 = vmul.f32 %v3277, %v3303
        %v3314 = vmul.f32 %v3278, %v3303
        %v3315 = vmul.f32 %v3279, %v3303
        %v3316 = vmul.f32 %v3280, %v3303
        %v3317 = vmul.f32 %v3281, %v3303
        %v3318 = vmul.f32 %v3282, %v3303
        %v3319 = vmul.f32 %v3283, %v3303
        %v3320 = vmul.f32 %v3284, %v3303
        %v3321 = vmul.f32 %v3285, %v3303
        %v3322 = vmul.f32 %v3286, %v3303
        %v3323 = vmul.f32 %v3287, %v3303
        %v3324 = vmul.f32 %v3288, %v3303
        %v3325 = vmul.f32 %v3289, %v3303
        %v3326 = vmul.f32 %v3290, %v3303
        %v3327 = vmul.f32 %v3291, %v3303
        %v3328 = vmul.f32 %v3292, %v3303
        %v3329 = vmul.f32 %v3293, %v3303
        %v3330 = vmul.f32 %v3294, %v3303
        %v3331 = vmul.f32 %v3295, %v3303
        %v3332 = vmul.f32 %v3296, %v3303
        %v3333 = vmul.f32 %v3297, %v3303
        %v3334 = vmul.f32 %v3298, %v3303
        %v3335 = vmul.f32 %v3299, %v3303
        %v3336 = vadd.f32 %v3236, %v3304
        %v3337 = vadd.f32 %v3237, %v3305
        %v3338 = vadd.f32 %v3238, %v3306
        %v3339 = vadd.f32 %v3239, %v3307
        %v3340 = vadd.f32 %v3240, %v3308
        %v3341 = vadd.f32 %v3241, %v3309
        %v3342 = vadd.f32 %v3242, %v3310
        %v3343 = vadd.f32 %v3243, %v3311
        %v3344 = vadd.f32 %v3244, %v3312
        %v3345 = vadd.f32 %v3245, %v3313
        %v3346 = vadd.f32 %v3246, %v3314
        %v3347 = vadd.f32 %v3247, %v3315
        %v3348 = vadd.f32 %v3248, %v3316
        %v3349 = vadd.f32 %v3249, %v3317
        %v3350 = vadd.f32 %v3250, %v3318
        %v3351 = vadd.f32 %v3251, %v3319
        %v3352 = vadd.f32 %v3252, %v3320
        %v3353 = vadd.f32 %v3253, %v3321
        %v3354 = vadd.f32 %v3254, %v3322
        %v3355 = vadd.f32 %v3255, %v3323
        %v3356 = vadd.f32 %v3256, %v3324
        %v3357 = vadd.f32 %v3257, %v3325
        %v3358 = vadd.f32 %v3258, %v3326
        %v3359 = vadd.f32 %v3259, %v3327
        %v3360 = vadd.f32 %v3260, %v3328
        %v3361 = vadd.f32 %v3261, %v3329
        %v3362 = vadd.f32 %v3262, %v3330
        %v3363 = vadd.f32 %v3263, %v3331
        %v3364 = vadd.f32 %v3264, %v3332
        %v3365 = vadd.f32 %v3265, %v3333
        %v3366 = vadd.f32 %v3266, %v3334
        %v3367 = vadd.f32 %v3267, %v3335
        %v3368 = vld [vmem:[%s3167 + $0x2] sm:$0xff]
        %v3369 = vld [vmem:[%s3167 + $0xa] sm:$0xff]
        %v3370 = vld [vmem:[%s3167 + $0x1a] sm:$0xff]
        %v3371 = vld [vmem:[%s3167 + $0x22] sm:$0xff]
        %v3372 = vld [vmem:[%s3167 + $0x32] sm:$0xff]
        %v3373 = vld [vmem:[%s3167 + $0x3a] sm:$0xff]
        %v3374 = vld [vmem:[%s3167 + $0x4a] sm:$0xff]
        %v3375 = vld [vmem:[%s3167 + $0x52] sm:$0xff]
        %v3376 = vld [vmem:[%s3167 + $0x62] sm:$0xff]
        %v3377 = vld [vmem:[%s3167 + $0x6a] sm:$0xff]
        %v3378 = vld [vmem:[%s3167 + $0x7a] sm:$0xff]
        %v3379 = vld [vmem:[%s3167 + $0x82] sm:$0xff]
        %v3380 = vld [vmem:[%s3167 + $0x92] sm:$0xff]
        %v3381 = vld [vmem:[%s3167 + $0x9a] sm:$0xff]
        %v3382 = vld [vmem:[%s3167 + $0xaa] sm:$0xff]
        %v3383 = vld [vmem:[%s3167 + $0xb2] sm:$0xff]
        %v3384 = vld [vmem:[%s3167 + $0xc2] sm:$0xff]
        %v3385 = vld [vmem:[%s3167 + $0xca] sm:$0xff]
        %v3386 = vld [vmem:[%s3167 + $0xda] sm:$0xff]
        %v3387 = vld [vmem:[%s3167 + $0xe2] sm:$0xff]
        %v3388 = vld [vmem:[%s3167 + $0xf2] sm:$0xff]
        %v3389 = vld [vmem:[%s3167 + $0xfa] sm:$0xff]
        %v3390 = vld [vmem:[%s3167 + $0x10a] sm:$0xff]
        %v3391 = vld [vmem:[%s3167 + $0x112] sm:$0xff]
        %v3392 = vld [vmem:[%s3167 + $0x122] sm:$0xff]
        %v3393 = vld [vmem:[%s3167 + $0x12a] sm:$0xff]
        %v3394 = vld [vmem:[%s3167 + $0x13a] sm:$0xff]
        %v3395 = vld [vmem:[%s3167 + $0x142] sm:$0xff]
        %v3396 = vld [vmem:[%s3167 + $0x152] sm:$0xff]
        %v3397 = vld [vmem:[%s3167 + $0x15a] sm:$0xff]
        %v3398 = vld [vmem:[%s3167 + $0x16a] sm:$0xff]
        %v3399 = vld [vmem:[%s3167 + $0x172] sm:$0xff]
        %v3400 = vlaneseq
        %v3401 = vshrl.u32 %v3400, 7
        %v3402 = vsub.s32 6, %v3401
        %v3403 = vrot.slane %v1163, %v3402
        %v3404 = vmul.f32 %v3368, %v3403
        %v3405 = vmul.f32 %v3369, %v3403
        %v3406 = vmul.f32 %v3370, %v3403
        %v3407 = vmul.f32 %v3371, %v3403
        %v3408 = vmul.f32 %v3372, %v3403
        %v3409 = vmul.f32 %v3373, %v3403
        %v3410 = vmul.f32 %v3374, %v3403
        %v3411 = vmul.f32 %v3375, %v3403
        %v3412 = vmul.f32 %v3376, %v3403
        %v3413 = vmul.f32 %v3377, %v3403
        %v3414 = vmul.f32 %v3378, %v3403
        %v3415 = vmul.f32 %v3379, %v3403
        %v3416 = vmul.f32 %v3380, %v3403
        %v3417 = vmul.f32 %v3381, %v3403
        %v3418 = vmul.f32 %v3382, %v3403
        %v3419 = vmul.f32 %v3383, %v3403
        %v3420 = vmul.f32 %v3384, %v3403
        %v3421 = vmul.f32 %v3385, %v3403
        %v3422 = vmul.f32 %v3386, %v3403
        %v3423 = vmul.f32 %v3387, %v3403
        %v3424 = vmul.f32 %v3388, %v3403
        %v3425 = vmul.f32 %v3389, %v3403
        %v3426 = vmul.f32 %v3390, %v3403
        %v3427 = vmul.f32 %v3391, %v3403
        %v3428 = vmul.f32 %v3392, %v3403
        %v3429 = vmul.f32 %v3393, %v3403
        %v3430 = vmul.f32 %v3394, %v3403
        %v3431 = vmul.f32 %v3395, %v3403
        %v3432 = vmul.f32 %v3396, %v3403
        %v3433 = vmul.f32 %v3397, %v3403
        %v3434 = vmul.f32 %v3398, %v3403
        %v3435 = vmul.f32 %v3399, %v3403
        %v3436 = vadd.f32 %v3336, %v3404
        %v3437 = vadd.f32 %v3337, %v3405
        %v3438 = vadd.f32 %v3338, %v3406
        %v3439 = vadd.f32 %v3339, %v3407
        %v3440 = vadd.f32 %v3340, %v3408
        %v3441 = vadd.f32 %v3341, %v3409
        %v3442 = vadd.f32 %v3342, %v3410
        %v3443 = vadd.f32 %v3343, %v3411
        %v3444 = vadd.f32 %v3344, %v3412
        %v3445 = vadd.f32 %v3345, %v3413
        %v3446 = vadd.f32 %v3346, %v3414
        %v3447 = vadd.f32 %v3347, %v3415
        %v3448 = vadd.f32 %v3348, %v3416
        %v3449 = vadd.f32 %v3349, %v3417
        %v3450 = vadd.f32 %v3350, %v3418
        %v3451 = vadd.f32 %v3351, %v3419
        %v3452 = vadd.f32 %v3352, %v3420
        %v3453 = vadd.f32 %v3353, %v3421
        %v3454 = vadd.f32 %v3354, %v3422
        %v3455 = vadd.f32 %v3355, %v3423
        %v3456 = vadd.f32 %v3356, %v3424
        %v3457 = vadd.f32 %v3357, %v3425
        %v3458 = vadd.f32 %v3358, %v3426
        %v3459 = vadd.f32 %v3359, %v3427
        %v3460 = vadd.f32 %v3360, %v3428
        %v3461 = vadd.f32 %v3361, %v3429
        %v3462 = vadd.f32 %v3362, %v3430
        %v3463 = vadd.f32 %v3363, %v3431
        %v3464 = vadd.f32 %v3364, %v3432
        %v3465 = vadd.f32 %v3365, %v3433
        %v3466 = vadd.f32 %v3366, %v3434
        %v3467 = vadd.f32 %v3367, %v3435
        %v3468 = vld [vmem:[%s3167 + $0x3] sm:$0xff]
        %v3469 = vld [vmem:[%s3167 + $0xb] sm:$0xff]
        %v3470 = vld [vmem:[%s3167 + $0x1b] sm:$0xff]
        %v3471 = vld [vmem:[%s3167 + $0x23] sm:$0xff]
        %v3472 = vld [vmem:[%s3167 + $0x33] sm:$0xff]
        %v3473 = vld [vmem:[%s3167 + $0x3b] sm:$0xff]
        %v3474 = vld [vmem:[%s3167 + $0x4b] sm:$0xff]
        %v3475 = vld [vmem:[%s3167 + $0x53] sm:$0xff]
        %v3476 = vld [vmem:[%s3167 + $0x63] sm:$0xff]
        %v3477 = vld [vmem:[%s3167 + $0x6b] sm:$0xff]
        %v3478 = vld [vmem:[%s3167 + $0x7b] sm:$0xff]
        %v3479 = vld [vmem:[%s3167 + $0x83] sm:$0xff]
        %v3480 = vld [vmem:[%s3167 + $0x93] sm:$0xff]
        %v3481 = vld [vmem:[%s3167 + $0x9b] sm:$0xff]
        %v3482 = vld [vmem:[%s3167 + $0xab] sm:$0xff]
        %v3483 = vld [vmem:[%s3167 + $0xb3] sm:$0xff]
        %v3484 = vld [vmem:[%s3167 + $0xc3] sm:$0xff]
        %v3485 = vld [vmem:[%s3167 + $0xcb] sm:$0xff]
        %v3486 = vld [vmem:[%s3167 + $0xdb] sm:$0xff]
        %v3487 = vld [vmem:[%s3167 + $0xe3] sm:$0xff]
        %v3488 = vld [vmem:[%s3167 + $0xf3] sm:$0xff]
        %v3489 = vld [vmem:[%s3167 + $0xfb] sm:$0xff]
        %v3490 = vld [vmem:[%s3167 + $0x10b] sm:$0xff]
        %v3491 = vld [vmem:[%s3167 + $0x113] sm:$0xff]
        %v3492 = vld [vmem:[%s3167 + $0x123] sm:$0xff]
        %v3493 = vld [vmem:[%s3167 + $0x12b] sm:$0xff]
        %v3494 = vld [vmem:[%s3167 + $0x13b] sm:$0xff]
        %v3495 = vld [vmem:[%s3167 + $0x143] sm:$0xff]
        %v3496 = vld [vmem:[%s3167 + $0x153] sm:$0xff]
        %v3497 = vld [vmem:[%s3167 + $0x15b] sm:$0xff]
        %v3498 = vld [vmem:[%s3167 + $0x16b] sm:$0xff]
        %v3499 = vld [vmem:[%s3167 + $0x173] sm:$0xff]
        %v3500 = vlaneseq
        %v3501 = vshrl.u32 %v3500, 7
        %v3502 = vsub.s32 7, %v3501
        %v3503 = vrot.slane %v1163, %v3502
        %v3504 = vmul.f32 %v3468, %v3503
        %v3505 = vmul.f32 %v3469, %v3503
        %v3506 = vmul.f32 %v3470, %v3503
        %v3507 = vmul.f32 %v3471, %v3503
        %v3508 = vmul.f32 %v3472, %v3503
        %v3509 = vmul.f32 %v3473, %v3503
        %v3510 = vmul.f32 %v3474, %v3503
        %v3511 = vmul.f32 %v3475, %v3503
        %v3512 = vmul.f32 %v3476, %v3503
        %v3513 = vmul.f32 %v3477, %v3503
        %v3514 = vmul.f32 %v3478, %v3503
        %v3515 = vmul.f32 %v3479, %v3503
        %v3516 = vmul.f32 %v3480, %v3503
        %v3517 = vmul.f32 %v3481, %v3503
        %v3518 = vmul.f32 %v3482, %v3503
        %v3519 = vmul.f32 %v3483, %v3503
        %v3520 = vmul.f32 %v3484, %v3503
        %v3521 = vmul.f32 %v3485, %v3503
        %v3522 = vmul.f32 %v3486, %v3503
        %v3523 = vmul.f32 %v3487, %v3503
        %v3524 = vmul.f32 %v3488, %v3503
        %v3525 = vmul.f32 %v3489, %v3503
        %v3526 = vmul.f32 %v3490, %v3503
        %v3527 = vmul.f32 %v3491, %v3503
        %v3528 = vmul.f32 %v3492, %v3503
        %v3529 = vmul.f32 %v3493, %v3503
        %v3530 = vmul.f32 %v3494, %v3503
        %v3531 = vmul.f32 %v3495, %v3503
        %v3532 = vmul.f32 %v3496, %v3503
        %v3533 = vmul.f32 %v3497, %v3503
        %v3534 = vmul.f32 %v3498, %v3503
        %v3535 = vmul.f32 %v3499, %v3503
        %v3536 = vadd.f32 %v3436, %v3504
        %v3537 = vadd.f32 %v3437, %v3505
        %v3538 = vadd.f32 %v3438, %v3506
        %v3539 = vadd.f32 %v3439, %v3507
        %v3540 = vadd.f32 %v3440, %v3508
        %v3541 = vadd.f32 %v3441, %v3509
        %v3542 = vadd.f32 %v3442, %v3510
        %v3543 = vadd.f32 %v3443, %v3511
        %v3544 = vadd.f32 %v3444, %v3512
        %v3545 = vadd.f32 %v3445, %v3513
        %v3546 = vadd.f32 %v3446, %v3514
        %v3547 = vadd.f32 %v3447, %v3515
        %v3548 = vadd.f32 %v3448, %v3516
        %v3549 = vadd.f32 %v3449, %v3517
        %v3550 = vadd.f32 %v3450, %v3518
        %v3551 = vadd.f32 %v3451, %v3519
        %v3552 = vadd.f32 %v3452, %v3520
        %v3553 = vadd.f32 %v3453, %v3521
        %v3554 = vadd.f32 %v3454, %v3522
        %v3555 = vadd.f32 %v3455, %v3523
        %v3556 = vadd.f32 %v3456, %v3524
        %v3557 = vadd.f32 %v3457, %v3525
        %v3558 = vadd.f32 %v3458, %v3526
        %v3559 = vadd.f32 %v3459, %v3527
        %v3560 = vadd.f32 %v3460, %v3528
        %v3561 = vadd.f32 %v3461, %v3529
        %v3562 = vadd.f32 %v3462, %v3530
        %v3563 = vadd.f32 %v3463, %v3531
        %v3564 = vadd.f32 %v3464, %v3532
        %v3565 = vadd.f32 %v3465, %v3533
        %v3566 = vadd.f32 %v3466, %v3534
        %v3567 = vadd.f32 %v3467, %v3535
        %v3568 = vld [vmem:[%s3167 + $0x4] sm:$0xff]
        %v3569 = vld [vmem:[%s3167 + $0xc] sm:$0xff]
        %v3570 = vld [vmem:[%s3167 + $0x1c] sm:$0xff]
        %v3571 = vld [vmem:[%s3167 + $0x24] sm:$0xff]
        %v3572 = vld [vmem:[%s3167 + $0x34] sm:$0xff]
        %v3573 = vld [vmem:[%s3167 + $0x3c] sm:$0xff]
        %v3574 = vld [vmem:[%s3167 + $0x4c] sm:$0xff]
        %v3575 = vld [vmem:[%s3167 + $0x54] sm:$0xff]
        %v3576 = vld [vmem:[%s3167 + $0x64] sm:$0xff]
        %v3577 = vld [vmem:[%s3167 + $0x6c] sm:$0xff]
        %v3578 = vld [vmem:[%s3167 + $0x7c] sm:$0xff]
        %v3579 = vld [vmem:[%s3167 + $0x84] sm:$0xff]
        %v3580 = vld [vmem:[%s3167 + $0x94] sm:$0xff]
        %v3581 = vld [vmem:[%s3167 + $0x9c] sm:$0xff]
        %v3582 = vld [vmem:[%s3167 + $0xac] sm:$0xff]
        %v3583 = vld [vmem:[%s3167 + $0xb4] sm:$0xff]
        %v3584 = vld [vmem:[%s3167 + $0xc4] sm:$0xff]
        %v3585 = vld [vmem:[%s3167 + $0xcc] sm:$0xff]
        %v3586 = vld [vmem:[%s3167 + $0xdc] sm:$0xff]
        %v3587 = vld [vmem:[%s3167 + $0xe4] sm:$0xff]
        %v3588 = vld [vmem:[%s3167 + $0xf4] sm:$0xff]
        %v3589 = vld [vmem:[%s3167 + $0xfc] sm:$0xff]
        %v3590 = vld [vmem:[%s3167 + $0x10c] sm:$0xff]
        %v3591 = vld [vmem:[%s3167 + $0x114] sm:$0xff]
        %v3592 = vld [vmem:[%s3167 + $0x124] sm:$0xff]
        %v3593 = vld [vmem:[%s3167 + $0x12c] sm:$0xff]
        %v3594 = vld [vmem:[%s3167 + $0x13c] sm:$0xff]
        %v3595 = vld [vmem:[%s3167 + $0x144] sm:$0xff]
        %v3596 = vld [vmem:[%s3167 + $0x154] sm:$0xff]
        %v3597 = vld [vmem:[%s3167 + $0x15c] sm:$0xff]
        %v3598 = vld [vmem:[%s3167 + $0x16c] sm:$0xff]
        %v3599 = vld [vmem:[%s3167 + $0x174] sm:$0xff]
        %v3600 = vlaneseq
        %v3601 = vshrl.u32 %v3600, 7
        %v3602 = vsub.s32 0, %v3601
        %v3603 = vrot.slane %v1164, %v3602
        %v3604 = vmul.f32 %v3568, %v3603
        %v3605 = vmul.f32 %v3569, %v3603
        %v3606 = vmul.f32 %v3570, %v3603
        %v3607 = vmul.f32 %v3571, %v3603
        %v3608 = vmul.f32 %v3572, %v3603
        %v3609 = vmul.f32 %v3573, %v3603
        %v3610 = vmul.f32 %v3574, %v3603
        %v3611 = vmul.f32 %v3575, %v3603
        %v3612 = vmul.f32 %v3576, %v3603
        %v3613 = vmul.f32 %v3577, %v3603
        %v3614 = vmul.f32 %v3578, %v3603
        %v3615 = vmul.f32 %v3579, %v3603
        %v3616 = vmul.f32 %v3580, %v3603
        %v3617 = vmul.f32 %v3581, %v3603
        %v3618 = vmul.f32 %v3582, %v3603
        %v3619 = vmul.f32 %v3583, %v3603
        %v3620 = vmul.f32 %v3584, %v3603
        %v3621 = vmul.f32 %v3585, %v3603
        %v3622 = vmul.f32 %v3586, %v3603
        %v3623 = vmul.f32 %v3587, %v3603
        %v3624 = vmul.f32 %v3588, %v3603
        %v3625 = vmul.f32 %v3589, %v3603
        %v3626 = vmul.f32 %v3590, %v3603
        %v3627 = vmul.f32 %v3591, %v3603
        %v3628 = vmul.f32 %v3592, %v3603
        %v3629 = vmul.f32 %v3593, %v3603
        %v3630 = vmul.f32 %v3594, %v3603
        %v3631 = vmul.f32 %v3595, %v3603
        %v3632 = vmul.f32 %v3596, %v3603
        %v3633 = vmul.f32 %v3597, %v3603
        %v3634 = vmul.f32 %v3598, %v3603
        %v3635 = vmul.f32 %v3599, %v3603
        %v3636 = vadd.f32 %v3536, %v3604
        %v3637 = vadd.f32 %v3537, %v3605
        %v3638 = vadd.f32 %v3538, %v3606
        %v3639 = vadd.f32 %v3539, %v3607
        %v3640 = vadd.f32 %v3540, %v3608
        %v3641 = vadd.f32 %v3541, %v3609
        %v3642 = vadd.f32 %v3542, %v3610
        %v3643 = vadd.f32 %v3543, %v3611
        %v3644 = vadd.f32 %v3544, %v3612
        %v3645 = vadd.f32 %v3545, %v3613
        %v3646 = vadd.f32 %v3546, %v3614
        %v3647 = vadd.f32 %v3547, %v3615
        %v3648 = vadd.f32 %v3548, %v3616
        %v3649 = vadd.f32 %v3549, %v3617
        %v3650 = vadd.f32 %v3550, %v3618
        %v3651 = vadd.f32 %v3551, %v3619
        %v3652 = vadd.f32 %v3552, %v3620
        %v3653 = vadd.f32 %v3553, %v3621
        %v3654 = vadd.f32 %v3554, %v3622
        %v3655 = vadd.f32 %v3555, %v3623
        %v3656 = vadd.f32 %v3556, %v3624
        %v3657 = vadd.f32 %v3557, %v3625
        %v3658 = vadd.f32 %v3558, %v3626
        %v3659 = vadd.f32 %v3559, %v3627
        %v3660 = vadd.f32 %v3560, %v3628
        %v3661 = vadd.f32 %v3561, %v3629
        %v3662 = vadd.f32 %v3562, %v3630
        %v3663 = vadd.f32 %v3563, %v3631
        %v3664 = vadd.f32 %v3564, %v3632
        %v3665 = vadd.f32 %v3565, %v3633
        %v3666 = vadd.f32 %v3566, %v3634
        %v3667 = vadd.f32 %v3567, %v3635
        %v3668 = vld [vmem:[#allocation12] sm:$0x1]
        %v3670 = vlaneseq
        %v3671 = vshrl.u32 %v3670, 7
        %v3672 = vsub.s32 0, %v3671
        %v3673 = vrot.slane %v3668, %v3672
        %v3675 = vmul.f32 %v3636, %v3673
        %v3676 = vmul.f32 %v3637, %v3673
        %v3677 = vmul.f32 %v3638, %v3673
        %v3678 = vmul.f32 %v3639, %v3673
        %v3679 = vmul.f32 %v3640, %v3673
        %v3680 = vmul.f32 %v3641, %v3673
        %v3681 = vmul.f32 %v3642, %v3673
        %v3682 = vmul.f32 %v3643, %v3673
        %v3683 = vmul.f32 %v3644, %v3673
        %v3684 = vmul.f32 %v3645, %v3673
        %v3685 = vmul.f32 %v3646, %v3673
        %v3686 = vmul.f32 %v3647, %v3673
        %v3687 = vmul.f32 %v3648, %v3673
        %v3688 = vmul.f32 %v3649, %v3673
        %v3689 = vmul.f32 %v3650, %v3673
        %v3690 = vmul.f32 %v3651, %v3673
        %v3691 = vmul.f32 %v3652, %v3673
        %v3692 = vmul.f32 %v3653, %v3673
        %v3693 = vmul.f32 %v3654, %v3673
        %v3694 = vmul.f32 %v3655, %v3673
        %v3695 = vmul.f32 %v3656, %v3673
        %v3696 = vmul.f32 %v3657, %v3673
        %v3697 = vmul.f32 %v3658, %v3673
        %v3698 = vmul.f32 %v3659, %v3673
        %v3699 = vmul.f32 %v3660, %v3673
        %v3700 = vmul.f32 %v3661, %v3673
        %v3701 = vmul.f32 %v3662, %v3673
        %v3702 = vmul.f32 %v3663, %v3673
        %v3703 = vmul.f32 %v3664, %v3673
        %v3704 = vmul.f32 %v3665, %v3673
        %v3705 = vmul.f32 %v3666, %v3673
        %v3706 = vmul.f32 %v3667, %v3673
        %v3707 = vld [vmem:[#allocation14] sm:$0x1]
        %v3709 = vlaneseq
        %v3710 = vshrl.u32 %v3709, 7
        %v3711 = vsub.s32 0, %v3710
        %v3712 = vrot.slane %v3707, %v3711
        %v3714 = vadd.f32 %v3675, %v3712
        %v3715 = vadd.f32 %v3676, %v3712
        %v3716 = vadd.f32 %v3677, %v3712
        %v3717 = vadd.f32 %v3678, %v3712
        %v3718 = vadd.f32 %v3679, %v3712
        %v3719 = vadd.f32 %v3680, %v3712
        %v3720 = vadd.f32 %v3681, %v3712
        %v3721 = vadd.f32 %v3682, %v3712
        %v3722 = vadd.f32 %v3683, %v3712
        %v3723 = vadd.f32 %v3684, %v3712
        %v3724 = vadd.f32 %v3685, %v3712
        %v3725 = vadd.f32 %v3686, %v3712
        %v3726 = vadd.f32 %v3687, %v3712
        %v3727 = vadd.f32 %v3688, %v3712
        %v3728 = vadd.f32 %v3689, %v3712
        %v3729 = vadd.f32 %v3690, %v3712
        %v3730 = vadd.f32 %v3691, %v3712
        %v3731 = vadd.f32 %v3692, %v3712
        %v3732 = vadd.f32 %v3693, %v3712
        %v3733 = vadd.f32 %v3694, %v3712
        %v3734 = vadd.f32 %v3695, %v3712
        %v3735 = vadd.f32 %v3696, %v3712
        %v3736 = vadd.f32 %v3697, %v3712
        %v3737 = vadd.f32 %v3698, %v3712
        %v3738 = vadd.f32 %v3699, %v3712
        %v3739 = vadd.f32 %v3700, %v3712
        %v3740 = vadd.f32 %v3701, %v3712
        %v3741 = vadd.f32 %v3702, %v3712
        %v3742 = vadd.f32 %v3703, %v3712
        %v3743 = vadd.f32 %v3704, %v3712
        %v3744 = vadd.f32 %v3705, %v3712
        %v3745 = vadd.f32 %v3706, %v3712
        %v3746 = vxor.u32 %v3714, 2147483648
        %v3747 = vxor.u32 %v3715, 2147483648
        %v3748 = vxor.u32 %v3716, 2147483648
        %v3749 = vxor.u32 %v3717, 2147483648
        %v3750 = vxor.u32 %v3718, 2147483648
        %v3751 = vxor.u32 %v3719, 2147483648
        %v3752 = vxor.u32 %v3720, 2147483648
        %v3753 = vxor.u32 %v3721, 2147483648
        %v3754 = vxor.u32 %v3722, 2147483648
        %v3755 = vxor.u32 %v3723, 2147483648
        %v3756 = vxor.u32 %v3724, 2147483648
        %v3757 = vxor.u32 %v3725, 2147483648
        %v3758 = vxor.u32 %v3726, 2147483648
        %v3759 = vxor.u32 %v3727, 2147483648
        %v3760 = vxor.u32 %v3728, 2147483648
        %v3761 = vxor.u32 %v3729, 2147483648
        %v3762 = vxor.u32 %v3730, 2147483648
        %v3763 = vxor.u32 %v3731, 2147483648
        %v3764 = vxor.u32 %v3732, 2147483648
        %v3765 = vxor.u32 %v3733, 2147483648
        %v3766 = vxor.u32 %v3734, 2147483648
        %v3767 = vxor.u32 %v3735, 2147483648
        %v3768 = vxor.u32 %v3736, 2147483648
        %v3769 = vxor.u32 %v3737, 2147483648
        %v3770 = vxor.u32 %v3738, 2147483648
        %v3771 = vxor.u32 %v3739, 2147483648
        %v3772 = vxor.u32 %v3740, 2147483648
        %v3773 = vxor.u32 %v3741, 2147483648
        %v3774 = vxor.u32 %v3742, 2147483648
        %v3775 = vxor.u32 %v3743, 2147483648
        %v3776 = vxor.u32 %v3744, 2147483648
        %v3777 = vxor.u32 %v3745, 2147483648
        %v3778 = vmul.f32 %v3746, 1.442695
        %v3779 = vpow.pop %v3778
        %v3780 = vmul.f32 %v3747, 1.442695
        %v3781 = vpow.pop %v3780
        %v3782 = vmul.f32 %v3748, 1.442695
        %v3783 = vpow.pop %v3782
        %v3784 = vmul.f32 %v3749, 1.442695
        %v3785 = vpow.pop %v3784
        %v3786 = vmul.f32 %v3750, 1.442695
        %v3787 = vpow.pop %v3786
        %v3788 = vmul.f32 %v3751, 1.442695
        %v3789 = vpow.pop %v3788
        %v3790 = vmul.f32 %v3752, 1.442695
        %v3791 = vpow.pop %v3790
        %v3792 = vmul.f32 %v3753, 1.442695
        %v3793 = vpow.pop %v3792
        %v3794 = vmul.f32 %v3754, 1.442695
        %v3795 = vpow.pop %v3794
        %v3796 = vmul.f32 %v3755, 1.442695
        %v3797 = vpow.pop %v3796
        %v3798 = vmul.f32 %v3756, 1.442695
        %v3799 = vpow.pop %v3798
        %v3800 = vmul.f32 %v3757, 1.442695
        %v3801 = vpow.pop %v3800
        %v3802 = vmul.f32 %v3758, 1.442695
        %v3803 = vpow.pop %v3802
        %v3804 = vmul.f32 %v3759, 1.442695
        %v3805 = vpow.pop %v3804
        %v3806 = vmul.f32 %v3760, 1.442695
        %v3807 = vpow.pop %v3806
        %v3808 = vmul.f32 %v3761, 1.442695
        %v3809 = vpow.pop %v3808
        %v3810 = vmul.f32 %v3762, 1.442695
        %v3811 = vpow.pop %v3810
        %v3812 = vmul.f32 %v3763, 1.442695
        %v3813 = vpow.pop %v3812
        %v3814 = vmul.f32 %v3764, 1.442695
        %v3815 = vpow.pop %v3814
        %v3816 = vmul.f32 %v3765, 1.442695
        %v3817 = vpow.pop %v3816
        %v3818 = vmul.f32 %v3766, 1.442695
        %v3819 = vpow.pop %v3818
        %v3820 = vmul.f32 %v3767, 1.442695
        %v3821 = vpow.pop %v3820
        %v3822 = vmul.f32 %v3768, 1.442695
        %v3823 = vpow.pop %v3822
        %v3824 = vmul.f32 %v3769, 1.442695
        %v3825 = vpow.pop %v3824
        %v3826 = vmul.f32 %v3770, 1.442695
        %v3827 = vpow.pop %v3826
        %v3828 = vmul.f32 %v3771, 1.442695
        %v3829 = vpow.pop %v3828
        %v3830 = vmul.f32 %v3772, 1.442695
        %v3831 = vpow.pop %v3830
        %v3832 = vmul.f32 %v3773, 1.442695
        %v3833 = vpow.pop %v3832
        %v3834 = vmul.f32 %v3774, 1.442695
        %v3835 = vpow.pop %v3834
        %v3836 = vmul.f32 %v3775, 1.442695
        %v3837 = vpow.pop %v3836
        %v3838 = vmul.f32 %v3776, 1.442695
        %v3839 = vpow.pop %v3838
        %v3840 = vmul.f32 %v3777, 1.442695
        %v3841 = vpow.pop %v3840
        %v3842 = vadd.f32 %v3779, 1.0
        %v3843 = vadd.f32 %v3781, 1.0
        %v3844 = vadd.f32 %v3783, 1.0
        %v3845 = vadd.f32 %v3785, 1.0
        %v3846 = vadd.f32 %v3787, 1.0
        %v3847 = vadd.f32 %v3789, 1.0
        %v3848 = vadd.f32 %v3791, 1.0
        %v3849 = vadd.f32 %v3793, 1.0
        %v3850 = vadd.f32 %v3795, 1.0
        %v3851 = vadd.f32 %v3797, 1.0
        %v3852 = vadd.f32 %v3799, 1.0
        %v3853 = vadd.f32 %v3801, 1.0
        %v3854 = vadd.f32 %v3803, 1.0
        %v3855 = vadd.f32 %v3805, 1.0
        %v3856 = vadd.f32 %v3807, 1.0
        %v3857 = vadd.f32 %v3809, 1.0
        %v3858 = vadd.f32 %v3811, 1.0
        %v3859 = vadd.f32 %v3813, 1.0
        %v3860 = vadd.f32 %v3815, 1.0
        %v3861 = vadd.f32 %v3817, 1.0
        %v3862 = vadd.f32 %v3819, 1.0
        %v3863 = vadd.f32 %v3821, 1.0
        %v3864 = vadd.f32 %v3823, 1.0
        %v3865 = vadd.f32 %v3825, 1.0
        %v3866 = vadd.f32 %v3827, 1.0
        %v3867 = vadd.f32 %v3829, 1.0
        %v3868 = vadd.f32 %v3831, 1.0
        %v3869 = vadd.f32 %v3833, 1.0
        %v3870 = vadd.f32 %v3835, 1.0
        %v3871 = vadd.f32 %v3837, 1.0
        %v3872 = vadd.f32 %v3839, 1.0
        %v3873 = vadd.f32 %v3841, 1.0
        %v3874 = vrcp.pop %v3842
        %v3875 = vmul.f32 1.0, %v3874
        %v3876 = vrcp.pop %v3843
        %v3877 = vmul.f32 1.0, %v3876
        %v3878 = vrcp.pop %v3844
        %v3879 = vmul.f32 1.0, %v3878
        %v3880 = vrcp.pop %v3845
        %v3881 = vmul.f32 1.0, %v3880
        %v3882 = vrcp.pop %v3846
        %v3883 = vmul.f32 1.0, %v3882
        %v3884 = vrcp.pop %v3847
        %v3885 = vmul.f32 1.0, %v3884
        %v3886 = vrcp.pop %v3848
        %v3887 = vmul.f32 1.0, %v3886
        %v3888 = vrcp.pop %v3849
        %v3889 = vmul.f32 1.0, %v3888
        %v3890 = vrcp.pop %v3850
        %v3891 = vmul.f32 1.0, %v3890
        %v3892 = vrcp.pop %v3851
        %v3893 = vmul.f32 1.0, %v3892
        %v3894 = vrcp.pop %v3852
        %v3895 = vmul.f32 1.0, %v3894
        %v3896 = vrcp.pop %v3853
        %v3897 = vmul.f32 1.0, %v3896
        %v3898 = vrcp.pop %v3854
        %v3899 = vmul.f32 1.0, %v3898
        %v3900 = vrcp.pop %v3855
        %v3901 = vmul.f32 1.0, %v3900
        %v3902 = vrcp.pop %v3856
        %v3903 = vmul.f32 1.0, %v3902
        %v3904 = vrcp.pop %v3857
        %v3905 = vmul.f32 1.0, %v3904
        %v3906 = vrcp.pop %v3858
        %v3907 = vmul.f32 1.0, %v3906
        %v3908 = vrcp.pop %v3859
        %v3909 = vmul.f32 1.0, %v3908
        %v3910 = vrcp.pop %v3860
        %v3911 = vmul.f32 1.0, %v3910
        %v3912 = vrcp.pop %v3861
        %v3913 = vmul.f32 1.0, %v3912
        %v3914 = vrcp.pop %v3862
        %v3915 = vmul.f32 1.0, %v3914
        %v3916 = vrcp.pop %v3863
        %v3917 = vmul.f32 1.0, %v3916
        %v3918 = vrcp.pop %v3864
        %v3919 = vmul.f32 1.0, %v3918
        %v3920 = vrcp.pop %v3865
        %v3921 = vmul.f32 1.0, %v3920
        %v3922 = vrcp.pop %v3866
        %v3923 = vmul.f32 1.0, %v3922
        %v3924 = vrcp.pop %v3867
        %v3925 = vmul.f32 1.0, %v3924
        %v3926 = vrcp.pop %v3868
        %v3927 = vmul.f32 1.0, %v3926
        %v3928 = vrcp.pop %v3869
        %v3929 = vmul.f32 1.0, %v3928
        %v3930 = vrcp.pop %v3870
        %v3931 = vmul.f32 1.0, %v3930
        %v3932 = vrcp.pop %v3871
        %v3933 = vmul.f32 1.0, %v3932
        %v3934 = vrcp.pop %v3872
        %v3935 = vmul.f32 1.0, %v3934
        %v3936 = vrcp.pop %v3873
        %v3937 = vmul.f32 1.0, %v3936
        %v3938 = vmul.f32 %v3714, %v3875
        %v3939 = vmul.f32 %v3715, %v3877
        %v3940 = vmul.f32 %v3716, %v3879
        %v3941 = vmul.f32 %v3717, %v3881
        %v3942 = vmul.f32 %v3718, %v3883
        %v3943 = vmul.f32 %v3719, %v3885
        %v3944 = vmul.f32 %v3720, %v3887
        %v3945 = vmul.f32 %v3721, %v3889
        %v3946 = vmul.f32 %v3722, %v3891
        %v3947 = vmul.f32 %v3723, %v3893
        %v3948 = vmul.f32 %v3724, %v3895
        %v3949 = vmul.f32 %v3725, %v3897
        %v3950 = vmul.f32 %v3726, %v3899
        %v3951 = vmul.f32 %v3727, %v3901
        %v3952 = vmul.f32 %v3728, %v3903
        %v3953 = vmul.f32 %v3729, %v3905
        %v3954 = vmul.f32 %v3730, %v3907
        %v3955 = vmul.f32 %v3731, %v3909
        %v3956 = vmul.f32 %v3732, %v3911
        %v3957 = vmul.f32 %v3733, %v3913
        %v3958 = vmul.f32 %v3734, %v3915
        %v3959 = vmul.f32 %v3735, %v3917
        %v3960 = vmul.f32 %v3736, %v3919
        %v3961 = vmul.f32 %v3737, %v3921
        %v3962 = vmul.f32 %v3738, %v3923
        %v3963 = vmul.f32 %v3739, %v3925
        %v3964 = vmul.f32 %v3740, %v3927
        %v3965 = vmul.f32 %v3741, %v3929
        %v3966 = vmul.f32 %v3742, %v3931
        %v3967 = vmul.f32 %v3743, %v3933
        %v3968 = vmul.f32 %v3744, %v3935
        %v3969 = vmul.f32 %v3745, %v3937
        %4002 = vrot.lane.b32.xlu0 %v3938, 4
        %v4003 = vpop.permute.xlu0 %4002
        %4004 = vrot.lane.b32.xlu0 %v3939, 4
        %v4005 = vpop.permute.xlu0 %4004
        %4006 = vrot.lane.b32.xlu0 %v3940, 4
        %v4007 = vpop.permute.xlu0 %4006
        %4008 = vrot.lane.b32.xlu0 %v3941, 4
        %v4009 = vpop.permute.xlu0 %4008
        %4010 = vrot.lane.b32.xlu0 %v3942, 4
        %v4011 = vpop.permute.xlu0 %4010
        %4012 = vrot.lane.b32.xlu0 %v3943, 4
        %v4013 = vpop.permute.xlu0 %4012
        %4014 = vrot.lane.b32.xlu0 %v3944, 4
        %v4015 = vpop.permute.xlu0 %4014
        %4016 = vrot.lane.b32.xlu0 %v3945, 4
        %v4017 = vpop.permute.xlu0 %4016
        %4018 = vrot.lane.b32.xlu0 %v3946, 4
        %v4019 = vpop.permute.xlu0 %4018
        %4020 = vrot.lane.b32.xlu0 %v3947, 4
        %v4021 = vpop.permute.xlu0 %4020
        %4022 = vrot.lane.b32.xlu0 %v3948, 4
        %v4023 = vpop.permute.xlu0 %4022
        %4024 = vrot.lane.b32.xlu0 %v3949, 4
        %v4025 = vpop.permute.xlu0 %4024
        %4026 = vrot.lane.b32.xlu0 %v3950, 4
        %v4027 = vpop.permute.xlu0 %4026
        %4028 = vrot.lane.b32.xlu0 %v3951, 4
        %v4029 = vpop.permute.xlu0 %4028
        %4030 = vrot.lane.b32.xlu0 %v3952, 4
        %v4031 = vpop.permute.xlu0 %4030
        %4032 = vrot.lane.b32.xlu0 %v3953, 4
        %v4033 = vpop.permute.xlu0 %4032
        %4034 = vrot.lane.b32.xlu0 %v3954, 4
        %v4035 = vpop.permute.xlu0 %4034
        %4036 = vrot.lane.b32.xlu0 %v3955, 4
        %v4037 = vpop.permute.xlu0 %4036
        %4038 = vrot.lane.b32.xlu0 %v3956, 4
        %v4039 = vpop.permute.xlu0 %4038
        %4040 = vrot.lane.b32.xlu0 %v3957, 4
        %v4041 = vpop.permute.xlu0 %4040
        %4042 = vrot.lane.b32.xlu0 %v3958, 4
        %v4043 = vpop.permute.xlu0 %4042
        %4044 = vrot.lane.b32.xlu0 %v3959, 4
        %v4045 = vpop.permute.xlu0 %4044
        %4046 = vrot.lane.b32.xlu0 %v3960, 4
        %v4047 = vpop.permute.xlu0 %4046
        %4048 = vrot.lane.b32.xlu0 %v3961, 4
        %v4049 = vpop.permute.xlu0 %4048
        %4050 = vrot.lane.b32.xlu0 %v3962, 4
        %v4051 = vpop.permute.xlu0 %4050
        %4052 = vrot.lane.b32.xlu0 %v3963, 4
        %v4053 = vpop.permute.xlu0 %4052
        %4054 = vrot.lane.b32.xlu0 %v3964, 4
        %v4055 = vpop.permute.xlu0 %4054
        %4056 = vrot.lane.b32.xlu0 %v3965, 4
        %v4057 = vpop.permute.xlu0 %4056
        %4058 = vrot.lane.b32.xlu0 %v3966, 4
        %v4059 = vpop.permute.xlu0 %4058
        %4060 = vrot.lane.b32.xlu0 %v3967, 4
        %v4061 = vpop.permute.xlu0 %4060
        %4062 = vrot.lane.b32.xlu0 %v3968, 4
        %v4063 = vpop.permute.xlu0 %4062
        %4064 = vrot.lane.b32.xlu0 %v3969, 4
        %v4065 = vpop.permute.xlu0 %4064
        %vm4098 = vcmask 64544
        %4099 = vst.msk [vmem:[%s373] sm:$0xff] %vm4098, %v4003
        %4100 = vst.msk [vmem:[%s373 + $0x8] sm:$0xff] %vm4098, %v4005
        %4101 = vst.msk [vmem:[%s373 + $0x10] sm:$0xff] %vm4098, %v4007
        %4102 = vst.msk [vmem:[%s373 + $0x18] sm:$0xff] %vm4098, %v4009
        %4103 = vst.msk [vmem:[%s373 + $0x20] sm:$0xff] %vm4098, %v4011
        %4104 = vst.msk [vmem:[%s373 + $0x28] sm:$0xff] %vm4098, %v4013
        %4105 = vst.msk [vmem:[%s373 + $0x30] sm:$0xff] %vm4098, %v4015
        %4106 = vst.msk [vmem:[%s373 + $0x38] sm:$0xff] %vm4098, %v4017
        %4107 = vst.msk [vmem:[%s373 + $0x40] sm:$0xff] %vm4098, %v4019
        %4108 = vst.msk [vmem:[%s373 + $0x48] sm:$0xff] %vm4098, %v4021
        %4109 = vst.msk [vmem:[%s373 + $0x50] sm:$0xff] %vm4098, %v4023
        %4110 = vst.msk [vmem:[%s373 + $0x58] sm:$0xff] %vm4098, %v4025
        %4111 = vst.msk [vmem:[%s373 + $0x60] sm:$0xff] %vm4098, %v4027
        %4112 = vst.msk [vmem:[%s373 + $0x68] sm:$0xff] %vm4098, %v4029
        %4113 = vst.msk [vmem:[%s373 + $0x70] sm:$0xff] %vm4098, %v4031
        %4114 = vst.msk [vmem:[%s373 + $0x78] sm:$0xff] %vm4098, %v4033
        %4115 = vst.msk [vmem:[%s373 + $0x80] sm:$0xff] %vm4098, %v4035
        %4116 = vst.msk [vmem:[%s373 + $0x88] sm:$0xff] %vm4098, %v4037
        %4117 = vst.msk [vmem:[%s373 + $0x90] sm:$0xff] %vm4098, %v4039
        %4118 = vst.msk [vmem:[%s373 + $0x98] sm:$0xff] %vm4098, %v4041
        %4119 = vst.msk [vmem:[%s373 + $0xa0] sm:$0xff] %vm4098, %v4043
        %4120 = vst.msk [vmem:[%s373 + $0xa8] sm:$0xff] %vm4098, %v4045
        %4121 = vst.msk [vmem:[%s373 + $0xb0] sm:$0xff] %vm4098, %v4047
        %4122 = vst.msk [vmem:[%s373 + $0xb8] sm:$0xff] %vm4098, %v4049
        %4123 = vst.msk [vmem:[%s373 + $0xc0] sm:$0xff] %vm4098, %v4051
        %4124 = vst.msk [vmem:[%s373 + $0xc8] sm:$0xff] %vm4098, %v4053
        %4125 = vst.msk [vmem:[%s373 + $0xd0] sm:$0xff] %vm4098, %v4055
        %4126 = vst.msk [vmem:[%s373 + $0xd8] sm:$0xff] %vm4098, %v4057
        %4127 = vst.msk [vmem:[%s373 + $0xe0] sm:$0xff] %vm4098, %v4059
        %4128 = vst.msk [vmem:[%s373 + $0xe8] sm:$0xff] %vm4098, %v4061
        %4129 = vst.msk [vmem:[%s373 + $0xf0] sm:$0xff] %vm4098, %v4063
        %4130 = vst.msk [vmem:[%s373 + $0xf8] sm:$0xff] %vm4098, %v4065
        %s4131 = sand.u32 %s187, 1
        %s4132 = scalar_lea.sflag [#allocation5], %s4131
        %s4133 = sand.u32 %s187, 1
        %s4134 = smul.addr %s4133, 256
        %s4135 = scalar_lea.vmem [#allocation15], %s4134
        // Predicated region
        $region77: #{tpu_custom_call.1} parent=47 // pred_check
          %p4136 = pneg %p197
        $region78: #{tpu_custom_call.1} parent=47 // pred_check_branch
          %4138 = sbr.rel (%p4136) target = $region80
        $region79: #{tpu_custom_call.1} parent=47 // pred_region
          %s4140 = ssub.s32 4096, 4096
          %4141 = vsyncadd %s4132, %s4140
          %s4142 = smul.addr %s27, 32
          %s4143 = smul.addr %s4142, 128
          %s4144 = scalar_lea.hbm %s7, %s4143
          %s4145 = sshll.u32 %s4135, 4
          %s4146 = int_to_ptr.vmem [resolvable:$true] %s4145
          %4151 = dma.vmem_to_hbm [thread:$0]  %s4146, 4096, %s4144, %s4132, 128, 128, 8
        $region80: #{tpu_custom_call.1} parent=47 // pred_fallthru
          _
      $region48: #{tpu_custom_call.1} parent=5 // pred_fallthru
        _
      %p4152 = scmp.le.s32.totalorder 2, %s22
      // Predicated region
      $region81: #{tpu_custom_call.1} parent=5 // pred_check
        %p4153 = pneg %p4152
      $region82: #{tpu_custom_call.1} parent=5 // pred_check_branch
        %4155 = sbr.rel (%p4153) target = $region84
      $region83: #{tpu_custom_call.1} parent=5 // pred_region
        %s4156 = ssub.s32 %s22, 2
        // Predicated region
        $region85: #{tpu_custom_call.1} parent=83 // pred_check
          %p4157 = pneg %p203
        $region86: #{tpu_custom_call.1} parent=83 // pred_check_branch
          %4159 = sbr.rel (%p4157) target = $region88
        $region87: #{tpu_custom_call.1} parent=83 // pred_region
          %s4160 = sand.u32 %s188, 1
          %s4161 = scalar_lea.sflag [#allocation5], %s4160
          %s4162 = sand.u32 %s188, 1
          %s4163 = smul.addr %s4162, 256
          %s4164 = scalar_lea.vmem [#allocation15], %s4163
          %4165 = dma.done %s4161, 4096
        $region88: #{tpu_custom_call.1} parent=83 // pred_fallthru
          _
      $region84: #{tpu_custom_call.1} parent=5 // pred_fallthru
        _
    $region6: #{tpu_custom_call.1} parent=1 // loop_footer
      %s26 = sadd.s32 1, %s22
    $region7: #{tpu_custom_call.1} parent=1 // loop_footer_branch
      %21 = sbr.rel target = $region3
    $region8: #{tpu_custom_call.1} parent=1 // loop_exit
      _
    %4166 = vsyncpa [#allocation4], 1
    %s4167 = scalar_lea.sflag [#allocation4], 1
    %4168 = vsyncpa %s4167, 1
    %4169 = vsyncpa [#allocation7], 1
    %4170 = vsyncpa [#allocation10], 1
    %4171 = vsyncpa [#allocation13], 1
    %4172 = vsyncpa [#allocation5], 1
    %s4173 = scalar_lea.sflag [#allocation5], 1
    %4174 = vsyncpa %s4173, 1

</llo_original>
